<compile_context>
chip_gen: v5e
topology: v5e:2x2
jax: 0.10.0
libtpu: 0.0.40
codegen_flags: <defaults>
</compile_context>

<pallas_src>
import functools

import jax
import jax.numpy as jnp
from jax import lax
from jax.experimental import pallas as pl
from jax.experimental.pallas import tpu as pltpu

MATMUL_DTYPE = jnp.bfloat16   # MXU input dtype; accumulation / bias / residual stay f32.


def _lane_pad(W):
    """Left margin (multiple of 128) so the interior store is lane-aligned."""
    return ((W + 1 + 127) // 128) * 128


# ----------------------------- fused kernel -----------------------------
def _fused_kernel(x_ref, wf_ref, bf_ref, w1_ref, b1_ref, w2_ref, b2_ref,
                  o_ref, pad_ref, col_ref, *, H, W, C):
    """grid = (N, num_block + 1).

    blk == 0 : o = LeakyReLU_0.1(conv3x3(x) + b_first)
    blk >= 1 : o = o + conv2(relu(conv1(o)))           (ResidualBlockNoBN)

    The output block index is constant over the blk axis, so `o_ref` is the
    VMEM-resident feature map for the whole chain of one image.
    """
    blk = pl.program_id(1)
    P = H * W
    pad0 = _lane_pad(W)

    # ---- hoisted im2col mask machinery (shared by both fills of a block) ----
    pos = lax.broadcasted_iota(jnp.int32, (1, P), 1)          # flat pixel index
    if W & (W - 1) == 0:
        colj = jnp.bitwise_and(pos, W - 1)                    # pos % W, W power of two
    else:
        colj = pos % W
    row_pred = {-1: pos >= W, 0: None, 1: pos < (H - 1) * W}
    col_pred = {-1: colj >= 1, 0: None, 1: colj <= W - 2}

    def fill_im2col(act_bf16):
        """Scatter the nine 3x3 taps of act (C, P) bf16 into col_ref (9C, P) bf16.

        The image is stored lane-aligned into pad_ref's interior; each tap
        (dy, dx) is a static lane slice at offset pad0 + dy*W + dx.  Every read
        that falls outside the real image (margins or row wrap-around) is
        masked to zero (PyTorch zero padding), so the margins never need to be
        initialized (no memset).
        """
        pad_ref[:, pad0:pad0 + P] = act_bf16                  # lane-aligned interior store
        for tap in range(9):
            oy, ox = tap // 3 - 1, tap % 3 - 1
            start = pad0 + oy * W + ox                        # static, always >= 0
            patch = pad_ref[:, start:start + P]               # (C, P) bf16
            preds = [p for p in (row_pred[oy], col_pred[ox]) if p is not None]
            if preds:
                valid = functools.reduce(lambda a, b: a & b, preds)
                patch = jnp.where(valid, patch, jnp.zeros_like(patch))
            col_ref[tap * C:(tap + 1) * C, :] = patch

    def conv(w_bf16, b_f32):
        """(C, 9C) bf16 x (9C, P) bf16 -> f32 on the MXU, + f32 bias."""
        return jnp.dot(w_bf16, col_ref[...],
                       preferred_element_type=jnp.float32) + b_f32

    @pl.when(blk == 0)
    def _():
        fill_im2col(x_ref[0].astype(MATMUL_DTYPE))
        y = conv(wf_ref[...], bf_ref[...])
        o_ref[0] = jnp.where(y >= 0, y, 0.1 * y)              # LeakyReLU(0.1), f32

    @pl.when(blk > 0)
    def _():
        i = blk - 1                                           # block index into stacks
        fea = o_ref[0]                                        # (C, P) f32, VMEM-resident
        fill_im2col(fea.astype(MATMUL_DTYPE))
        mid = jnp.maximum(conv(w1_ref[i], b1_ref[i]), 0.0)    # ReLU, f32; stays in VMEM/vregs
        fill_im2col(mid.astype(MATMUL_DTYPE))
        o_ref[0] = fea + conv(w2_ref[i], b2_ref[i])           # residual add (res_scale = 1)


# ----------------------------- parameters -----------------------------
def init_params(key, num_in_ch, num_out_ch, num_block):
    """Deterministic synthetic params; conv weights in HWIO layout, f32."""
    keys = jax.random.split(key, 2 + 4 * num_block)
    p = {
        "conv_first_w": 0.1 * jax.random.normal(
            keys[0], (3, 3, num_in_ch, num_out_ch), jnp.float32),
        "conv_first_b": 0.01 * jax.random.normal(
            keys[1], (num_out_ch,), jnp.float32),
        "blocks": [],
    }
    for i in range(num_block):
        k = keys[2 + 4 * i: 2 + 4 * (i + 1)]
        p["blocks"].append((
            0.1 * jax.random.normal(k[0], (3, 3, num_out_ch, num_out_ch), jnp.float32),
            0.01 * jax.random.normal(k[1], (num_out_ch,), jnp.float32),
            0.1 * jax.random.normal(k[2], (3, 3, num_out_ch, num_out_ch), jnp.float32),
            0.01 * jax.random.normal(k[3], (num_out_ch,), jnp.float32),
        ))
    return p


def prepare_params(params):
    """One-time prep: HWIO (3,3,Ci,Co) -> MXU-ready (Co, 9*C) bf16 (input channels of
    the first conv zero-padded to C); biases -> (Co,1) f32; block weights stacked."""
    C = params["conv_first_w"].shape[-1]

    def prep_w(w, ci_pad):
        kh, kw, ci, co = w.shape
        if ci_pad > ci:
            w = jnp.pad(w, ((0, 0), (0, 0), (0, ci_pad - ci), (0, 0)))
        return jnp.transpose(w.reshape(kh * kw * ci_pad, co)).astype(MATMUL_DTYPE)

    def prep_b(b):
        return b.reshape(-1, 1).astype(jnp.float32)

    blocks = params["blocks"]
    assert len(blocks) >= 1, "num_block >= 1 expected (module default is 15)"
    return {
        "conv_first_w": prep_w(params["conv_first_w"], C),                     # (C, 9C)
        "conv_first_b": prep_b(params["conv_first_b"]),                        # (C, 1)
        "w1": jnp.stack([prep_w(w1, C) for (w1, _, _, _) in blocks]),          # (NB, C, 9C) bf16
        "b1": jnp.stack([prep_b(b1) for (_, b1, _, _) in blocks]),             # (NB, C, 1)  f32
        "w2": jnp.stack([prep_w(w2, C) for (_, _, w2, _) in blocks]),          # (NB, C, 9C) bf16
        "b2": jnp.stack([prep_b(b2) for (_, _, _, b2) in blocks]),             # (NB, C, 1)  f32
    }


# ----------------------------- forward -----------------------------
def conv_residual_blocks_forward(x_nchw, prepped):
    """Pallas forward.  Input/output are NCHW f32, matching the PyTorch module."""
    N, C_in, H, W = x_nchw.shape
    C = prepped["conv_first_w"].shape[0]
    NB = prepped["w1"].shape[0]
    P = H * W
    assert C_in <= C, "num_in_ch <= num_out_ch expected (module default 3 -> 64)"

    x = x_nchw.reshape(N, C_in, P)                      # free reshape (contiguous)
    if C_in < C:                                        # pad channels so every conv has K = 9*C
        x = jnp.pad(x, ((0, 0), (0, C - C_in), (0, 0)))

    kern = functools.partial(_fused_kernel, H=H, W=W, C=C)
    out = pl.pallas_call(
        kern,
        out_shape=jax.ShapeDtypeStruct((N, C, P), jnp.float32),
        grid=(N, NB + 1),
        in_specs=[
            # image: fetched once per n, resident across the blk axis
            pl.BlockSpec((1, C, P), lambda n, b: (n, 0, 0)),
            # all weights/biases: constant index_map -> VMEM-resident for the whole grid
            pl.BlockSpec((C, 9 * C), lambda n, b: (0, 0)),
            pl.BlockSpec((C, 1), lambda n, b: (0, 0)),
            pl.BlockSpec((NB, C, 9 * C), lambda n, b: (0, 0, 0)),
            pl.BlockSpec((NB, C, 1), lambda n, b: (0, 0, 0)),
            pl.BlockSpec((NB, C, 9 * C), lambda n, b: (0, 0, 0)),
            pl.BlockSpec((NB, C, 1), lambda n, b: (0, 0, 0)),
        ],
        # constant over blk => fea stays resident in VMEM across the whole block chain
        out_specs=pl.BlockSpec((1, C, P), lambda n, b: (n, 0, 0)),
        scratch_shapes=[
            pltpu.VMEM((C, P + 2 * _lane_pad(W)), MATMUL_DTYPE),   # flat zero-pad buffer (bf16)
            pltpu.VMEM((9 * C, P), MATMUL_DTYPE),                  # im2col columns (bf16)
        ],
        compiler_params=pltpu.CompilerParams(
            dimension_semantics=("parallel", "arbitrary")),
    )(x, prepped["conv_first_w"], prepped["conv_first_b"],
      prepped["w1"], prepped["b1"], prepped["w2"], prepped["b2"])
    return out.reshape(N, C, H, W)


# -------- pure-JAX golden reference (bf16-quantized inputs, exact f32 conv) --------
def _ref_conv(x, w, b):
    # Quantize conv inputs/weights to bf16 (what the kernel feeds the MXU), then
    # convolve in exact f32: bf16*bf16 products are exactly representable in f32,
    # so this matches the kernel up to f32 accumulation order.
    xq = x.astype(MATMUL_DTYPE).astype(jnp.float32)
    wq = w.astype(MATMUL_DTYPE).astype(jnp.float32)
    y = lax.conv_general_dilated(
        xq, wq, window_strides=(1, 1), padding="SAME",
        dimension_numbers=("NCHW", "HWIO", "NCHW"),
        precision=lax.Precision.HIGHEST)
    return y + b[None, :, None, None]


def _ref_forward(x_nchw, params):
    fea = _ref_conv(x_nchw, params["conv_first_w"], params["conv_first_b"])
    fea = jnp.where(fea >= 0, fea, 0.1 * fea)
    for (w1, b1, w2, b2) in params["blocks"]:
        mid = jnp.maximum(_ref_conv(fea, w1, b1), 0.0)
        fea = fea + _ref_conv(mid, w2, b2)
    return fea


if __name__ == "__main__":
    num_in_ch, num_feat, num_block = 4, 32, 2
    N, H, W = 2, 16, 16

    key = jax.random.PRNGKey(0)
    kx, kp = jax.random.split(key)
    x = jax.random.normal(kx, (N, num_in_ch, H, W), jnp.float32)   # NCHW input
    params = init_params(kp, num_in_ch, num_feat, num_block)
    prepped = prepare_params(params)

    fwd = jax.jit(conv_residual_blocks_forward)
    out = jax.block_until_ready(fwd(x, prepped))

    ref = jax.block_until_ready(_ref_forward(x, params))
    assert out.shape == (N, num_feat, H, W)
    max_err = float(jnp.max(jnp.abs(out - ref)))
    # Tolerance covers bf16 rounding of the conv inputs/weights accumulated over
    # 1 + 2*num_block convs (structural bugs produce errors orders of magnitude larger).
    assert jnp.allclose(out, ref, atol=5e-2, rtol=5e-2), (
        "mismatch vs reference: max abs err = %g" % max_err)
    print("KERNEL_OK")
</pallas_src>

<mosaic_0001>
module attributes {stable_mosaic.version = 11 : i64} {
  func.func @_fused_kernel(%arg0: i32, %arg1: i32, %arg2: memref<1x32x256xf32, #tpu.memory_space<vmem>>, %arg3: memref<32x288xbf16, #tpu.memory_space<vmem>>, %arg4: memref<32x1xf32, #tpu.memory_space<vmem>>, %arg5: memref<2x32x288xbf16, #tpu.memory_space<vmem>>, %arg6: memref<2x32x1xf32, #tpu.memory_space<vmem>>, %arg7: memref<2x32x288xbf16, #tpu.memory_space<vmem>>, %arg8: memref<2x32x1xf32, #tpu.memory_space<vmem>>, %arg9: memref<1x32x256xf32, #tpu.memory_space<vmem>>, %arg10: memref<32x512xbf16, #tpu.memory_space<vmem>>, %arg11: memref<288x256xbf16, #tpu.memory_space<vmem>>) attributes {dimension_semantics = [#tpu.dimension_semantics<parallel>, #tpu.dimension_semantics<arbitrary>], iteration_bounds = array<i64: 2, 3>, scalar_prefetch = 0 : i64, scratch_operands = 2 : i64, tpu.core_type = #tpu.core_type<tc>, window_params = [{transform_indices = @transform_0, window_bounds = array<i64: 1, 32, 256>}, {pipeline_mode = #tpu.pipeline_mode<synchronous>, transform_indices = @transform_1, window_bounds = array<i64: 32, 288>}, {pipeline_mode = #tpu.pipeline_mode<synchronous>, transform_indices = @transform_2, window_bounds = array<i64: 32, 1>}, {pipeline_mode = #tpu.pipeline_mode<synchronous>, transform_indices = @transform_3, window_bounds = array<i64: 2, 32, 288>}, {pipeline_mode = #tpu.pipeline_mode<synchronous>, transform_indices = @transform_4, window_bounds = array<i64: 2, 32, 1>}, {pipeline_mode = #tpu.pipeline_mode<synchronous>, transform_indices = @transform_5, window_bounds = array<i64: 2, 32, 288>}, {pipeline_mode = #tpu.pipeline_mode<synchronous>, transform_indices = @transform_6, window_bounds = array<i64: 2, 32, 1>}, {transform_indices = @transform_7, window_bounds = array<i64: 1, 32, 256>}]} {
    %0 = tpu.iota {dimensions = array<i32: 1>} : vector<1x256xi32>
    %c15_i32 = arith.constant 15 : i32
    %1 = vector.broadcast %c15_i32 : i32 to vector<1x256xi32>
    %2 = arith.andi %0, %1 : vector<1x256xi32>
    %c16_i32 = arith.constant 16 : i32
    %3 = vector.broadcast %c16_i32 : i32 to vector<1x256xi32>
    %4 = arith.cmpi sge, %0, %3 : vector<1x256xi32>
    %c240_i32 = arith.constant 240 : i32
    %5 = vector.broadcast %c240_i32 : i32 to vector<1x256xi32>
    %6 = arith.cmpi slt, %0, %5 : vector<1x256xi32>
    %c1_i32 = arith.constant 1 : i32
    %7 = vector.broadcast %c1_i32 : i32 to vector<1x256xi32>
    %8 = arith.cmpi sge, %2, %7 : vector<1x256xi32>
    %c14_i32 = arith.constant 14 : i32
    %9 = vector.broadcast %c14_i32 : i32 to vector<1x256xi32>
    %10 = arith.cmpi sle, %2, %9 : vector<1x256xi32>
    %c0_i32 = arith.constant 0 : i32
    %11 = arith.cmpi eq, %arg1, %c0_i32 : i32
    %12 = arith.extui %11 : i1 to i32
    %c0_i32_0 = arith.constant 0 : i32
    %13 = arith.cmpi ne, %12, %c0_i32_0 : i32
    scf.if %13 {
      %c0 = arith.constant 0 : index
      %c0_3 = arith.constant 0 : index
      %c0_4 = arith.constant 0 : index
      %17 = vector.load %arg2[%c0, %c0_3, %c0_4] : memref<1x32x256xf32, #tpu.memory_space<vmem>>, vector<1x32x256xf32>
      %18 = vector.shape_cast %17 : vector<1x32x256xf32> to vector<32x256xf32>
      %19 = arith.truncf %18 : vector<32x256xf32> to vector<32x256xbf16>
      %c0_5 = arith.constant 0 : index
      %c128 = arith.constant 128 : index
      %20 = vector.load %arg10[%c0_5, %c128] : memref<32x512xbf16, #tpu.memory_space<vmem>>, vector<32x256xbf16>
      tpu.vector_store %arg10[%c0_5, %c128], %19 {strides = array<i32>} : memref<32x512xbf16, #tpu.memory_space<vmem>>, vector<32x256xbf16>,
      %c0_6 = arith.constant 0 : index
      %c111 = arith.constant 111 : index
      %21 = vector.load %arg10[%c0_6, %c111] : memref<32x512xbf16, #tpu.memory_space<vmem>>, vector<32x256xbf16>
      %22 = arith.andi %4, %8 : vector<1x256xi1>
      %cst = arith.constant 0.000000e+00 : bf16
      %23 = vector.broadcast %cst : bf16 to vector<32x256xbf16>
      %24 = vector.shape_cast %22 : vector<1x256xi1> to vector<1x256xi1>
      %25 = vector.broadcast %24 : vector<1x256xi1> to vector<32x256xi1>
      %26 = arith.select %25, %21, %23 : vector<32x256xi1>, vector<32x256xbf16>
      %c0_7 = arith.constant 0 : index
      %c0_8 = arith.constant 0 : index
      %27 = vector.load %arg11[%c0_7, %c0_8] : memref<288x256xbf16, #tpu.memory_space<vmem>>, vector<32x256xbf16>
      tpu.vector_store %arg11[%c0_7, %c0_8], %26 {strides = array<i32>} : memref<288x256xbf16, #tpu.memory_space<vmem>>, vector<32x256xbf16>,
      %c0_9 = arith.constant 0 : index
      %c112 = arith.constant 112 : index
      %28 = vector.load %arg10[%c0_9, %c112] : memref<32x512xbf16, #tpu.memory_space<vmem>>, vector<32x256xbf16>
      %cst_10 = arith.constant 0.000000e+00 : bf16
      %29 = vector.broadcast %cst_10 : bf16 to vector<32x256xbf16>
      %30 = vector.shape_cast %4 : vector<1x256xi1> to vector<1x256xi1>
      %31 = vector.broadcast %30 : vector<1x256xi1> to vector<32x256xi1>
      %32 = arith.select %31, %28, %29 : vector<32x256xi1>, vector<32x256xbf16>
      %c32 = arith.constant 32 : index
      %c0_11 = arith.constant 0 : index
      %33 = vector.load %arg11[%c32, %c0_11] : memref<288x256xbf16, #tpu.memory_space<vmem>>, vector<32x256xbf16>
      tpu.vector_store %arg11[%c32, %c0_11], %32 {strides = array<i32>} : memref<288x256xbf16, #tpu.memory_space<vmem>>, vector<32x256xbf16>,
      %c0_12 = arith.constant 0 : index
      %c113 = arith.constant 113 : index
      %34 = vector.load %arg10[%c0_12, %c113] : memref<32x512xbf16, #tpu.memory_space<vmem>>, vector<32x256xbf16>
      %35 = arith.andi %4, %10 : vector<1x256xi1>
      %cst_13 = arith.constant 0.000000e+00 : bf16
      %36 = vector.broadcast %cst_13 : bf16 to vector<32x256xbf16>
      %37 = vector.shape_cast %35 : vector<1x256xi1> to vector<1x256xi1>
      %38 = vector.broadcast %37 : vector<1x256xi1> to vector<32x256xi1>
      %39 = arith.select %38, %34, %36 : vector<32x256xi1>, vector<32x256xbf16>
      %c64 = arith.constant 64 : index
      %c0_14 = arith.constant 0 : index
      %40 = vector.load %arg11[%c64, %c0_14] : memref<288x256xbf16, #tpu.memory_space<vmem>>, vector<32x256xbf16>
      tpu.vector_store %arg11[%c64, %c0_14], %39 {strides = array<i32>} : memref<288x256xbf16, #tpu.memory_space<vmem>>, vector<32x256xbf16>,
      %c0_15 = arith.constant 0 : index
      %c127 = arith.constant 127 : index
      %41 = vector.load %arg10[%c0_15, %c127] : memref<32x512xbf16, #tpu.memory_space<vmem>>, vector<32x256xbf16>
      %cst_16 = arith.constant 0.000000e+00 : bf16
      %42 = vector.broadcast %cst_16 : bf16 to vector<32x256xbf16>
      %43 = vector.shape_cast %8 : vector<1x256xi1> to vector<1x256xi1>
      %44 = vector.broadcast %43 : vector<1x256xi1> to vector<32x256xi1>
      %45 = arith.select %44, %41, %42 : vector<32x256xi1>, vector<32x256xbf16>
      %c96 = arith.constant 96 : index
      %c0_17 = arith.constant 0 : index
      %46 = vector.load %arg11[%c96, %c0_17] : memref<288x256xbf16, #tpu.memory_space<vmem>>, vector<32x256xbf16>
      tpu.vector_store %arg11[%c96, %c0_17], %45 {strides = array<i32>} : memref<288x256xbf16, #tpu.memory_space<vmem>>, vector<32x256xbf16>,
      %c0_18 = arith.constant 0 : index
      %c128_19 = arith.constant 128 : index
      %47 = vector.load %arg10[%c0_18, %c128_19] : memref<32x512xbf16, #tpu.memory_space<vmem>>, vector<32x256xbf16>
      %c128_20 = arith.constant 128 : index
      %c0_21 = arith.constant 0 : index
      %48 = vector.load %arg11[%c128_20, %c0_21] : memref<288x256xbf16, #tpu.memory_space<vmem>>, vector<32x256xbf16>
      tpu.vector_store %arg11[%c128_20, %c0_21], %47 {strides = array<i32>} : memref<288x256xbf16, #tpu.memory_space<vmem>>, vector<32x256xbf16>,
      %c0_22 = arith.constant 0 : index
      %c129 = arith.constant 129 : index
      %49 = vector.load %arg10[%c0_22, %c129] : memref<32x512xbf16, #tpu.memory_space<vmem>>, vector<32x256xbf16>
      %cst_23 = arith.constant 0.000000e+00 : bf16
      %50 = vector.broadcast %cst_23 : bf16 to vector<32x256xbf16>
      %51 = vector.shape_cast %10 : vector<1x256xi1> to vector<1x256xi1>
      %52 = vector.broadcast %51 : vector<1x256xi1> to vector<32x256xi1>
      %53 = arith.select %52, %49, %50 : vector<32x256xi1>, vector<32x256xbf16>
      %c160 = arith.constant 160 : index
      %c0_24 = arith.constant 0 : index
      %54 = vector.load %arg11[%c160, %c0_24] : memref<288x256xbf16, #tpu.memory_space<vmem>>, vector<32x256xbf16>
      tpu.vector_store %arg11[%c160, %c0_24], %53 {strides = array<i32>} : memref<288x256xbf16, #tpu.memory_space<vmem>>, vector<32x256xbf16>,
      %c0_25 = arith.constant 0 : index
      %c143 = arith.constant 143 : index
      %55 = vector.load %arg10[%c0_25, %c143] : memref<32x512xbf16, #tpu.memory_space<vmem>>, vector<32x256xbf16>
      %56 = arith.andi %6, %8 : vector<1x256xi1>
      %cst_26 = arith.constant 0.000000e+00 : bf16
      %57 = vector.broadcast %cst_26 : bf16 to vector<32x256xbf16>
      %58 = vector.shape_cast %56 : vector<1x256xi1> to vector<1x256xi1>
      %59 = vector.broadcast %58 : vector<1x256xi1> to vector<32x256xi1>
      %60 = arith.select %59, %55, %57 : vector<32x256xi1>, vector<32x256xbf16>
      %c192 = arith.constant 192 : index
      %c0_27 = arith.constant 0 : index
      %61 = vector.load %arg11[%c192, %c0_27] : memref<288x256xbf16, #tpu.memory_space<vmem>>, vector<32x256xbf16>
      tpu.vector_store %arg11[%c192, %c0_27], %60 {strides = array<i32>} : memref<288x256xbf16, #tpu.memory_space<vmem>>, vector<32x256xbf16>,
      %c0_28 = arith.constant 0 : index
      %c144 = arith.constant 144 : index
      %62 = vector.load %arg10[%c0_28, %c144] : memref<32x512xbf16, #tpu.memory_space<vmem>>, vector<32x256xbf16>
      %cst_29 = arith.constant 0.000000e+00 : bf16
      %63 = vector.broadcast %cst_29 : bf16 to vector<32x256xbf16>
      %64 = vector.shape_cast %6 : vector<1x256xi1> to vector<1x256xi1>
      %65 = vector.broadcast %64 : vector<1x256xi1> to vector<32x256xi1>
      %66 = arith.select %65, %62, %63 : vector<32x256xi1>, vector<32x256xbf16>
      %c224 = arith.constant 224 : index
      %c0_30 = arith.constant 0 : index
      %67 = vector.load %arg11[%c224, %c0_30] : memref<288x256xbf16, #tpu.memory_space<vmem>>, vector<32x256xbf16>
      tpu.vector_store %arg11[%c224, %c0_30], %66 {strides = array<i32>} : memref<288x256xbf16, #tpu.memory_space<vmem>>, vector<32x256xbf16>,
      %c0_31 = arith.constant 0 : index
      %c145 = arith.constant 145 : index
      %68 = vector.load %arg10[%c0_31, %c145] : memref<32x512xbf16, #tpu.memory_space<vmem>>, vector<32x256xbf16>
      %69 = arith.andi %6, %10 : vector<1x256xi1>
      %cst_32 = arith.constant 0.000000e+00 : bf16
      %70 = vector.broadcast %cst_32 : bf16 to vector<32x256xbf16>
      %71 = vector.shape_cast %69 : vector<1x256xi1> to vector<1x256xi1>
      %72 = vector.broadcast %71 : vector<1x256xi1> to vector<32x256xi1>
      %73 = arith.select %72, %68, %70 : vector<32x256xi1>, vector<32x256xbf16>
      %c256 = arith.constant 256 : index
      %c0_33 = arith.constant 0 : index
      %74 = vector.load %arg11[%c256, %c0_33] : memref<288x256xbf16, #tpu.memory_space<vmem>>, vector<32x256xbf16>
      tpu.vector_store %arg11[%c256, %c0_33], %73 {strides = array<i32>} : memref<288x256xbf16, #tpu.memory_space<vmem>>, vector<32x256xbf16>,
      %c0_34 = arith.constant 0 : index
      %c0_35 = arith.constant 0 : index
      %75 = vector.load %arg3[%c0_34, %c0_35] : memref<32x288xbf16, #tpu.memory_space<vmem>>, vector<32x288xbf16>
      %c0_36 = arith.constant 0 : index
      %c0_37 = arith.constant 0 : index
      %76 = vector.load %arg4[%c0_36, %c0_37] : memref<32x1xf32, #tpu.memory_space<vmem>>, vector<32x1xf32>
      %c0_38 = arith.constant 0 : index
      %c0_39 = arith.constant 0 : index
      %77 = vector.load %arg11[%c0_38, %c0_39] : memref<288x256xbf16, #tpu.memory_space<vmem>>, vector<288x256xbf16>
      %cst_40 = arith.constant dense<0.000000e+00> : vector<32x256xf32>
      %78 = tpu.matmul %75, %77, %cst_40 {dimension_numbers = #tpu.dot_dimension_numbers<[1], [0], [0], [1], [0, 0, 1, 1], [], []>} : vector<32x288xbf16>, vector<288x256xbf16>, vector<32x256xf32> -> vector<32x256xf32>
      %79 = vector.broadcast %76 : vector<32x1xf32> to vector<32x256xf32>
      %80 = arith.addf %78, %79 : vector<32x256xf32>
      %cst_41 = arith.constant 0.000000e+00 : f32
      %81 = vector.broadcast %cst_41 : f32 to vector<32x256xf32>
      %82 = arith.cmpf oge, %80, %81 : vector<32x256xf32>
      %cst_42 = arith.constant 1.000000e-01 : f32
      %83 = vector.broadcast %cst_42 : f32 to vector<32x256xf32>
      %84 = arith.mulf %83, %80 : vector<32x256xf32>
      %85 = arith.select %82, %80, %84 : vector<32x256xi1>, vector<32x256xf32>
      %c0_43 = arith.constant 0 : index
      %c0_44 = arith.constant 0 : index
      %c0_45 = arith.constant 0 : index
      %86 = vector.load %arg9[%c0_43, %c0_44, %c0_45] : memref<1x32x256xf32, #tpu.memory_space<vmem>>, vector<1x32x256xf32>
      %87 = vector.shape_cast %86 : vector<1x32x256xf32> to vector<32x256xf32>
      %88 = vector.shape_cast %85 : vector<32x256xf32> to vector<1x32x256xf32>
      tpu.vector_store %arg9[%c0_43, %c0_44, %c0_45], %88 {strides = array<i32>} : memref<1x32x256xf32, #tpu.memory_space<vmem>>, vector<1x32x256xf32>,
    } else {
    }
    %c0_i32_1 = arith.constant 0 : i32
    %14 = arith.cmpi sgt, %arg1, %c0_i32_1 : i32
    %15 = arith.extui %14 : i1 to i32
    %c0_i32_2 = arith.constant 0 : i32
    %16 = arith.cmpi ne, %15, %c0_i32_2 : i32
    scf.if %16 {
      %c1_i32_3 = arith.constant 1 : i32
      %17 = arith.subi %arg1, %c1_i32_3 : i32
      %c0 = arith.constant 0 : index
      %c0_4 = arith.constant 0 : index
      %c0_5 = arith.constant 0 : index
      %18 = vector.load %arg9[%c0, %c0_4, %c0_5] : memref<1x32x256xf32, #tpu.memory_space<vmem>>, vector<1x32x256xf32>
      %19 = vector.shape_cast %18 : vector<1x32x256xf32> to vector<32x256xf32>
      %20 = arith.truncf %19 : vector<32x256xf32> to vector<32x256xbf16>
      %c0_6 = arith.constant 0 : index
      %c128 = arith.constant 128 : index
      %21 = vector.load %arg10[%c0_6, %c128] : memref<32x512xbf16, #tpu.memory_space<vmem>>, vector<32x256xbf16>
      tpu.vector_store %arg10[%c0_6, %c128], %20 {strides = array<i32>} : memref<32x512xbf16, #tpu.memory_space<vmem>>, vector<32x256xbf16>,
      %c0_7 = arith.constant 0 : index
      %c111 = arith.constant 111 : index
      %22 = vector.load %arg10[%c0_7, %c111] : memref<32x512xbf16, #tpu.memory_space<vmem>>, vector<32x256xbf16>
      %23 = arith.andi %4, %8 : vector<1x256xi1>
      %cst = arith.constant 0.000000e+00 : bf16
      %24 = vector.broadcast %cst : bf16 to vector<32x256xbf16>
      %25 = vector.shape_cast %23 : vector<1x256xi1> to vector<1x256xi1>
      %26 = vector.broadcast %25 : vector<1x256xi1> to vector<32x256xi1>
      %27 = arith.select %26, %22, %24 : vector<32x256xi1>, vector<32x256xbf16>
      %c0_8 = arith.constant 0 : index
      %c0_9 = arith.constant 0 : index
      %28 = vector.load %arg11[%c0_8, %c0_9] : memref<288x256xbf16, #tpu.memory_space<vmem>>, vector<32x256xbf16>
      tpu.vector_store %arg11[%c0_8, %c0_9], %27 {strides = array<i32>} : memref<288x256xbf16, #tpu.memory_space<vmem>>, vector<32x256xbf16>,
      %c0_10 = arith.constant 0 : index
      %c112 = arith.constant 112 : index
      %29 = vector.load %arg10[%c0_10, %c112] : memref<32x512xbf16, #tpu.memory_space<vmem>>, vector<32x256xbf16>
      %cst_11 = arith.constant 0.000000e+00 : bf16
      %30 = vector.broadcast %cst_11 : bf16 to vector<32x256xbf16>
      %31 = vector.shape_cast %4 : vector<1x256xi1> to vector<1x256xi1>
      %32 = vector.broadcast %31 : vector<1x256xi1> to vector<32x256xi1>
      %33 = arith.select %32, %29, %30 : vector<32x256xi1>, vector<32x256xbf16>
      %c32 = arith.constant 32 : index
      %c0_12 = arith.constant 0 : index
      %34 = vector.load %arg11[%c32, %c0_12] : memref<288x256xbf16, #tpu.memory_space<vmem>>, vector<32x256xbf16>
      tpu.vector_store %arg11[%c32, %c0_12], %33 {strides = array<i32>} : memref<288x256xbf16, #tpu.memory_space<vmem>>, vector<32x256xbf16>,
      %c0_13 = arith.constant 0 : index
      %c113 = arith.constant 113 : index
      %35 = vector.load %arg10[%c0_13, %c113] : memref<32x512xbf16, #tpu.memory_space<vmem>>, vector<32x256xbf16>
      %36 = arith.andi %4, %10 : vector<1x256xi1>
      %cst_14 = arith.constant 0.000000e+00 : bf16
      %37 = vector.broadcast %cst_14 : bf16 to vector<32x256xbf16>
      %38 = vector.shape_cast %36 : vector<1x256xi1> to vector<1x256xi1>
      %39 = vector.broadcast %38 : vector<1x256xi1> to vector<32x256xi1>
      %40 = arith.select %39, %35, %37 : vector<32x256xi1>, vector<32x256xbf16>
      %c64 = arith.constant 64 : index
      %c0_15 = arith.constant 0 : index
      %41 = vector.load %arg11[%c64, %c0_15] : memref<288x256xbf16, #tpu.memory_space<vmem>>, vector<32x256xbf16>
      tpu.vector_store %arg11[%c64, %c0_15], %40 {strides = array<i32>} : memref<288x256xbf16, #tpu.memory_space<vmem>>, vector<32x256xbf16>,
      %c0_16 = arith.constant 0 : index
      %c127 = arith.constant 127 : index
      %42 = vector.load %arg10[%c0_16, %c127] : memref<32x512xbf16, #tpu.memory_space<vmem>>, vector<32x256xbf16>
      %cst_17 = arith.constant 0.000000e+00 : bf16
      %43 = vector.broadcast %cst_17 : bf16 to vector<32x256xbf16>
      %44 = vector.shape_cast %8 : vector<1x256xi1> to vector<1x256xi1>
      %45 = vector.broadcast %44 : vector<1x256xi1> to vector<32x256xi1>
      %46 = arith.select %45, %42, %43 : vector<32x256xi1>, vector<32x256xbf16>
      %c96 = arith.constant 96 : index
      %c0_18 = arith.constant 0 : index
      %47 = vector.load %arg11[%c96, %c0_18] : memref<288x256xbf16, #tpu.memory_space<vmem>>, vector<32x256xbf16>
      tpu.vector_store %arg11[%c96, %c0_18], %46 {strides = array<i32>} : memref<288x256xbf16, #tpu.memory_space<vmem>>, vector<32x256xbf16>,
      %c0_19 = arith.constant 0 : index
      %c128_20 = arith.constant 128 : index
      %48 = vector.load %arg10[%c0_19, %c128_20] : memref<32x512xbf16, #tpu.memory_space<vmem>>, vector<32x256xbf16>
      %c128_21 = arith.constant 128 : index
      %c0_22 = arith.constant 0 : index
      %49 = vector.load %arg11[%c128_21, %c0_22] : memref<288x256xbf16, #tpu.memory_space<vmem>>, vector<32x256xbf16>
      tpu.vector_store %arg11[%c128_21, %c0_22], %48 {strides = array<i32>} : memref<288x256xbf16, #tpu.memory_space<vmem>>, vector<32x256xbf16>,
      %c0_23 = arith.constant 0 : index
      %c129 = arith.constant 129 : index
      %50 = vector.load %arg10[%c0_23, %c129] : memref<32x512xbf16, #tpu.memory_space<vmem>>, vector<32x256xbf16>
      %cst_24 = arith.constant 0.000000e+00 : bf16
      %51 = vector.broadcast %cst_24 : bf16 to vector<32x256xbf16>
      %52 = vector.shape_cast %10 : vector<1x256xi1> to vector<1x256xi1>
      %53 = vector.broadcast %52 : vector<1x256xi1> to vector<32x256xi1>
      %54 = arith.select %53, %50, %51 : vector<32x256xi1>, vector<32x256xbf16>
      %c160 = arith.constant 160 : index
      %c0_25 = arith.constant 0 : index
      %55 = vector.load %arg11[%c160, %c0_25] : memref<288x256xbf16, #tpu.memory_space<vmem>>, vector<32x256xbf16>
      tpu.vector_store %arg11[%c160, %c0_25], %54 {strides = array<i32>} : memref<288x256xbf16, #tpu.memory_space<vmem>>, vector<32x256xbf16>,
      %c0_26 = arith.constant 0 : index
      %c143 = arith.constant 143 : index
      %56 = vector.load %arg10[%c0_26, %c143] : memref<32x512xbf16, #tpu.memory_space<vmem>>, vector<32x256xbf16>
      %57 = arith.andi %6, %8 : vector<1x256xi1>
      %cst_27 = arith.constant 0.000000e+00 : bf16
      %58 = vector.broadcast %cst_27 : bf16 to vector<32x256xbf16>
      %59 = vector.shape_cast %57 : vector<1x256xi1> to vector<1x256xi1>
      %60 = vector.broadcast %59 : vector<1x256xi1> to vector<32x256xi1>
      %61 = arith.select %60, %56, %58 : vector<32x256xi1>, vector<32x256xbf16>
      %c192 = arith.constant 192 : index
      %c0_28 = arith.constant 0 : index
      %62 = vector.load %arg11[%c192, %c0_28] : memref<288x256xbf16, #tpu.memory_space<vmem>>, vector<32x256xbf16>
      tpu.vector_store %arg11[%c192, %c0_28], %61 {strides = array<i32>} : memref<288x256xbf16, #tpu.memory_space<vmem>>, vector<32x256xbf16>,
      %c0_29 = arith.constant 0 : index
      %c144 = arith.constant 144 : index
      %63 = vector.load %arg10[%c0_29, %c144] : memref<32x512xbf16, #tpu.memory_space<vmem>>, vector<32x256xbf16>
      %cst_30 = arith.constant 0.000000e+00 : bf16
      %64 = vector.broadcast %cst_30 : bf16 to vector<32x256xbf16>
      %65 = vector.shape_cast %6 : vector<1x256xi1> to vector<1x256xi1>
      %66 = vector.broadcast %65 : vector<1x256xi1> to vector<32x256xi1>
      %67 = arith.select %66, %63, %64 : vector<32x256xi1>, vector<32x256xbf16>
      %c224 = arith.constant 224 : index
      %c0_31 = arith.constant 0 : index
      %68 = vector.load %arg11[%c224, %c0_31] : memref<288x256xbf16, #tpu.memory_space<vmem>>, vector<32x256xbf16>
      tpu.vector_store %arg11[%c224, %c0_31], %67 {strides = array<i32>} : memref<288x256xbf16, #tpu.memory_space<vmem>>, vector<32x256xbf16>,
      %c0_32 = arith.constant 0 : index
      %c145 = arith.constant 145 : index
      %69 = vector.load %arg10[%c0_32, %c145] : memref<32x512xbf16, #tpu.memory_space<vmem>>, vector<32x256xbf16>
      %70 = arith.andi %6, %10 : vector<1x256xi1>
      %cst_33 = arith.constant 0.000000e+00 : bf16
      %71 = vector.broadcast %cst_33 : bf16 to vector<32x256xbf16>
      %72 = vector.shape_cast %70 : vector<1x256xi1> to vector<1x256xi1>
      %73 = vector.broadcast %72 : vector<1x256xi1> to vector<32x256xi1>
      %74 = arith.select %73, %69, %71 : vector<32x256xi1>, vector<32x256xbf16>
      %c256 = arith.constant 256 : index
      %c0_34 = arith.constant 0 : index
      %75 = vector.load %arg11[%c256, %c0_34] : memref<288x256xbf16, #tpu.memory_space<vmem>>, vector<32x256xbf16>
      tpu.vector_store %arg11[%c256, %c0_34], %74 {strides = array<i32>} : memref<288x256xbf16, #tpu.memory_space<vmem>>, vector<32x256xbf16>,
      %76 = arith.index_cast %17 : i32 to index
      %c0_35 = arith.constant 0 : index
      %c0_36 = arith.constant 0 : index
      %77 = vector.load %arg5[%76, %c0_35, %c0_36] : memref<2x32x288xbf16, #tpu.memory_space<vmem>>, vector<1x32x288xbf16>
      %78 = vector.shape_cast %77 : vector<1x32x288xbf16> to vector<32x288xbf16>
      %79 = arith.index_cast %17 : i32 to index
      %c0_37 = arith.constant 0 : index
      %c0_38 = arith.constant 0 : index
      %80 = vector.load %arg6[%79, %c0_37, %c0_38] : memref<2x32x1xf32, #tpu.memory_space<vmem>>, vector<1x32x1xf32>
      %81 = vector.shape_cast %80 : vector<1x32x1xf32> to vector<32x1xf32>
      %c0_39 = arith.constant 0 : index
      %c0_40 = arith.constant 0 : index
      %82 = vector.load %arg11[%c0_39, %c0_40] : memref<288x256xbf16, #tpu.memory_space<vmem>>, vector<288x256xbf16>
      %cst_41 = arith.constant dense<0.000000e+00> : vector<32x256xf32>
      %83 = tpu.matmul %78, %82, %cst_41 {dimension_numbers = #tpu.dot_dimension_numbers<[1], [0], [0], [1], [0, 0, 1, 1], [], []>} : vector<32x288xbf16>, vector<288x256xbf16>, vector<32x256xf32> -> vector<32x256xf32>
      %84 = vector.broadcast %81 : vector<32x1xf32> to vector<32x256xf32>
      %85 = arith.addf %83, %84 : vector<32x256xf32>
      %cst_42 = arith.constant 0.000000e+00 : f32
      %86 = vector.broadcast %cst_42 : f32 to vector<32x256xf32>
      %87 = arith.maximumf %85, %86 : vector<32x256xf32>
      %88 = arith.truncf %87 : vector<32x256xf32> to vector<32x256xbf16>
      %c0_43 = arith.constant 0 : index
      %c128_44 = arith.constant 128 : index
      %89 = vector.load %arg10[%c0_43, %c128_44] : memref<32x512xbf16, #tpu.memory_space<vmem>>, vector<32x256xbf16>
      tpu.vector_store %arg10[%c0_43, %c128_44], %88 {strides = array<i32>} : memref<32x512xbf16, #tpu.memory_space<vmem>>, vector<32x256xbf16>,
      %c0_45 = arith.constant 0 : index
      %c111_46 = arith.constant 111 : index
      %90 = vector.load %arg10[%c0_45, %c111_46] : memref<32x512xbf16, #tpu.memory_space<vmem>>, vector<32x256xbf16>
      %91 = arith.andi %4, %8 : vector<1x256xi1>
      %cst_47 = arith.constant 0.000000e+00 : bf16
      %92 = vector.broadcast %cst_47 : bf16 to vector<32x256xbf16>
      %93 = vector.shape_cast %91 : vector<1x256xi1> to vector<1x256xi1>
      %94 = vector.broadcast %93 : vector<1x256xi1> to vector<32x256xi1>
      %95 = arith.select %94, %90, %92 : vector<32x256xi1>, vector<32x256xbf16>
      %c0_48 = arith.constant 0 : index
      %c0_49 = arith.constant 0 : index
      %96 = vector.load %arg11[%c0_48, %c0_49] : memref<288x256xbf16, #tpu.memory_space<vmem>>, vector<32x256xbf16>
      tpu.vector_store %arg11[%c0_48, %c0_49], %95 {strides = array<i32>} : memref<288x256xbf16, #tpu.memory_space<vmem>>, vector<32x256xbf16>,
      %c0_50 = arith.constant 0 : index
      %c112_51 = arith.constant 112 : index
      %97 = vector.load %arg10[%c0_50, %c112_51] : memref<32x512xbf16, #tpu.memory_space<vmem>>, vector<32x256xbf16>
      %cst_52 = arith.constant 0.000000e+00 : bf16
      %98 = vector.broadcast %cst_52 : bf16 to vector<32x256xbf16>
      %99 = vector.shape_cast %4 : vector<1x256xi1> to vector<1x256xi1>
      %100 = vector.broadcast %99 : vector<1x256xi1> to vector<32x256xi1>
      %101 = arith.select %100, %97, %98 : vector<32x256xi1>, vector<32x256xbf16>
      %c32_53 = arith.constant 32 : index
      %c0_54 = arith.constant 0 : index
      %102 = vector.load %arg11[%c32_53, %c0_54] : memref<288x256xbf16, #tpu.memory_space<vmem>>, vector<32x256xbf16>
      tpu.vector_store %arg11[%c32_53, %c0_54], %101 {strides = array<i32>} : memref<288x256xbf16, #tpu.memory_space<vmem>>, vector<32x256xbf16>,
      %c0_55 = arith.constant 0 : index
      %c113_56 = arith.constant 113 : index
      %103 = vector.load %arg10[%c0_55, %c113_56] : memref<32x512xbf16, #tpu.memory_space<vmem>>, vector<32x256xbf16>
      %104 = arith.andi %4, %10 : vector<1x256xi1>
      %cst_57 = arith.constant 0.000000e+00 : bf16
      %105 = vector.broadcast %cst_57 : bf16 to vector<32x256xbf16>
      %106 = vector.shape_cast %104 : vector<1x256xi1> to vector<1x256xi1>
      %107 = vector.broadcast %106 : vector<1x256xi1> to vector<32x256xi1>
      %108 = arith.select %107, %103, %105 : vector<32x256xi1>, vector<32x256xbf16>
      %c64_58 = arith.constant 64 : index
      %c0_59 = arith.constant 0 : index
      %109 = vector.load %arg11[%c64_58, %c0_59] : memref<288x256xbf16, #tpu.memory_space<vmem>>, vector<32x256xbf16>
      tpu.vector_store %arg11[%c64_58, %c0_59], %108 {strides = array<i32>} : memref<288x256xbf16, #tpu.memory_space<vmem>>, vector<32x256xbf16>,
      %c0_60 = arith.constant 0 : index
      %c127_61 = arith.constant 127 : index
      %110 = vector.load %arg10[%c0_60, %c127_61] : memref<32x512xbf16, #tpu.memory_space<vmem>>, vector<32x256xbf16>
      %cst_62 = arith.constant 0.000000e+00 : bf16
      %111 = vector.broadcast %cst_62 : bf16 to vector<32x256xbf16>
      %112 = vector.shape_cast %8 : vector<1x256xi1> to vector<1x256xi1>
      %113 = vector.broadcast %112 : vector<1x256xi1> to vector<32x256xi1>
      %114 = arith.select %113, %110, %111 : vector<32x256xi1>, vector<32x256xbf16>
      %c96_63 = arith.constant 96 : index
      %c0_64 = arith.constant 0 : index
      %115 = vector.load %arg11[%c96_63, %c0_64] : memref<288x256xbf16, #tpu.memory_space<vmem>>, vector<32x256xbf16>
      tpu.vector_store %arg11[%c96_63, %c0_64], %114 {strides = array<i32>} : memref<288x256xbf16, #tpu.memory_space<vmem>>, vector<32x256xbf16>,
      %c0_65 = arith.constant 0 : index
      %c128_66 = arith.constant 128 : index
      %116 = vector.load %arg10[%c0_65, %c128_66] : memref<32x512xbf16, #tpu.memory_space<vmem>>, vector<32x256xbf16>
      %c128_67 = arith.constant 128 : index
      %c0_68 = arith.constant 0 : index
      %117 = vector.load %arg11[%c128_67, %c0_68] : memref<288x256xbf16, #tpu.memory_space<vmem>>, vector<32x256xbf16>
      tpu.vector_store %arg11[%c128_67, %c0_68], %116 {strides = array<i32>} : memref<288x256xbf16, #tpu.memory_space<vmem>>, vector<32x256xbf16>,
      %c0_69 = arith.constant 0 : index
      %c129_70 = arith.constant 129 : index
      %118 = vector.load %arg10[%c0_69, %c129_70] : memref<32x512xbf16, #tpu.memory_space<vmem>>, vector<32x256xbf16>
      %cst_71 = arith.constant 0.000000e+00 : bf16
      %119 = vector.broadcast %cst_71 : bf16 to vector<32x256xbf16>
      %120 = vector.shape_cast %10 : vector<1x256xi1> to vector<1x256xi1>
      %121 = vector.broadcast %120 : vector<1x256xi1> to vector<32x256xi1>
      %122 = arith.select %121, %118, %119 : vector<32x256xi1>, vector<32x256xbf16>
      %c160_72 = arith.constant 160 : index
      %c0_73 = arith.constant 0 : index
      %123 = vector.load %arg11[%c160_72, %c0_73] : memref<288x256xbf16, #tpu.memory_space<vmem>>, vector<32x256xbf16>
      tpu.vector_store %arg11[%c160_72, %c0_73], %122 {strides = array<i32>} : memref<288x256xbf16, #tpu.memory_space<vmem>>, vector<32x256xbf16>,
      %c0_74 = arith.constant 0 : index
      %c143_75 = arith.constant 143 : index
      %124 = vector.load %arg10[%c0_74, %c143_75] : memref<32x512xbf16, #tpu.memory_space<vmem>>, vector<32x256xbf16>
      %125 = arith.andi %6, %8 : vector<1x256xi1>
      %cst_76 = arith.constant 0.000000e+00 : bf16
      %126 = vector.broadcast %cst_76 : bf16 to vector<32x256xbf16>
      %127 = vector.shape_cast %125 : vector<1x256xi1> to vector<1x256xi1>
      %128 = vector.broadcast %127 : vector<1x256xi1> to vector<32x256xi1>
      %129 = arith.select %128, %124, %126 : vector<32x256xi1>, vector<32x256xbf16>
      %c192_77 = arith.constant 192 : index
      %c0_78 = arith.constant 0 : index
      %130 = vector.load %arg11[%c192_77, %c0_78] : memref<288x256xbf16, #tpu.memory_space<vmem>>, vector<32x256xbf16>
      tpu.vector_store %arg11[%c192_77, %c0_78], %129 {strides = array<i32>} : memref<288x256xbf16, #tpu.memory_space<vmem>>, vector<32x256xbf16>,
      %c0_79 = arith.constant 0 : index
      %c144_80 = arith.constant 144 : index
      %131 = vector.load %arg10[%c0_79, %c144_80] : memref<32x512xbf16, #tpu.memory_space<vmem>>, vector<32x256xbf16>
      %cst_81 = arith.constant 0.000000e+00 : bf16
      %132 = vector.broadcast %cst_81 : bf16 to vector<32x256xbf16>
      %133 = vector.shape_cast %6 : vector<1x256xi1> to vector<1x256xi1>
      %134 = vector.broadcast %133 : vector<1x256xi1> to vector<32x256xi1>
      %135 = arith.select %134, %131, %132 : vector<32x256xi1>, vector<32x256xbf16>
      %c224_82 = arith.constant 224 : index
      %c0_83 = arith.constant 0 : index
      %136 = vector.load %arg11[%c224_82, %c0_83] : memref<288x256xbf16, #tpu.memory_space<vmem>>, vector<32x256xbf16>
      tpu.vector_store %arg11[%c224_82, %c0_83], %135 {strides = array<i32>} : memref<288x256xbf16, #tpu.memory_space<vmem>>, vector<32x256xbf16>,
      %c0_84 = arith.constant 0 : index
      %c145_85 = arith.constant 145 : index
      %137 = vector.load %arg10[%c0_84, %c145_85] : memref<32x512xbf16, #tpu.memory_space<vmem>>, vector<32x256xbf16>
      %138 = arith.andi %6, %10 : vector<1x256xi1>
      %cst_86 = arith.constant 0.000000e+00 : bf16
      %139 = vector.broadcast %cst_86 : bf16 to vector<32x256xbf16>
      %140 = vector.shape_cast %138 : vector<1x256xi1> to vector<1x256xi1>
      %141 = vector.broadcast %140 : vector<1x256xi1> to vector<32x256xi1>
      %142 = arith.select %141, %137, %139 : vector<32x256xi1>, vector<32x256xbf16>
      %c256_87 = arith.constant 256 : index
      %c0_88 = arith.constant 0 : index
      %143 = vector.load %arg11[%c256_87, %c0_88] : memref<288x256xbf16, #tpu.memory_space<vmem>>, vector<32x256xbf16>
      tpu.vector_store %arg11[%c256_87, %c0_88], %142 {strides = array<i32>} : memref<288x256xbf16, #tpu.memory_space<vmem>>, vector<32x256xbf16>,
      %144 = arith.index_cast %17 : i32 to index
      %c0_89 = arith.constant 0 : index
      %c0_90 = arith.constant 0 : index
      %145 = vector.load %arg7[%144, %c0_89, %c0_90] : memref<2x32x288xbf16, #tpu.memory_space<vmem>>, vector<1x32x288xbf16>
      %146 = vector.shape_cast %145 : vector<1x32x288xbf16> to vector<32x288xbf16>
      %147 = arith.index_cast %17 : i32 to index
      %c0_91 = arith.constant 0 : index
      %c0_92 = arith.constant 0 : index
      %148 = vector.load %arg8[%147, %c0_91, %c0_92] : memref<2x32x1xf32, #tpu.memory_space<vmem>>, vector<1x32x1xf32>
      %149 = vector.shape_cast %148 : vector<1x32x1xf32> to vector<32x1xf32>
      %c0_93 = arith.constant 0 : index
      %c0_94 = arith.constant 0 : index
      %150 = vector.load %arg11[%c0_93, %c0_94] : memref<288x256xbf16, #tpu.memory_space<vmem>>, vector<288x256xbf16>
      %cst_95 = arith.constant dense<0.000000e+00> : vector<32x256xf32>
      %151 = tpu.matmul %146, %150, %cst_95 {dimension_numbers = #tpu.dot_dimension_numbers<[1], [0], [0], [1], [0, 0, 1, 1], [], []>} : vector<32x288xbf16>, vector<288x256xbf16>, vector<32x256xf32> -> vector<32x256xf32>
      %152 = vector.broadcast %149 : vector<32x1xf32> to vector<32x256xf32>
      %153 = arith.addf %151, %152 : vector<32x256xf32>
      %154 = arith.addf %19, %153 : vector<32x256xf32>
      %c0_96 = arith.constant 0 : index
      %c0_97 = arith.constant 0 : index
      %c0_98 = arith.constant 0 : index
      %155 = vector.load %arg9[%c0_96, %c0_97, %c0_98] : memref<1x32x256xf32, #tpu.memory_space<vmem>>, vector<1x32x256xf32>
      %156 = vector.shape_cast %155 : vector<1x32x256xf32> to vector<32x256xf32>
      %157 = vector.shape_cast %154 : vector<32x256xf32> to vector<1x32x256xf32>
      tpu.vector_store %arg9[%c0_96, %c0_97, %c0_98], %157 {strides = array<i32>} : memref<1x32x256xf32, #tpu.memory_space<vmem>>, vector<1x32x256xf32>,
    } else {
    }
    return
  }
  func.func @transform_0(%arg0: i32, %arg1: i32) -> (i32, i32, i32) {
    %c0_i32 = arith.constant 0 : i32
    %c0_i32_0 = arith.constant 0 : i32
    %c0_i32_1 = arith.constant 0 : i32
    return %arg0, %c0_i32, %c0_i32_0 : i32, i32, i32
  }
  func.func @transform_1(%arg0: i32, %arg1: i32) -> (i32, i32) {
    %c0_i32 = arith.constant 0 : i32
    %c0_i32_0 = arith.constant 0 : i32
    %c0_i32_1 = arith.constant 0 : i32
    return %c0_i32, %c0_i32_0 : i32, i32
  }
  func.func @transform_2(%arg0: i32, %arg1: i32) -> (i32, i32) {
    %c0_i32 = arith.constant 0 : i32
    %c0_i32_0 = arith.constant 0 : i32
    %c0_i32_1 = arith.constant 0 : i32
    return %c0_i32, %c0_i32_0 : i32, i32
  }
  func.func @transform_3(%arg0: i32, %arg1: i32) -> (i32, i32, i32) {
    %c0_i32 = arith.constant 0 : i32
    %c0_i32_0 = arith.constant 0 : i32
    %c0_i32_1 = arith.constant 0 : i32
    %c0_i32_2 = arith.constant 0 : i32
    return %c0_i32, %c0_i32_0, %c0_i32_1 : i32, i32, i32
  }
  func.func @transform_4(%arg0: i32, %arg1: i32) -> (i32, i32, i32) {
    %c0_i32 = arith.constant 0 : i32
    %c0_i32_0 = arith.constant 0 : i32
    %c0_i32_1 = arith.constant 0 : i32
    %c0_i32_2 = arith.constant 0 : i32
    return %c0_i32, %c0_i32_0, %c0_i32_1 : i32, i32, i32
  }
  func.func @transform_5(%arg0: i32, %arg1: i32) -> (i32, i32, i32) {
    %c0_i32 = arith.constant 0 : i32
    %c0_i32_0 = arith.constant 0 : i32
    %c0_i32_1 = arith.constant 0 : i32
    %c0_i32_2 = arith.constant 0 : i32
    return %c0_i32, %c0_i32_0, %c0_i32_1 : i32, i32, i32
  }
  func.func @transform_6(%arg0: i32, %arg1: i32) -> (i32, i32, i32) {
    %c0_i32 = arith.constant 0 : i32
    %c0_i32_0 = arith.constant 0 : i32
    %c0_i32_1 = arith.constant 0 : i32
    %c0_i32_2 = arith.constant 0 : i32
    return %c0_i32, %c0_i32_0, %c0_i32_1 : i32, i32, i32
  }
  func.func @transform_7(%arg0: i32, %arg1: i32) -> (i32, i32, i32) {
    %c0_i32 = arith.constant 0 : i32
    %c0_i32_0 = arith.constant 0 : i32
    %c0_i32_1 = arith.constant 0 : i32
    return %arg0, %c0_i32, %c0_i32_0 : i32, i32, i32
  }
}

</mosaic_0001>

<llo_original>
// kernel: conv_residual_blocks_forward.1
$region0: #{conv_residual_blocks_forward.1}
  #allocation0 [shape = 'u32[]', space=smem, size = 0x4, offset = 0x4, fixed_abs, tag = 'smem constant byte address 0x4 - core index']
  #allocation1 [shape = 'u32[72,128]{1,0:T(1,128)}', space=vmem, size = 0x9000, scoped, tag = 'internal scratch']
  #allocation2 [shape = 'bf16[32,512]{1,0:T(8,128)(2,1)}', space=vmem, size = 0x8000, scoped, tag = 'scratch operand']
  #allocation3 [shape = 'bf16[288,256]{1,0:T(8,128)(2,1)}', space=vmem, size = 0x24000, scoped, tag = 'scratch operand']
  %s0 = inlined_call_operand.vmem [shape: f32[2,32,256], index: 0, kind: input, shape index: {}]
  %s1 = inlined_call_operand.vmem [shape: bf16[32,288], index: 1, kind: input, shape index: {}]
  %s2 = inlined_call_operand.vmem [shape: f32[32,1], index: 2, kind: input, shape index: {}]
  %s3 = inlined_call_operand.vmem [shape: bf16[2,32,288], index: 3, kind: input, shape index: {}]
  %s4 = inlined_call_operand.vmem [shape: f32[2,32,1], index: 4, kind: input, shape index: {}]
  %s5 = inlined_call_operand.vmem [shape: bf16[2,32,288], index: 5, kind: input, shape index: {}]
  %s6 = inlined_call_operand.vmem [shape: f32[2,32,1], index: 6, kind: input, shape index: {}]
  %s7 = inlined_call_operand.vmem [shape: f32[2,32,256], index: 7, kind: output, shape index: {}]
  %s8 = sld [smem:[#allocation0]]
  $region69: #{conv_residual_blocks_forward.1} parent=0
    _
  %s10 = ssub.s32 1, %s8
  %s11 = scalar_select 0, %s10, %s8
  loop: start=0, step=1, limit=8
  $region2: #{conv_residual_blocks_forward.1} parent=0 // loop_pre_header
    _
  $region3: #{conv_residual_blocks_forward.1} parent=0 // loop_header
    %s13 = sphi 0, %s17
    %p14 = scmp.ge.s32.totalorder %s13, 8
    %s20 = sphi 0, %s32
    %s21 = sphi 0, %s28
    %s22 = sphi 0, %s20
    %s23 = sphi 0, %s21
    %s24 = sphi 0, %s22
    %s25 = sphi 0, %s23
    %s35 = sphi 0, %s37
    %s38 = sphi 0, %s35
    %s39 = sphi 0, %s38
    %s55 = sphi 0, %s39
    %s59 = sphi 0, %s59
    %s61 = sphi 0, %s59
    %s62 = sphi 0, %s61
    %s76 = sphi 0, %s62
    %s80 = sphi 0, %s80
    %s82 = sphi 0, %s80
    %s83 = sphi 0, %s82
    %s97 = sphi 0, %s83
    %s101 = sphi 0, %s101
    %s103 = sphi 0, %s101
    %s104 = sphi 0, %s103
    %s118 = sphi 0, %s104
    %s122 = sphi 0, %s122
    %s124 = sphi 0, %s122
    %s125 = sphi 0, %s124
    %s139 = sphi 0, %s125
    %s143 = sphi 0, %s143
    %s145 = sphi 0, %s143
    %s146 = sphi 0, %s145
    %s160 = sphi 0, %s146
    %s164 = sphi 0, %s164
    %s166 = sphi 0, %s164
    %s167 = sphi 0, %s166
    %s181 = sphi 0, %s167
    %s187 = sphi 0, %s189
    %s190 = sphi 0, %s187
    %s191 = sphi 0, %s190
    %s207 = sphi 0, %s191
  $region4: #{conv_residual_blocks_forward.1} parent=0 // loop_header_branch
    %16 = sbr.rel (%p14) target = $region8
  $region5: #{conv_residual_blocks_forward.1} parent=0 // loop_body
    %s18 = ssub.s32 %s13, 1
    %s19 = ssub.s32 %s13, 2
    %s26 = sadd.s32 1, %s21
    %p27 = scmp.ge.s32.totalorder %s26, 3
    %s28 = scalar_select %p27, 0, %s26
    %s29 = sadd.s32 1, %s20
    %s30 = scalar_select %p27, %s29, %s20
    %p31 = scmp.ge.s32.totalorder %s30, 2
    %s32 = scalar_select %p31, 0, %s30
    %s33 = ssub.s32 %s20, %s32
    %p34 = scmp.eq.s32.totalorder %s33, 0
    %s36 = sadd.s32 %s35, 1
    %s37 = scalar_select %p34, %s35, %s36
    %p40 = pneg %p34
    %p41 = scmp.eq.s32.totalorder %s13, 5
    %p42 = por %p40, %p41
    %p43 = scmp.ne.s32.totalorder %s35, %s38
    %p44 = scmp.eq.s32.totalorder %s13, 0
    %p45 = por %p43, %p44
    %p46 = scmp.ne.s32.totalorder %s35, %s38
    %p47 = scmp.eq.s32.totalorder %s18, 5
    %p48 = por %p46, %p47
    %p49 = scmp.ne.s32.totalorder %s38, %s39
    %p50 = scmp.eq.s32.totalorder %s18, 0
    %p51 = por %p49, %p50
    %p52 = scmp.ne.s32.totalorder %s38, %s39
    %p53 = scmp.eq.s32.totalorder %s19, 5
    %p54 = por %p52, %p53
    %p56 = scmp.ne.s32.totalorder %s39, %s55
    %p57 = scmp.eq.s32.totalorder %s19, 0
    %p58 = por %p56, %p57
    %s60 = sadd.s32 %s59, 1
    %p63 = scmp.eq.s32.totalorder %s13, 5
    %p64 = scmp.ne.s32.totalorder %s59, %s61
    %p65 = scmp.eq.s32.totalorder %s13, 0
    %p66 = por %p64, %p65
    %p67 = scmp.ne.s32.totalorder %s59, %s61
    %p68 = scmp.eq.s32.totalorder %s18, 5
    %p69 = por %p67, %p68
    %p70 = scmp.ne.s32.totalorder %s61, %s62
    %p71 = scmp.eq.s32.totalorder %s18, 0
    %p72 = por %p70, %p71
    %p73 = scmp.ne.s32.totalorder %s61, %s62
    %p74 = scmp.eq.s32.totalorder %s19, 5
    %p75 = por %p73, %p74
    %p77 = scmp.ne.s32.totalorder %s62, %s76
    %p78 = scmp.eq.s32.totalorder %s19, 0
    %p79 = por %p77, %p78
    %s81 = sadd.s32 %s80, 1
    %p84 = scmp.eq.s32.totalorder %s13, 5
    %p85 = scmp.ne.s32.totalorder %s80, %s82
    %p86 = scmp.eq.s32.totalorder %s13, 0
    %p87 = por %p85, %p86
    %p88 = scmp.ne.s32.totalorder %s80, %s82
    %p89 = scmp.eq.s32.totalorder %s18, 5
    %p90 = por %p88, %p89
    %p91 = scmp.ne.s32.totalorder %s82, %s83
    %p92 = scmp.eq.s32.totalorder %s18, 0
    %p93 = por %p91, %p92
    %p94 = scmp.ne.s32.totalorder %s82, %s83
    %p95 = scmp.eq.s32.totalorder %s19, 5
    %p96 = por %p94, %p95
    %p98 = scmp.ne.s32.totalorder %s83, %s97
    %p99 = scmp.eq.s32.totalorder %s19, 0
    %p100 = por %p98, %p99
    %s102 = sadd.s32 %s101, 1
    %p105 = scmp.eq.s32.totalorder %s13, 5
    %p106 = scmp.ne.s32.totalorder %s101, %s103
    %p107 = scmp.eq.s32.totalorder %s13, 0
    %p108 = por %p106, %p107
    %p109 = scmp.ne.s32.totalorder %s101, %s103
    %p110 = scmp.eq.s32.totalorder %s18, 5
    %p111 = por %p109, %p110
    %p112 = scmp.ne.s32.totalorder %s103, %s104
    %p113 = scmp.eq.s32.totalorder %s18, 0
    %p114 = por %p112, %p113
    %p115 = scmp.ne.s32.totalorder %s103, %s104
    %p116 = scmp.eq.s32.totalorder %s19, 5
    %p117 = por %p115, %p116
    %p119 = scmp.ne.s32.totalorder %s104, %s118
    %p120 = scmp.eq.s32.totalorder %s19, 0
    %p121 = por %p119, %p120
    %s123 = sadd.s32 %s122, 1
    %p126 = scmp.eq.s32.totalorder %s13, 5
    %p127 = scmp.ne.s32.totalorder %s122, %s124
    %p128 = scmp.eq.s32.totalorder %s13, 0
    %p129 = por %p127, %p128
    %p130 = scmp.ne.s32.totalorder %s122, %s124
    %p131 = scmp.eq.s32.totalorder %s18, 5
    %p132 = por %p130, %p131
    %p133 = scmp.ne.s32.totalorder %s124, %s125
    %p134 = scmp.eq.s32.totalorder %s18, 0
    %p135 = por %p133, %p134
    %p136 = scmp.ne.s32.totalorder %s124, %s125
    %p137 = scmp.eq.s32.totalorder %s19, 5
    %p138 = por %p136, %p137
    %p140 = scmp.ne.s32.totalorder %s125, %s139
    %p141 = scmp.eq.s32.totalorder %s19, 0
    %p142 = por %p140, %p141
    %s144 = sadd.s32 %s143, 1
    %p147 = scmp.eq.s32.totalorder %s13, 5
    %p148 = scmp.ne.s32.totalorder %s143, %s145
    %p149 = scmp.eq.s32.totalorder %s13, 0
    %p150 = por %p148, %p149
    %p151 = scmp.ne.s32.totalorder %s143, %s145
    %p152 = scmp.eq.s32.totalorder %s18, 5
    %p153 = por %p151, %p152
    %p154 = scmp.ne.s32.totalorder %s145, %s146
    %p155 = scmp.eq.s32.totalorder %s18, 0
    %p156 = por %p154, %p155
    %p157 = scmp.ne.s32.totalorder %s145, %s146
    %p158 = scmp.eq.s32.totalorder %s19, 5
    %p159 = por %p157, %p158
    %p161 = scmp.ne.s32.totalorder %s146, %s160
    %p162 = scmp.eq.s32.totalorder %s19, 0
    %p163 = por %p161, %p162
    %s165 = sadd.s32 %s164, 1
    %p168 = scmp.eq.s32.totalorder %s13, 5
    %p169 = scmp.ne.s32.totalorder %s164, %s166
    %p170 = scmp.eq.s32.totalorder %s13, 0
    %p171 = por %p169, %p170
    %p172 = scmp.ne.s32.totalorder %s164, %s166
    %p173 = scmp.eq.s32.totalorder %s18, 5
    %p174 = por %p172, %p173
    %p175 = scmp.ne.s32.totalorder %s166, %s167
    %p176 = scmp.eq.s32.totalorder %s18, 0
    %p177 = por %p175, %p176
    %p178 = scmp.ne.s32.totalorder %s166, %s167
    %p179 = scmp.eq.s32.totalorder %s19, 5
    %p180 = por %p178, %p179
    %p182 = scmp.ne.s32.totalorder %s167, %s181
    %p183 = scmp.eq.s32.totalorder %s19, 0
    %p184 = por %p182, %p183
    %s185 = ssub.s32 %s20, %s32
    %p186 = scmp.eq.s32.totalorder %s185, 0
    %s188 = sadd.s32 %s187, 1
    %s189 = scalar_select %p186, %s187, %s188
    %p192 = pneg %p186
    %p193 = scmp.eq.s32.totalorder %s13, 5
    %p194 = por %p192, %p193
    %p195 = scmp.ne.s32.totalorder %s187, %s190
    %p196 = scmp.eq.s32.totalorder %s13, 0
    %p197 = por %p195, %p196
    %p198 = scmp.ne.s32.totalorder %s187, %s190
    %p199 = scmp.eq.s32.totalorder %s18, 5
    %p200 = por %p198, %p199
    %p201 = scmp.ne.s32.totalorder %s190, %s191
    %p202 = scmp.eq.s32.totalorder %s18, 0
    %p203 = por %p201, %p202
    %p204 = scmp.ne.s32.totalorder %s190, %s191
    %p205 = scmp.eq.s32.totalorder %s19, 5
    %p206 = por %p204, %p205
    %p208 = scmp.ne.s32.totalorder %s191, %s207
    %p209 = scmp.eq.s32.totalorder %s19, 0
    %p210 = por %p208, %p209
    %p211 = scmp.le.s32.totalorder 1, %s13
    %p212 = scmp.lt.s32.totalorder %s13, 7
    %p213 = pnand %p211, %p212
    %p214 = pneg %p213
    // Predicated region
    $region9: #{conv_residual_blocks_forward.1} parent=5 // pred_check
      _
    $region10: #{conv_residual_blocks_forward.1} parent=5 // pred_check_branch
      %216 = sbr.rel (%p213) target = $region12
    $region11: #{conv_residual_blocks_forward.1} parent=5 // pred_region
      %s217 = ssub.s32 %s13, 1
      // Predicated region
      $region13: #{conv_residual_blocks_forward.1} parent=11 // pred_check
        %p218 = pneg %p72
      $region14: #{conv_residual_blocks_forward.1} parent=11 // pred_check_branch
        %220 = sbr.rel (%p218) target = $region16
      $region15: #{conv_residual_blocks_forward.1} parent=11 // pred_region
        _
      $region16: #{conv_residual_blocks_forward.1} parent=11 // pred_fallthru
        _
      // Predicated region
      $region17: #{conv_residual_blocks_forward.1} parent=11 // pred_check
        %p221 = pneg %p93
      $region18: #{conv_residual_blocks_forward.1} parent=11 // pred_check_branch
        %223 = sbr.rel (%p221) target = $region20
      $region19: #{conv_residual_blocks_forward.1} parent=11 // pred_region
        _
      $region20: #{conv_residual_blocks_forward.1} parent=11 // pred_fallthru
        _
      // Predicated region
      $region21: #{conv_residual_blocks_forward.1} parent=11 // pred_check
        %p224 = pneg %p114
      $region22: #{conv_residual_blocks_forward.1} parent=11 // pred_check_branch
        %226 = sbr.rel (%p224) target = $region24
      $region23: #{conv_residual_blocks_forward.1} parent=11 // pred_region
        _
      $region24: #{conv_residual_blocks_forward.1} parent=11 // pred_fallthru
        _
      // Predicated region
      $region25: #{conv_residual_blocks_forward.1} parent=11 // pred_check
        %p227 = pneg %p135
      $region26: #{conv_residual_blocks_forward.1} parent=11 // pred_check_branch
        %229 = sbr.rel (%p227) target = $region28
      $region27: #{conv_residual_blocks_forward.1} parent=11 // pred_region
        _
      $region28: #{conv_residual_blocks_forward.1} parent=11 // pred_fallthru
        _
      // Predicated region
      $region29: #{conv_residual_blocks_forward.1} parent=11 // pred_check
        %p230 = pneg %p156
      $region30: #{conv_residual_blocks_forward.1} parent=11 // pred_check_branch
        %232 = sbr.rel (%p230) target = $region32
      $region31: #{conv_residual_blocks_forward.1} parent=11 // pred_region
        _
      $region32: #{conv_residual_blocks_forward.1} parent=11 // pred_fallthru
        _
      // Predicated region
      $region33: #{conv_residual_blocks_forward.1} parent=11 // pred_check
        %p233 = pneg %p177
      $region34: #{conv_residual_blocks_forward.1} parent=11 // pred_check_branch
        %235 = sbr.rel (%p233) target = $region36
      $region35: #{conv_residual_blocks_forward.1} parent=11 // pred_region
        _
      $region36: #{conv_residual_blocks_forward.1} parent=11 // pred_fallthru
        _
    $region12: #{conv_residual_blocks_forward.1} parent=5 // pred_fallthru
      _
    %p236 = scmp.lt.s32.totalorder %s13, 6
    // Predicated region
    $region37: #{conv_residual_blocks_forward.1} parent=5 // pred_check
      %p237 = pneg %p236
    $region38: #{conv_residual_blocks_forward.1} parent=5 // pred_check_branch
      %239 = sbr.rel (%p237) target = $region40
    $region39: #{conv_residual_blocks_forward.1} parent=5 // pred_region
      // Predicated region
      $region41: #{conv_residual_blocks_forward.1} parent=39 // pred_check
        %p240 = pneg %p45
      $region42: #{conv_residual_blocks_forward.1} parent=39 // pred_check_branch
        %242 = sbr.rel (%p240) target = $region44
      $region43: #{conv_residual_blocks_forward.1} parent=39 // pred_region
        %p243 = scmp.lt.s32.totalorder %s20, 1
        %s244 = scalar_select %p243, %s20, 1
        %s245 = smul.addr %s244, 8
        %s246 = smul.addr %s245, 8
        %s247 = scalar_lea.vmem %s0, %s246
      $region44: #{conv_residual_blocks_forward.1} parent=39 // pred_fallthru
        _
    $region40: #{conv_residual_blocks_forward.1} parent=5 // pred_fallthru
      _
    %p248 = scmp.le.s32.totalorder 1, %s13
    %p249 = scmp.lt.s32.totalorder %s13, 7
    %p250 = pnand %p248, %p249
    %p251 = pneg %p250
    // Predicated region
    $region45: #{conv_residual_blocks_forward.1} parent=5 // pred_check
      _
    $region46: #{conv_residual_blocks_forward.1} parent=5 // pred_check_branch
      %253 = sbr.rel (%p250) target = $region48
    $region47: #{conv_residual_blocks_forward.1} parent=5 // pred_region
      %s254 = ssub.s32 %s13, 1
      %p255 = scmp.lt.s32.totalorder %s22, 1
      %s256 = scalar_select %p255, %s22, 1
      %s257 = smul.addr %s256, 8
      %s258 = smul.addr %s257, 8
      %s259 = scalar_lea.vmem %s0, %s258
      %p260 = pneg %p51
      %p261 = pneg %p48
      %p262 = pneg %p72
      %p263 = pneg %p69
      %p264 = pneg %p93
      %p265 = pneg %p90
      %p266 = pneg %p114
      %p267 = pneg %p111
      %p268 = pneg %p135
      %p269 = pneg %p132
      %p270 = pneg %p156
      %p271 = pneg %p153
      %p272 = pneg %p177
      %p273 = pneg %p174
      %p274 = pneg %p203
      %p275 = pneg %p200
      %p276 = scmp.lt.s32.totalorder %s22, 1
      %s277 = scalar_select %p276, %s22, 1
      %s278 = smul.addr %s277, 8
      %s279 = smul.addr %s278, 8
      %s280 = scalar_lea.vmem %s7, %s279
      %p281 = scmp.lt.s32.totalorder %s22, 1
      %s282 = scalar_select %p281, %s22, 1
      %s283 = smul.addr %s282, 8
      %s284 = smul.addr %s283, 8
      %s285 = scalar_lea.vmem %s0, %s284
      %p286 = scmp.lt.s32.totalorder %s22, 1
      %s287 = scalar_select %p286, %s22, 1
      %s288 = smul.addr %s287, 8
      %s289 = smul.addr %s288, 8
      %s290 = scalar_lea.vmem %s7, %s289
      %v294 = vlaneseq
      %v295 = vand.u32 %v294, 127
      %v296 = vadd.s32 %v295, 128
      %v297 = vand.u32 %v295, 15
      %v298 = vand.u32 %v296, 15
      %vm299 = vcmp.ge.s32.totalorder %v295, 16
      %vm300 = vcmp.ge.s32.totalorder %v296, 16
      %vm301 = vcmp.lt.s32.totalorder %v295, 240
      %vm302 = vcmp.lt.s32.totalorder %v296, 240
      %vm303 = vcmp.ge.s32.totalorder %v297, 1
      %vm304 = vcmp.ge.s32.totalorder %v298, 1
      %vm305 = vcmp.le.s32.totalorder %v297, 14
      %vm306 = vcmp.le.s32.totalorder %v298, 14
      %p307 = scmp.eq.s32.totalorder %s23, 0
      // Predicated region
      $region49: #{conv_residual_blocks_forward.1} parent=47 // pred_check
        %p308 = pneg %p307
      $region50: #{conv_residual_blocks_forward.1} parent=47 // pred_check_branch
        %310 = sbr.rel (%p308) target = $region52
      $region51: #{conv_residual_blocks_forward.1} parent=47 // pred_region
        %v311 = vld [vmem:[%s285] sm:$0xff]
        %v312 = vld [vmem:[%s285 + $0x8] sm:$0xff]
        %v313 = vld [vmem:[%s285 + $0x10] sm:$0xff]
        %v314 = vld [vmem:[%s285 + $0x18] sm:$0xff]
        %v315 = vld [vmem:[%s285 + $0x20] sm:$0xff]
        %v316 = vld [vmem:[%s285 + $0x28] sm:$0xff]
        %v317 = vld [vmem:[%s285 + $0x30] sm:$0xff]
        %v318 = vld [vmem:[%s285 + $0x38] sm:$0xff]
        %v319 = vpack.c.bf16 %v312, %v311
        %v320 = vpack.c.bf16 %v314, %v313
        %v321 = vpack.c.bf16 %v316, %v315
        %v322 = vpack.c.bf16 %v318, %v317
        %323 = vst [vmem:[#allocation2 + $0x4] sm:$0xff] %v319
        %324 = vst [vmem:[#allocation2 + $0x14] sm:$0xff] %v320
        %325 = vst [vmem:[#allocation2 + $0x24] sm:$0xff] %v321
        %326 = vst [vmem:[#allocation2 + $0x34] sm:$0xff] %v322
        %v327 = vld [vmem:[#allocation2] sm:$0xff]
        %v328 = vld [vmem:[#allocation2 + $0x8] sm:$0xf]
        %v329 = vld [vmem:[#allocation2 + $0x10] sm:$0xff]
        %v330 = vld [vmem:[#allocation2 + $0x18] sm:$0xf]
        %v331 = vld [vmem:[#allocation2 + $0x20] sm:$0xff]
        %v332 = vld [vmem:[#allocation2 + $0x28] sm:$0xf]
        %v333 = vld [vmem:[#allocation2 + $0x30] sm:$0xff]
        %v334 = vld [vmem:[#allocation2 + $0x38] sm:$0xf]
        %vm335 = vmand %vm299, %vm303
        %vm336 = vmand %vm300, %vm304
        %v337 = vsel %vm335, 1, 0
        %v338 = vsel %vm336, 1, 0
        %vm339 = vcmp.eq.s32.totalorder %v337, 1
        %vm340 = vcmp.eq.s32.totalorder %v338, 1
        %vm341 = vmpackc.low %vm340, %vm339
        %v342 = vsel %vm341, 65537, 0
        %343 = vrot.lane.b32.xlu0 %v342, 111
        %v344 = vpop.permute.xlu0 %343
        %v345 = vrot.slane %v344, 4
        %vm346 = vcmask 908288
        %v347 = vsel %vm346, %v345, %v344
        %v348 = vunpack.c.l.b16 %v347
        %v349 = vunpack.c.h.b16 %v347
        %v350 = vunpack.c.l.b16 0
        %v351 = vunpack.c.h.b16 0
        %vm352 = vcmp.ne.s32.totalorder %v348, %v350
        %vm353 = vcmp.ne.s32.totalorder %v349, %v351
        %vm354 = vmpackc.low %vm353, %vm352
        %v355 = vunpack.c.l.b16 %v345
        %v356 = vunpack.c.h.b16 %v345
        %v357 = vunpack.c.l.b16 0
        %v358 = vunpack.c.h.b16 0
        %vm359 = vcmp.ne.s32.totalorder %v355, %v357
        %vm360 = vcmp.ne.s32.totalorder %v356, %v358
        %vm361 = vmpackc.low %vm360, %vm359
        %v362 = vsel %vm354, %v327, 0
        %v363 = vsel %vm361, %v328, 0
        %v364 = vsel %vm354, %v329, 0
        %v365 = vsel %vm361, %v330, 0
        %v366 = vsel %vm354, %v331, 0
        %v367 = vsel %vm361, %v332, 0
        %v368 = vsel %vm354, %v333, 0
        %v369 = vsel %vm361, %v334, 0
        %378 = vrot.lane.b32.xlu0 %v362, 17
        %v379 = vpop.permute.xlu0 %378
        %380 = vrot.lane.b32.xlu0 %v363, 17
        %v381 = vpop.permute.xlu0 %380
        %382 = vrot.lane.b32.xlu0 %v364, 17
        %v383 = vpop.permute.xlu0 %382
        %384 = vrot.lane.b32.xlu0 %v365, 17
        %v385 = vpop.permute.xlu0 %384
        %386 = vrot.lane.b32.xlu0 %v366, 17
        %v387 = vpop.permute.xlu0 %386
        %388 = vrot.lane.b32.xlu0 %v367, 17
        %v389 = vpop.permute.xlu0 %388
        %390 = vrot.lane.b32.xlu0 %v368, 17
        %v391 = vpop.permute.xlu0 %390
        %392 = vrot.lane.b32.xlu0 %v369, 17
        %v393 = vpop.permute.xlu0 %392
        %v394 = vrot.slane %v379, 4
        %v395 = vrot.slane %v381, 4
        %v396 = vrot.slane %v383, 4
        %v397 = vrot.slane %v385, 4
        %v398 = vrot.slane %v387, 4
        %v399 = vrot.slane %v389, 4
        %v400 = vrot.slane %v391, 4
        %v401 = vrot.slane %v393, 4
        %vm402 = vcmask 1043456
        %v403 = vsel %vm402, %v394, %v395
        %vm404 = vcmask 138240
        %v405 = vsel %vm404, %v379, %v403
        %v406 = vsel %vm402, %v396, %v397
        %v407 = vsel %vm404, %v383, %v406
        %v408 = vsel %vm402, %v398, %v399
        %v409 = vsel %vm404, %v387, %v408
        %v410 = vsel %vm402, %v400, %v401
        %v411 = vsel %vm404, %v391, %v410
        %416 = vst [vmem:[#allocation3] sm:$0xff] %v405
        %417 = vst [vmem:[#allocation3 + $0x8] sm:$0xff] %v407
        %418 = vst [vmem:[#allocation3 + $0x10] sm:$0xff] %v409
        %419 = vst [vmem:[#allocation3 + $0x18] sm:$0xff] %v411
        %v420 = vld [vmem:[#allocation2] sm:$0xff]
        %v421 = vld [vmem:[#allocation2 + $0x8] sm:$0xf]
        %v422 = vld [vmem:[#allocation2 + $0x10] sm:$0xff]
        %v423 = vld [vmem:[#allocation2 + $0x18] sm:$0xf]
        %v424 = vld [vmem:[#allocation2 + $0x20] sm:$0xff]
        %v425 = vld [vmem:[#allocation2 + $0x28] sm:$0xf]
        %v426 = vld [vmem:[#allocation2 + $0x30] sm:$0xff]
        %v427 = vld [vmem:[#allocation2 + $0x38] sm:$0xf]
        %v428 = vsel %vm299, 1, 0
        %v429 = vsel %vm300, 1, 0
        %vm430 = vcmp.eq.s32.totalorder %v428, 1
        %vm431 = vcmp.eq.s32.totalorder %v429, 1
        %vm432 = vmpackc.low %vm431, %vm430
        %v433 = vsel %vm432, 65537, 0
        %434 = vrot.lane.b32.xlu0 %v433, 112
        %v435 = vpop.permute.xlu0 %434
        %v436 = vrot.slane %v435, 4
        %vm437 = vcmask 916480
        %v438 = vsel %vm437, %v436, %v435
        %v439 = vunpack.c.l.b16 %v438
        %v440 = vunpack.c.h.b16 %v438
        %v441 = vunpack.c.l.b16 0
        %v442 = vunpack.c.h.b16 0
        %vm443 = vcmp.ne.s32.totalorder %v439, %v441
        %vm444 = vcmp.ne.s32.totalorder %v440, %v442
        %vm445 = vmpackc.low %vm444, %vm443
        %v446 = vunpack.c.l.b16 %v436
        %v447 = vunpack.c.h.b16 %v436
        %v448 = vunpack.c.l.b16 0
        %v449 = vunpack.c.h.b16 0
        %vm450 = vcmp.ne.s32.totalorder %v446, %v448
        %vm451 = vcmp.ne.s32.totalorder %v447, %v449
        %vm452 = vmpackc.low %vm451, %vm450
        %v453 = vsel %vm445, %v420, 0
        %v454 = vsel %vm452, %v421, 0
        %v455 = vsel %vm445, %v422, 0
        %v456 = vsel %vm452, %v423, 0
        %v457 = vsel %vm445, %v424, 0
        %v458 = vsel %vm452, %v425, 0
        %v459 = vsel %vm445, %v426, 0
        %v460 = vsel %vm452, %v427, 0
        %469 = vrot.lane.b32.xlu0 %v453, 16
        %v470 = vpop.permute.xlu0 %469
        %471 = vrot.lane.b32.xlu0 %v454, 16
        %v472 = vpop.permute.xlu0 %471
        %473 = vrot.lane.b32.xlu0 %v455, 16
        %v474 = vpop.permute.xlu0 %473
        %475 = vrot.lane.b32.xlu0 %v456, 16
        %v476 = vpop.permute.xlu0 %475
        %477 = vrot.lane.b32.xlu0 %v457, 16
        %v478 = vpop.permute.xlu0 %477
        %479 = vrot.lane.b32.xlu0 %v458, 16
        %v480 = vpop.permute.xlu0 %479
        %481 = vrot.lane.b32.xlu0 %v459, 16
        %v482 = vpop.permute.xlu0 %481
        %483 = vrot.lane.b32.xlu0 %v460, 16
        %v484 = vpop.permute.xlu0 %483
        %v485 = vrot.slane %v470, 4
        %v486 = vrot.slane %v472, 4
        %v487 = vrot.slane %v474, 4
        %v488 = vrot.slane %v476, 4
        %v489 = vrot.slane %v478, 4
        %v490 = vrot.slane %v480, 4
        %v491 = vrot.slane %v482, 4
        %v492 = vrot.slane %v484, 4
        %v493 = vsel %vm402, %v485, %v486
        %vm494 = vcmask 130048
        %v495 = vsel %vm494, %v470, %v493
        %v496 = vsel %vm402, %v487, %v488
        %v497 = vsel %vm494, %v474, %v496
        %v498 = vsel %vm402, %v489, %v490
        %v499 = vsel %vm494, %v478, %v498
        %v500 = vsel %vm402, %v491, %v492
        %v501 = vsel %vm494, %v482, %v500
        %506 = vst [vmem:[#allocation3 + $0x20] sm:$0xff] %v495
        %507 = vst [vmem:[#allocation3 + $0x28] sm:$0xff] %v497
        %508 = vst [vmem:[#allocation3 + $0x30] sm:$0xff] %v499
        %509 = vst [vmem:[#allocation3 + $0x38] sm:$0xff] %v501
        %v510 = vld [vmem:[#allocation2] sm:$0xff]
        %v511 = vld [vmem:[#allocation2 + $0x8] sm:$0xf]
        %v512 = vld [vmem:[#allocation2 + $0x10] sm:$0xff]
        %v513 = vld [vmem:[#allocation2 + $0x18] sm:$0xf]
        %v514 = vld [vmem:[#allocation2 + $0x20] sm:$0xff]
        %v515 = vld [vmem:[#allocation2 + $0x28] sm:$0xf]
        %v516 = vld [vmem:[#allocation2 + $0x30] sm:$0xff]
        %v517 = vld [vmem:[#allocation2 + $0x38] sm:$0xf]
        %vm518 = vmand %vm299, %vm305
        %vm519 = vmand %vm300, %vm306
        %v520 = vsel %vm518, 1, 0
        %v521 = vsel %vm519, 1, 0
        %vm522 = vcmp.eq.s32.totalorder %v520, 1
        %vm523 = vcmp.eq.s32.totalorder %v521, 1
        %vm524 = vmpackc.low %vm523, %vm522
        %v525 = vsel %vm524, 65537, 0
        %526 = vrot.lane.b32.xlu0 %v525, 113
        %v527 = vpop.permute.xlu0 %526
        %v528 = vrot.slane %v527, 4
        %vm529 = vcmask 924672
        %v530 = vsel %vm529, %v528, %v527
        %v531 = vunpack.c.l.b16 %v530
        %v532 = vunpack.c.h.b16 %v530
        %v533 = vunpack.c.l.b16 0
        %v534 = vunpack.c.h.b16 0
        %vm535 = vcmp.ne.s32.totalorder %v531, %v533
        %vm536 = vcmp.ne.s32.totalorder %v532, %v534
        %vm537 = vmpackc.low %vm536, %vm535
        %v538 = vunpack.c.l.b16 %v528
        %v539 = vunpack.c.h.b16 %v528
        %v540 = vunpack.c.l.b16 0
        %v541 = vunpack.c.h.b16 0
        %vm542 = vcmp.ne.s32.totalorder %v538, %v540
        %vm543 = vcmp.ne.s32.totalorder %v539, %v541
        %vm544 = vmpackc.low %vm543, %vm542
        %v545 = vsel %vm537, %v510, 0
        %v546 = vsel %vm544, %v511, 0
        %v547 = vsel %vm537, %v512, 0
        %v548 = vsel %vm544, %v513, 0
        %v549 = vsel %vm537, %v514, 0
        %v550 = vsel %vm544, %v515, 0
        %v551 = vsel %vm537, %v516, 0
        %v552 = vsel %vm544, %v517, 0
        %561 = vrot.lane.b32.xlu0 %v545, 15
        %v562 = vpop.permute.xlu0 %561
        %563 = vrot.lane.b32.xlu0 %v546, 15
        %v564 = vpop.permute.xlu0 %563
        %565 = vrot.lane.b32.xlu0 %v547, 15
        %v566 = vpop.permute.xlu0 %565
        %567 = vrot.lane.b32.xlu0 %v548, 15
        %v568 = vpop.permute.xlu0 %567
        %569 = vrot.lane.b32.xlu0 %v549, 15
        %v570 = vpop.permute.xlu0 %569
        %571 = vrot.lane.b32.xlu0 %v550, 15
        %v572 = vpop.permute.xlu0 %571
        %573 = vrot.lane.b32.xlu0 %v551, 15
        %v574 = vpop.permute.xlu0 %573
        %575 = vrot.lane.b32.xlu0 %v552, 15
        %v576 = vpop.permute.xlu0 %575
        %v577 = vrot.slane %v562, 4
        %v578 = vrot.slane %v564, 4
        %v579 = vrot.slane %v566, 4
        %v580 = vrot.slane %v568, 4
        %v581 = vrot.slane %v570, 4
        %v582 = vrot.slane %v572, 4
        %v583 = vrot.slane %v574, 4
        %v584 = vrot.slane %v576, 4
        %v585 = vsel %vm402, %v577, %v578
        %vm586 = vcmask 121856
        %v587 = vsel %vm586, %v562, %v585
        %v588 = vsel %vm402, %v579, %v580
        %v589 = vsel %vm586, %v566, %v588
        %v590 = vsel %vm402, %v581, %v582
        %v591 = vsel %vm586, %v570, %v590
        %v592 = vsel %vm402, %v583, %v584
        %v593 = vsel %vm586, %v574, %v592
        %598 = vst [vmem:[#allocation3 + $0x40] sm:$0xff] %v587
        %599 = vst [vmem:[#allocation3 + $0x48] sm:$0xff] %v589
        %600 = vst [vmem:[#allocation3 + $0x50] sm:$0xff] %v591
        %601 = vst [vmem:[#allocation3 + $0x58] sm:$0xff] %v593
        %v602 = vld [vmem:[#allocation2] sm:$0xff]
        %v603 = vld [vmem:[#allocation2 + $0x8] sm:$0xf]
        %v604 = vld [vmem:[#allocation2 + $0x10] sm:$0xff]
        %v605 = vld [vmem:[#allocation2 + $0x18] sm:$0xf]
        %v606 = vld [vmem:[#allocation2 + $0x20] sm:$0xff]
        %v607 = vld [vmem:[#allocation2 + $0x28] sm:$0xf]
        %v608 = vld [vmem:[#allocation2 + $0x30] sm:$0xff]
        %v609 = vld [vmem:[#allocation2 + $0x38] sm:$0xf]
        %v610 = vsel %vm303, 1, 0
        %v611 = vsel %vm304, 1, 0
        %vm612 = vcmp.eq.s32.totalorder %v610, 1
        %vm613 = vcmp.eq.s32.totalorder %v611, 1
        %vm614 = vmpackc.low %vm613, %vm612
        %v615 = vsel %vm614, 65537, 0
        %616 = vrot.lane.b32.xlu0 %v615, 127
        %v617 = vpop.permute.xlu0 %616
        %v618 = vrot.slane %v617, 4
        %vm619 = vcmask 1039360
        %v620 = vsel %vm619, %v618, %v617
        %v621 = vunpack.c.l.b16 %v620
        %v622 = vunpack.c.h.b16 %v620
        %v623 = vunpack.c.l.b16 0
        %v624 = vunpack.c.h.b16 0
        %vm625 = vcmp.ne.s32.totalorder %v621, %v623
        %vm626 = vcmp.ne.s32.totalorder %v622, %v624
        %vm627 = vmpackc.low %vm626, %vm625
        %v628 = vunpack.c.l.b16 %v618
        %v629 = vunpack.c.h.b16 %v618
        %v630 = vunpack.c.l.b16 0
        %v631 = vunpack.c.h.b16 0
        %vm632 = vcmp.ne.s32.totalorder %v628, %v630
        %vm633 = vcmp.ne.s32.totalorder %v629, %v631
        %vm634 = vmpackc.low %vm633, %vm632
        %v635 = vsel %vm627, %v602, 0
        %v636 = vsel %vm634, %v603, 0
        %v637 = vsel %vm627, %v604, 0
        %v638 = vsel %vm634, %v605, 0
        %v639 = vsel %vm627, %v606, 0
        %v640 = vsel %vm634, %v607, 0
        %v641 = vsel %vm627, %v608, 0
        %v642 = vsel %vm634, %v609, 0
        %651 = vrot.lane.b32.xlu0 %v635, 1
        %v652 = vpop.permute.xlu0 %651
        %653 = vrot.lane.b32.xlu0 %v636, 1
        %v654 = vpop.permute.xlu0 %653
        %655 = vrot.lane.b32.xlu0 %v637, 1
        %v656 = vpop.permute.xlu0 %655
        %657 = vrot.lane.b32.xlu0 %v638, 1
        %v658 = vpop.permute.xlu0 %657
        %659 = vrot.lane.b32.xlu0 %v639, 1
        %v660 = vpop.permute.xlu0 %659
        %661 = vrot.lane.b32.xlu0 %v640, 1
        %v662 = vpop.permute.xlu0 %661
        %663 = vrot.lane.b32.xlu0 %v641, 1
        %v664 = vpop.permute.xlu0 %663
        %665 = vrot.lane.b32.xlu0 %v642, 1
        %v666 = vpop.permute.xlu0 %665
        %v667 = vrot.slane %v652, 4
        %v668 = vrot.slane %v654, 4
        %v669 = vrot.slane %v656, 4
        %v670 = vrot.slane %v658, 4
        %v671 = vrot.slane %v660, 4
        %v672 = vrot.slane %v662, 4
        %v673 = vrot.slane %v664, 4
        %v674 = vrot.slane %v666, 4
        %v675 = vsel %vm402, %v667, %v668
        %vm676 = vcmask 7168
        %v677 = vsel %vm676, %v652, %v675
        %v678 = vsel %vm402, %v669, %v670
        %v679 = vsel %vm676, %v656, %v678
        %v680 = vsel %vm402, %v671, %v672
        %v681 = vsel %vm676, %v660, %v680
        %v682 = vsel %vm402, %v673, %v674
        %v683 = vsel %vm676, %v664, %v682
        %688 = vst [vmem:[#allocation3 + $0x60] sm:$0xff] %v677
        %689 = vst [vmem:[#allocation3 + $0x68] sm:$0xff] %v679
        %690 = vst [vmem:[#allocation3 + $0x70] sm:$0xff] %v681
        %691 = vst [vmem:[#allocation3 + $0x78] sm:$0xff] %v683
        %v692 = vld [vmem:[#allocation2 + $0x4] sm:$0xff]
        %v693 = vld [vmem:[#allocation2 + $0x14] sm:$0xff]
        %v694 = vld [vmem:[#allocation2 + $0x24] sm:$0xff]
        %v695 = vld [vmem:[#allocation2 + $0x34] sm:$0xff]
        %696 = vst [vmem:[#allocation3 + $0x80] sm:$0xff] %v692
        %697 = vst [vmem:[#allocation3 + $0x88] sm:$0xff] %v693
        %698 = vst [vmem:[#allocation3 + $0x90] sm:$0xff] %v694
        %699 = vst [vmem:[#allocation3 + $0x98] sm:$0xff] %v695
        %v700 = vld [vmem:[#allocation2 + $0x4] sm:$0xff]
        %v701 = vld [vmem:[#allocation2 + $0xc] sm:$0xf]
        %v702 = vld [vmem:[#allocation2 + $0x14] sm:$0xff]
        %v703 = vld [vmem:[#allocation2 + $0x1c] sm:$0xf]
        %v704 = vld [vmem:[#allocation2 + $0x24] sm:$0xff]
        %v705 = vld [vmem:[#allocation2 + $0x2c] sm:$0xf]
        %v706 = vld [vmem:[#allocation2 + $0x34] sm:$0xff]
        %v707 = vld [vmem:[#allocation2 + $0x3c] sm:$0xf]
        %v708 = vsel %vm305, 1, 0
        %v709 = vsel %vm306, 1, 0
        %vm710 = vcmp.eq.s32.totalorder %v708, 1
        %vm711 = vcmp.eq.s32.totalorder %v709, 1
        %vm712 = vmpackc.low %vm711, %vm710
        %v713 = vsel %vm712, 65537, 0
        %714 = vrot.lane.b32.xlu0 %v713, 1
        %v715 = vpop.permute.xlu0 %714
        %v716 = vrot.slane %v715, 4
        %v717 = vsel %vm676, %v716, %v715
        %v718 = vunpack.c.l.b16 %v717
        %v719 = vunpack.c.h.b16 %v717
        %v720 = vunpack.c.l.b16 0
        %v721 = vunpack.c.h.b16 0
        %vm722 = vcmp.ne.s32.totalorder %v718, %v720
        %vm723 = vcmp.ne.s32.totalorder %v719, %v721
        %vm724 = vmpackc.low %vm723, %vm722
        %v725 = vunpack.c.l.b16 %v716
        %v726 = vunpack.c.h.b16 %v716
        %v727 = vunpack.c.l.b16 0
        %v728 = vunpack.c.h.b16 0
        %vm729 = vcmp.ne.s32.totalorder %v725, %v727
        %vm730 = vcmp.ne.s32.totalorder %v726, %v728
        %vm731 = vmpackc.low %vm730, %vm729
        %v732 = vsel %vm724, %v700, 0
        %v733 = vsel %vm731, %v701, 0
        %v734 = vsel %vm724, %v702, 0
        %v735 = vsel %vm731, %v703, 0
        %v736 = vsel %vm724, %v704, 0
        %v737 = vsel %vm731, %v705, 0
        %v738 = vsel %vm724, %v706, 0
        %v739 = vsel %vm731, %v707, 0
        %748 = vrot.lane.b32.xlu0 %v732, 127
        %v749 = vpop.permute.xlu0 %748
        %750 = vrot.lane.b32.xlu0 %v733, 127
        %v751 = vpop.permute.xlu0 %750
        %752 = vrot.lane.b32.xlu0 %v734, 127
        %v753 = vpop.permute.xlu0 %752
        %754 = vrot.lane.b32.xlu0 %v735, 127
        %v755 = vpop.permute.xlu0 %754
        %756 = vrot.lane.b32.xlu0 %v736, 127
        %v757 = vpop.permute.xlu0 %756
        %758 = vrot.lane.b32.xlu0 %v737, 127
        %v759 = vpop.permute.xlu0 %758
        %760 = vrot.lane.b32.xlu0 %v738, 127
        %v761 = vpop.permute.xlu0 %760
        %762 = vrot.lane.b32.xlu0 %v739, 127
        %v763 = vpop.permute.xlu0 %762
        %v764 = vrot.slane %v749, 4
        %v765 = vrot.slane %v751, 4
        %v766 = vrot.slane %v753, 4
        %v767 = vrot.slane %v755, 4
        %v768 = vrot.slane %v757, 4
        %v769 = vrot.slane %v759, 4
        %v770 = vrot.slane %v761, 4
        %v771 = vrot.slane %v763, 4
        %v772 = vsel %vm402, %v764, %v765
        %v773 = vsel %vm619, %v749, %v772
        %v774 = vsel %vm402, %v766, %v767
        %v775 = vsel %vm619, %v753, %v774
        %v776 = vsel %vm402, %v768, %v769
        %v777 = vsel %vm619, %v757, %v776
        %v778 = vsel %vm402, %v770, %v771
        %v779 = vsel %vm619, %v761, %v778
        %784 = vst [vmem:[#allocation3 + $0xa0] sm:$0xff] %v773
        %785 = vst [vmem:[#allocation3 + $0xa8] sm:$0xff] %v775
        %786 = vst [vmem:[#allocation3 + $0xb0] sm:$0xff] %v777
        %787 = vst [vmem:[#allocation3 + $0xb8] sm:$0xff] %v779
        %v788 = vld [vmem:[#allocation2 + $0x4] sm:$0xff]
        %v789 = vld [vmem:[#allocation2 + $0xc] sm:$0xf]
        %v790 = vld [vmem:[#allocation2 + $0x14] sm:$0xff]
        %v791 = vld [vmem:[#allocation2 + $0x1c] sm:$0xf]
        %v792 = vld [vmem:[#allocation2 + $0x24] sm:$0xff]
        %v793 = vld [vmem:[#allocation2 + $0x2c] sm:$0xf]
        %v794 = vld [vmem:[#allocation2 + $0x34] sm:$0xff]
        %v795 = vld [vmem:[#allocation2 + $0x3c] sm:$0xf]
        %vm796 = vmand %vm301, %vm303
        %vm797 = vmand %vm302, %vm304
        %v798 = vsel %vm796, 1, 0
        %v799 = vsel %vm797, 1, 0
        %vm800 = vcmp.eq.s32.totalorder %v798, 1
        %vm801 = vcmp.eq.s32.totalorder %v799, 1
        %vm802 = vmpackc.low %vm801, %vm800
        %v803 = vsel %vm802, 65537, 0
        %804 = vrot.lane.b32.xlu0 %v803, 15
        %v805 = vpop.permute.xlu0 %804
        %v806 = vrot.slane %v805, 4
        %v807 = vsel %vm586, %v806, %v805
        %v808 = vunpack.c.l.b16 %v807
        %v809 = vunpack.c.h.b16 %v807
        %v810 = vunpack.c.l.b16 0
        %v811 = vunpack.c.h.b16 0
        %vm812 = vcmp.ne.s32.totalorder %v808, %v810
        %vm813 = vcmp.ne.s32.totalorder %v809, %v811
        %vm814 = vmpackc.low %vm813, %vm812
        %v815 = vunpack.c.l.b16 %v806
        %v816 = vunpack.c.h.b16 %v806
        %v817 = vunpack.c.l.b16 0
        %v818 = vunpack.c.h.b16 0
        %vm819 = vcmp.ne.s32.totalorder %v815, %v817
        %vm820 = vcmp.ne.s32.totalorder %v816, %v818
        %vm821 = vmpackc.low %vm820, %vm819
        %v822 = vsel %vm814, %v788, 0
        %v823 = vsel %vm821, %v789, 0
        %v824 = vsel %vm814, %v790, 0
        %v825 = vsel %vm821, %v791, 0
        %v826 = vsel %vm814, %v792, 0
        %v827 = vsel %vm821, %v793, 0
        %v828 = vsel %vm814, %v794, 0
        %v829 = vsel %vm821, %v795, 0
        %838 = vrot.lane.b32.xlu0 %v822, 113
        %v839 = vpop.permute.xlu0 %838
        %840 = vrot.lane.b32.xlu0 %v823, 113
        %v841 = vpop.permute.xlu0 %840
        %842 = vrot.lane.b32.xlu0 %v824, 113
        %v843 = vpop.permute.xlu0 %842
        %844 = vrot.lane.b32.xlu0 %v825, 113
        %v845 = vpop.permute.xlu0 %844
        %846 = vrot.lane.b32.xlu0 %v826, 113
        %v847 = vpop.permute.xlu0 %846
        %848 = vrot.lane.b32.xlu0 %v827, 113
        %v849 = vpop.permute.xlu0 %848
        %850 = vrot.lane.b32.xlu0 %v828, 113
        %v851 = vpop.permute.xlu0 %850
        %852 = vrot.lane.b32.xlu0 %v829, 113
        %v853 = vpop.permute.xlu0 %852
        %v854 = vrot.slane %v839, 4
        %v855 = vrot.slane %v841, 4
        %v856 = vrot.slane %v843, 4
        %v857 = vrot.slane %v845, 4
        %v858 = vrot.slane %v847, 4
        %v859 = vrot.slane %v849, 4
        %v860 = vrot.slane %v851, 4
        %v861 = vrot.slane %v853, 4
        %v862 = vsel %vm402, %v854, %v855
        %v863 = vsel %vm529, %v839, %v862
        %v864 = vsel %vm402, %v856, %v857
        %v865 = vsel %vm529, %v843, %v864
        %v866 = vsel %vm402, %v858, %v859
        %v867 = vsel %vm529, %v847, %v866
        %v868 = vsel %vm402, %v860, %v861
        %v869 = vsel %vm529, %v851, %v868
        %874 = vst [vmem:[#allocation3 + $0xc0] sm:$0xff] %v863
        %875 = vst [vmem:[#allocation3 + $0xc8] sm:$0xff] %v865
        %876 = vst [vmem:[#allocation3 + $0xd0] sm:$0xff] %v867
        %877 = vst [vmem:[#allocation3 + $0xd8] sm:$0xff] %v869
        %v878 = vld [vmem:[#allocation2 + $0x4] sm:$0xff]
        %v879 = vld [vmem:[#allocation2 + $0xc] sm:$0xf]
        %v880 = vld [vmem:[#allocation2 + $0x14] sm:$0xff]
        %v881 = vld [vmem:[#allocation2 + $0x1c] sm:$0xf]
        %v882 = vld [vmem:[#allocation2 + $0x24] sm:$0xff]
        %v883 = vld [vmem:[#allocation2 + $0x2c] sm:$0xf]
        %v884 = vld [vmem:[#allocation2 + $0x34] sm:$0xff]
        %v885 = vld [vmem:[#allocation2 + $0x3c] sm:$0xf]
        %v886 = vsel %vm301, 1, 0
        %v887 = vsel %vm302, 1, 0
        %vm888 = vcmp.eq.s32.totalorder %v886, 1
        %vm889 = vcmp.eq.s32.totalorder %v887, 1
        %vm890 = vmpackc.low %vm889, %vm888
        %v891 = vsel %vm890, 65537, 0
        %892 = vrot.lane.b32.xlu0 %v891, 16
        %v893 = vpop.permute.xlu0 %892
        %v894 = vrot.slane %v893, 4
        %v895 = vsel %vm494, %v894, %v893
        %v896 = vunpack.c.l.b16 %v895
        %v897 = vunpack.c.h.b16 %v895
        %v898 = vunpack.c.l.b16 0
        %v899 = vunpack.c.h.b16 0
        %vm900 = vcmp.ne.s32.totalorder %v896, %v898
        %vm901 = vcmp.ne.s32.totalorder %v897, %v899
        %vm902 = vmpackc.low %vm901, %vm900
        %v903 = vunpack.c.l.b16 %v894
        %v904 = vunpack.c.h.b16 %v894
        %v905 = vunpack.c.l.b16 0
        %v906 = vunpack.c.h.b16 0
        %vm907 = vcmp.ne.s32.totalorder %v903, %v905
        %vm908 = vcmp.ne.s32.totalorder %v904, %v906
        %vm909 = vmpackc.low %vm908, %vm907
        %v910 = vsel %vm902, %v878, 0
        %v911 = vsel %vm909, %v879, 0
        %v912 = vsel %vm902, %v880, 0
        %v913 = vsel %vm909, %v881, 0
        %v914 = vsel %vm902, %v882, 0
        %v915 = vsel %vm909, %v883, 0
        %v916 = vsel %vm902, %v884, 0
        %v917 = vsel %vm909, %v885, 0
        %926 = vrot.lane.b32.xlu0 %v910, 112
        %v927 = vpop.permute.xlu0 %926
        %928 = vrot.lane.b32.xlu0 %v911, 112
        %v929 = vpop.permute.xlu0 %928
        %930 = vrot.lane.b32.xlu0 %v912, 112
        %v931 = vpop.permute.xlu0 %930
        %932 = vrot.lane.b32.xlu0 %v913, 112
        %v933 = vpop.permute.xlu0 %932
        %934 = vrot.lane.b32.xlu0 %v914, 112
        %v935 = vpop.permute.xlu0 %934
        %936 = vrot.lane.b32.xlu0 %v915, 112
        %v937 = vpop.permute.xlu0 %936
        %938 = vrot.lane.b32.xlu0 %v916, 112
        %v939 = vpop.permute.xlu0 %938
        %940 = vrot.lane.b32.xlu0 %v917, 112
        %v941 = vpop.permute.xlu0 %940
        %v942 = vrot.slane %v927, 4
        %v943 = vrot.slane %v929, 4
        %v944 = vrot.slane %v931, 4
        %v945 = vrot.slane %v933, 4
        %v946 = vrot.slane %v935, 4
        %v947 = vrot.slane %v937, 4
        %v948 = vrot.slane %v939, 4
        %v949 = vrot.slane %v941, 4
        %v950 = vsel %vm402, %v942, %v943
        %v951 = vsel %vm437, %v927, %v950
        %v952 = vsel %vm402, %v944, %v945
        %v953 = vsel %vm437, %v931, %v952
        %v954 = vsel %vm402, %v946, %v947
        %v955 = vsel %vm437, %v935, %v954
        %v956 = vsel %vm402, %v948, %v949
        %v957 = vsel %vm437, %v939, %v956
        %962 = vst [vmem:[#allocation3 + $0xe0] sm:$0xff] %v951
        %963 = vst [vmem:[#allocation3 + $0xe8] sm:$0xff] %v953
        %964 = vst [vmem:[#allocation3 + $0xf0] sm:$0xff] %v955
        %965 = vst [vmem:[#allocation3 + $0xf8] sm:$0xff] %v957
        %v966 = vld [vmem:[#allocation2 + $0x4] sm:$0xff]
        %v967 = vld [vmem:[#allocation2 + $0xc] sm:$0xf]
        %v968 = vld [vmem:[#allocation2 + $0x14] sm:$0xff]
        %v969 = vld [vmem:[#allocation2 + $0x1c] sm:$0xf]
        %v970 = vld [vmem:[#allocation2 + $0x24] sm:$0xff]
        %v971 = vld [vmem:[#allocation2 + $0x2c] sm:$0xf]
        %v972 = vld [vmem:[#allocation2 + $0x34] sm:$0xff]
        %v973 = vld [vmem:[#allocation2 + $0x3c] sm:$0xf]
        %vm974 = vmand %vm301, %vm305
        %vm975 = vmand %vm302, %vm306
        %v976 = vsel %vm974, 1, 0
        %v977 = vsel %vm975, 1, 0
        %vm978 = vcmp.eq.s32.totalorder %v976, 1
        %vm979 = vcmp.eq.s32.totalorder %v977, 1
        %vm980 = vmpackc.low %vm979, %vm978
        %v981 = vsel %vm980, 65537, 0
        %982 = vrot.lane.b32.xlu0 %v981, 17
        %v983 = vpop.permute.xlu0 %982
        %v984 = vrot.slane %v983, 4
        %v985 = vsel %vm404, %v984, %v983
        %v986 = vunpack.c.l.b16 %v985
        %v987 = vunpack.c.h.b16 %v985
        %v988 = vunpack.c.l.b16 0
        %v989 = vunpack.c.h.b16 0
        %vm990 = vcmp.ne.s32.totalorder %v986, %v988
        %vm991 = vcmp.ne.s32.totalorder %v987, %v989
        %vm992 = vmpackc.low %vm991, %vm990
        %v993 = vunpack.c.l.b16 %v984
        %v994 = vunpack.c.h.b16 %v984
        %v995 = vunpack.c.l.b16 0
        %v996 = vunpack.c.h.b16 0
        %vm997 = vcmp.ne.s32.totalorder %v993, %v995
        %vm998 = vcmp.ne.s32.totalorder %v994, %v996
        %vm999 = vmpackc.low %vm998, %vm997
        %v1000 = vsel %vm992, %v966, 0
        %v1001 = vsel %vm999, %v967, 0
        %v1002 = vsel %vm992, %v968, 0
        %v1003 = vsel %vm999, %v969, 0
        %v1004 = vsel %vm992, %v970, 0
        %v1005 = vsel %vm999, %v971, 0
        %v1006 = vsel %vm992, %v972, 0
        %v1007 = vsel %vm999, %v973, 0
        %1016 = vrot.lane.b32.xlu0 %v1000, 111
        %v1017 = vpop.permute.xlu0 %1016
        %1018 = vrot.lane.b32.xlu0 %v1001, 111
        %v1019 = vpop.permute.xlu0 %1018
        %1020 = vrot.lane.b32.xlu0 %v1002, 111
        %v1021 = vpop.permute.xlu0 %1020
        %1022 = vrot.lane.b32.xlu0 %v1003, 111
        %v1023 = vpop.permute.xlu0 %1022
        %1024 = vrot.lane.b32.xlu0 %v1004, 111
        %v1025 = vpop.permute.xlu0 %1024
        %1026 = vrot.lane.b32.xlu0 %v1005, 111
        %v1027 = vpop.permute.xlu0 %1026
        %1028 = vrot.lane.b32.xlu0 %v1006, 111
        %v1029 = vpop.permute.xlu0 %1028
        %1030 = vrot.lane.b32.xlu0 %v1007, 111
        %v1031 = vpop.permute.xlu0 %1030
        %v1032 = vrot.slane %v1017, 4
        %v1033 = vrot.slane %v1019, 4
        %v1034 = vrot.slane %v1021, 4
        %v1035 = vrot.slane %v1023, 4
        %v1036 = vrot.slane %v1025, 4
        %v1037 = vrot.slane %v1027, 4
        %v1038 = vrot.slane %v1029, 4
        %v1039 = vrot.slane %v1031, 4
        %v1040 = vsel %vm402, %v1032, %v1033
        %v1041 = vsel %vm346, %v1017, %v1040
        %v1042 = vsel %vm402, %v1034, %v1035
        %v1043 = vsel %vm346, %v1021, %v1042
        %v1044 = vsel %vm402, %v1036, %v1037
        %v1045 = vsel %vm346, %v1025, %v1044
        %v1046 = vsel %vm402, %v1038, %v1039
        %v1047 = vsel %vm346, %v1029, %v1046
        %1052 = vst [vmem:[#allocation3 + $0x100] sm:$0xff] %v1041
        %1053 = vst [vmem:[#allocation3 + $0x108] sm:$0xff] %v1043
        %1054 = vst [vmem:[#allocation3 + $0x110] sm:$0xff] %v1045
        %1055 = vst [vmem:[#allocation3 + $0x118] sm:$0xff] %v1047
        %v1056 = vld [vmem:[%s1] sm:$0xff]
        %v1057 = vld [vmem:[%s1 + $0x8] sm:$0xf]
        %v1058 = vld [vmem:[%s1 + $0xc] sm:$0xff]
        %v1059 = vld [vmem:[%s1 + $0x14] sm:$0xf]
        %v1060 = vld [vmem:[%s1 + $0x18] sm:$0xff]
        %v1061 = vld [vmem:[%s1 + $0x20] sm:$0xf]
        %v1062 = vld [vmem:[%s1 + $0x24] sm:$0xff]
        %v1063 = vld [vmem:[%s1 + $0x2c] sm:$0xf]
        %v1064 = vld [vmem:[%s2] sm:$0xff]
        %v1065 = vld [vmem:[%s2 + $0x8] sm:$0xff]
        %v1066 = vld [vmem:[%s2 + $0x10] sm:$0xff]
        %v1067 = vld [vmem:[%s2 + $0x18] sm:$0xff]
        %v1068 = vld [vmem:[#allocation3] sm:$0xff]
        %v1069 = vld [vmem:[#allocation3 + $0x8] sm:$0xff]
        %v1070 = vld [vmem:[#allocation3 + $0x10] sm:$0xff]
        %v1071 = vld [vmem:[#allocation3 + $0x18] sm:$0xff]
        %v1072 = vld [vmem:[#allocation3 + $0x20] sm:$0xff]
        %v1073 = vld [vmem:[#allocation3 + $0x28] sm:$0xff]
        %v1074 = vld [vmem:[#allocation3 + $0x30] sm:$0xff]
        %v1075 = vld [vmem:[#allocation3 + $0x38] sm:$0xff]
        %v1076 = vld [vmem:[#allocation3 + $0x40] sm:$0xff]
        %v1077 = vld [vmem:[#allocation3 + $0x48] sm:$0xff]
        %v1078 = vld [vmem:[#allocation3 + $0x50] sm:$0xff]
        %v1079 = vld [vmem:[#allocation3 + $0x58] sm:$0xff]
        %v1080 = vld [vmem:[#allocation3 + $0x60] sm:$0xff]
        %v1081 = vld [vmem:[#allocation3 + $0x68] sm:$0xff]
        %v1082 = vld [vmem:[#allocation3 + $0x70] sm:$0xff]
        %v1083 = vld [vmem:[#allocation3 + $0x78] sm:$0xff]
        %v1084 = vld [vmem:[#allocation3 + $0x80] sm:$0xff]
        %v1085 = vld [vmem:[#allocation3 + $0x88] sm:$0xff]
        %v1086 = vld [vmem:[#allocation3 + $0x90] sm:$0xff]
        %v1087 = vld [vmem:[#allocation3 + $0x98] sm:$0xff]
        %v1088 = vld [vmem:[#allocation3 + $0xa0] sm:$0xff]
        %v1089 = vld [vmem:[#allocation3 + $0xa8] sm:$0xff]
        %v1090 = vld [vmem:[#allocation3 + $0xb0] sm:$0xff]
        %v1091 = vld [vmem:[#allocation3 + $0xb8] sm:$0xff]
        %v1092 = vld [vmem:[#allocation3 + $0xc0] sm:$0xff]
        %v1093 = vld [vmem:[#allocation3 + $0xc8] sm:$0xff]
        %v1094 = vld [vmem:[#allocation3 + $0xd0] sm:$0xff]
        %v1095 = vld [vmem:[#allocation3 + $0xd8] sm:$0xff]
        %v1096 = vld [vmem:[#allocation3 + $0xe0] sm:$0xff]
        %v1097 = vld [vmem:[#allocation3 + $0xe8] sm:$0xff]
        %v1098 = vld [vmem:[#allocation3 + $0xf0] sm:$0xff]
        %v1099 = vld [vmem:[#allocation3 + $0xf8] sm:$0xff]
        %v1100 = vld [vmem:[#allocation3 + $0x100] sm:$0xff]
        %v1101 = vld [vmem:[#allocation3 + $0x108] sm:$0xff]
        %v1102 = vld [vmem:[#allocation3 + $0x110] sm:$0xff]
        %v1103 = vld [vmem:[#allocation3 + $0x118] sm:$0xff]
        %1105 = vset.pattern.permute.xlu0 0
        %1106 = vperm.xlu0 %1105, %v1064
        %v1107 = vpop.permute.xlu0 %1106
        %1110 = vset.pattern.permute.xlu0 0
        %1111 = vperm.xlu0 %1110, %v1065
        %v1112 = vpop.permute.xlu0 %1111
        %1115 = vset.pattern.permute.xlu0 0
        %1116 = vperm.xlu0 %1115, %v1066
        %v1117 = vpop.permute.xlu0 %1116
        %1120 = vset.pattern.permute.xlu0 0
        %1121 = vperm.xlu0 %1120, %v1067
        %v1122 = vpop.permute.xlu0 %1121
        %v1132 = vunpack.c.l.b16 %v1056
        %v1133 = vunpack.c.h.b16 %v1056
        %v1134 = vunpack.c.l.b16 %v1057
        %v1135 = vunpack.c.l.b16 %v1058
        %v1136 = vunpack.c.h.b16 %v1058
        %v1137 = vunpack.c.l.b16 %v1059
        %v1138 = vunpack.c.l.b16 %v1060
        %v1139 = vunpack.c.h.b16 %v1060
        %v1140 = vunpack.c.l.b16 %v1061
        %v1141 = vunpack.c.l.b16 %v1062
        %v1142 = vunpack.c.h.b16 %v1062
        %v1143 = vunpack.c.l.b16 %v1063
        %v1144 = vpack.c.b16 %v1135, %v1132
        %v1145 = vpack.c.b16 %v1136, %v1133
        %v1146 = vpack.c.b16 %v1137, %v1134
        %v1147 = vpack.c.b16 %v1141, %v1138
        %v1148 = vpack.c.b16 %v1142, %v1139
        %v1149 = vpack.c.b16 %v1143, %v1140
        %v1190 = vunpack.c.l.b16 %v1068
        %v1191 = vunpack.c.h.b16 %v1068
        %v1192 = vunpack.c.l.b16 %v1069
        %v1193 = vunpack.c.h.b16 %v1069
        %v1194 = vunpack.c.l.b16 %v1070
        %v1195 = vunpack.c.h.b16 %v1070
        %v1196 = vunpack.c.l.b16 %v1071
        %v1197 = vunpack.c.h.b16 %v1071
        %v1198 = vunpack.c.l.b16 %v1072
        %v1199 = vunpack.c.h.b16 %v1072
        %v1200 = vunpack.c.l.b16 %v1073
        %v1201 = vunpack.c.h.b16 %v1073
        %v1202 = vunpack.c.l.b16 %v1074
        %v1203 = vunpack.c.h.b16 %v1074
        %v1204 = vunpack.c.l.b16 %v1075
        %v1205 = vunpack.c.h.b16 %v1075
        %v1206 = vunpack.c.l.b16 %v1076
        %v1207 = vunpack.c.h.b16 %v1076
        %v1208 = vunpack.c.l.b16 %v1077
        %v1209 = vunpack.c.h.b16 %v1077
        %v1210 = vunpack.c.l.b16 %v1078
        %v1211 = vunpack.c.h.b16 %v1078
        %v1212 = vunpack.c.l.b16 %v1079
        %v1213 = vunpack.c.h.b16 %v1079
        %v1214 = vunpack.c.l.b16 %v1080
        %v1215 = vunpack.c.h.b16 %v1080
        %v1216 = vunpack.c.l.b16 %v1081
        %v1217 = vunpack.c.h.b16 %v1081
        %v1218 = vunpack.c.l.b16 %v1082
        %v1219 = vunpack.c.h.b16 %v1082
        %v1220 = vunpack.c.l.b16 %v1083
        %v1221 = vunpack.c.h.b16 %v1083
        %v1222 = vunpack.c.l.b16 %v1084
        %v1223 = vunpack.c.h.b16 %v1084
        %v1224 = vunpack.c.l.b16 %v1085
        %v1225 = vunpack.c.h.b16 %v1085
        %v1226 = vunpack.c.l.b16 %v1086
        %v1227 = vunpack.c.h.b16 %v1086
        %v1228 = vunpack.c.l.b16 %v1087
        %v1229 = vunpack.c.h.b16 %v1087
        %v1230 = vunpack.c.l.b16 %v1088
        %v1231 = vunpack.c.h.b16 %v1088
        %v1232 = vunpack.c.l.b16 %v1089
        %v1233 = vunpack.c.h.b16 %v1089
        %v1234 = vunpack.c.l.b16 %v1090
        %v1235 = vunpack.c.h.b16 %v1090
        %v1236 = vunpack.c.l.b16 %v1091
        %v1237 = vunpack.c.h.b16 %v1091
        %v1238 = vunpack.c.l.b16 %v1092
        %v1239 = vunpack.c.h.b16 %v1092
        %v1240 = vunpack.c.l.b16 %v1093
        %v1241 = vunpack.c.h.b16 %v1093
        %v1242 = vunpack.c.l.b16 %v1094
        %v1243 = vunpack.c.h.b16 %v1094
        %v1244 = vunpack.c.l.b16 %v1095
        %v1245 = vunpack.c.h.b16 %v1095
        %v1246 = vunpack.c.l.b16 %v1096
        %v1247 = vunpack.c.h.b16 %v1096
        %v1248 = vunpack.c.l.b16 %v1097
        %v1249 = vunpack.c.h.b16 %v1097
        %v1250 = vunpack.c.l.b16 %v1098
        %v1251 = vunpack.c.h.b16 %v1098
        %v1252 = vunpack.c.l.b16 %v1099
        %v1253 = vunpack.c.h.b16 %v1099
        %v1254 = vunpack.c.l.b16 %v1100
        %v1255 = vunpack.c.h.b16 %v1100
        %v1256 = vunpack.c.l.b16 %v1101
        %v1257 = vunpack.c.h.b16 %v1101
        %v1258 = vunpack.c.l.b16 %v1102
        %v1259 = vunpack.c.h.b16 %v1102
        %v1260 = vunpack.c.l.b16 %v1103
        %v1261 = vunpack.c.h.b16 %v1103
        %v1262 = vpack.c.b16 %v1192, %v1190
        %v1263 = vpack.c.b16 %v1193, %v1191
        %v1264 = vpack.c.b16 %v1196, %v1194
        %v1265 = vpack.c.b16 %v1197, %v1195
        %v1266 = vpack.c.b16 %v1200, %v1198
        %v1267 = vpack.c.b16 %v1201, %v1199
        %v1268 = vpack.c.b16 %v1204, %v1202
        %v1269 = vpack.c.b16 %v1205, %v1203
        %v1270 = vpack.c.b16 %v1208, %v1206
        %v1271 = vpack.c.b16 %v1209, %v1207
        %v1272 = vpack.c.b16 %v1212, %v1210
        %v1273 = vpack.c.b16 %v1213, %v1211
        %v1274 = vpack.c.b16 %v1216, %v1214
        %v1275 = vpack.c.b16 %v1217, %v1215
        %v1276 = vpack.c.b16 %v1220, %v1218
        %v1277 = vpack.c.b16 %v1221, %v1219
        %v1278 = vpack.c.b16 %v1224, %v1222
        %v1279 = vpack.c.b16 %v1225, %v1223
        %v1280 = vpack.c.b16 %v1228, %v1226
        %v1281 = vpack.c.b16 %v1229, %v1227
        %v1282 = vpack.c.b16 %v1232, %v1230
        %v1283 = vpack.c.b16 %v1233, %v1231
        %v1284 = vpack.c.b16 %v1236, %v1234
        %v1285 = vpack.c.b16 %v1237, %v1235
        %v1286 = vpack.c.b16 %v1240, %v1238
        %v1287 = vpack.c.b16 %v1241, %v1239
        %v1288 = vpack.c.b16 %v1244, %v1242
        %v1289 = vpack.c.b16 %v1245, %v1243
        %v1290 = vpack.c.b16 %v1248, %v1246
        %v1291 = vpack.c.b16 %v1249, %v1247
        %v1292 = vpack.c.b16 %v1252, %v1250
        %v1293 = vpack.c.b16 %v1253, %v1251
        %v1294 = vpack.c.b16 %v1256, %v1254
        %v1295 = vpack.c.b16 %v1257, %v1255
        %v1296 = vpack.c.b16 %v1260, %v1258
        %v1297 = vpack.c.b16 %v1261, %v1259
        %vm1334 = vcmask 261120
        %v1336 = vsel %vm1334, %v1146, 0
        %v1339 = vsel %vm1334, %v1149, 0
        %1341 = vmatpush.bf16.msra.mxu0 %v1276
        %1342 = vmatpush.bf16.msra.mxu0 %v1274
        %1343 = vmatpush.bf16.msra.mxu0 %v1272
        %1344 = vmatpush.bf16.msra.mxu0 %v1270
        %1345 = vmatpush.bf16.msra.mxu0 %v1268
        %1346 = vmatpush.bf16.msra.mxu0 %v1266
        %1347 = vmatpush.bf16.msra.mxu0 %v1264
        %1348 = vmatpush.bf16.msra.mxu0 %v1262
        %1349 = vmatmul.bf16.gmra.mxu0 %v1144
        %v1350 = vpop.f32.mrf.mxu0
        %v1351 = vadd.f32 %v1107, %v1350
        %v1352 = vpop.f32.mrf.mxu0
        %v1353 = vadd.f32 %v1112, %v1352
        %1354 = vmatmul.bf16.gmra.mxu0 %v1147
        %v1355 = vpop.f32.mrf.mxu0
        %v1356 = vadd.f32 %v1117, %v1355
        %v1357 = vpop.f32.mrf.mxu0
        %v1358 = vadd.f32 %v1122, %v1357
        %1359 = vdwg.mxu0
        %1360 = vmatpush.bf16.msra.mxu0 %v1292
        %1361 = vmatpush.bf16.msra.mxu0 %v1290
        %1362 = vmatpush.bf16.msra.mxu0 %v1288
        %1363 = vmatpush.bf16.msra.mxu0 %v1286
        %1364 = vmatpush.bf16.msra.mxu0 %v1284
        %1365 = vmatpush.bf16.msra.mxu0 %v1282
        %1366 = vmatpush.bf16.msra.mxu0 %v1280
        %1367 = vmatpush.bf16.msra.mxu0 %v1278
        %1368 = vmatmul.bf16.gmra.mxu0 %v1145
        %v1369 = vpop.f32.mrf.mxu0
        %v1370 = vadd.f32 %v1351, %v1369
        %v1371 = vpop.f32.mrf.mxu0
        %v1372 = vadd.f32 %v1353, %v1371
        %1373 = vmatmul.bf16.gmra.mxu0 %v1148
        %v1374 = vpop.f32.mrf.mxu0
        %v1375 = vadd.f32 %v1356, %v1374
        %v1376 = vpop.f32.mrf.mxu0
        %v1377 = vadd.f32 %v1358, %v1376
        %1378 = vdwg.mxu0
        %1379 = vmatpush.bf16.msra.mxu0 0
        %1380 = vmatpush.bf16.msra.mxu0 0
        %1381 = vmatpush.bf16.msra.mxu0 0
        %1382 = vmatpush.bf16.msra.mxu0 0
        %1383 = vmatpush.bf16.msra.mxu0 0
        %1384 = vmatpush.bf16.msra.mxu0 0
        %1385 = vmatpush.bf16.msra.mxu0 %v1296
        %1386 = vmatpush.bf16.msra.mxu0 %v1294
        %1387 = vmatmul.bf16.gmra.mxu0 %v1336
        %v1388 = vpop.f32.mrf.mxu0
        %v1389 = vadd.f32 %v1370, %v1388
        %v1390 = vpop.f32.mrf.mxu0
        %v1391 = vadd.f32 %v1372, %v1390
        %1392 = vmatmul.bf16.gmra.mxu0 %v1339
        %v1393 = vpop.f32.mrf.mxu0
        %v1394 = vadd.f32 %v1375, %v1393
        %v1395 = vpop.f32.mrf.mxu0
        %v1396 = vadd.f32 %v1377, %v1395
        %1397 = vdwg.mxu0
        %1398 = vmatpush.bf16.msra.mxu0 %v1277
        %1399 = vmatpush.bf16.msra.mxu0 %v1275
        %1400 = vmatpush.bf16.msra.mxu0 %v1273
        %1401 = vmatpush.bf16.msra.mxu0 %v1271
        %1402 = vmatpush.bf16.msra.mxu0 %v1269
        %1403 = vmatpush.bf16.msra.mxu0 %v1267
        %1404 = vmatpush.bf16.msra.mxu0 %v1265
        %1405 = vmatpush.bf16.msra.mxu0 %v1263
        %1406 = vmatmul.bf16.gmra.mxu0 %v1144
        %v1407 = vpop.f32.mrf.mxu0
        %v1408 = vadd.f32 %v1107, %v1407
        %v1409 = vpop.f32.mrf.mxu0
        %v1410 = vadd.f32 %v1112, %v1409
        %1411 = vmatmul.bf16.gmra.mxu0 %v1147
        %v1412 = vpop.f32.mrf.mxu0
        %v1413 = vadd.f32 %v1117, %v1412
        %v1414 = vpop.f32.mrf.mxu0
        %v1415 = vadd.f32 %v1122, %v1414
        %1416 = vdwg.mxu0
        %1417 = vmatpush.bf16.msra.mxu0 %v1293
        %1418 = vmatpush.bf16.msra.mxu0 %v1291
        %1419 = vmatpush.bf16.msra.mxu0 %v1289
        %1420 = vmatpush.bf16.msra.mxu0 %v1287
        %1421 = vmatpush.bf16.msra.mxu0 %v1285
        %1422 = vmatpush.bf16.msra.mxu0 %v1283
        %1423 = vmatpush.bf16.msra.mxu0 %v1281
        %1424 = vmatpush.bf16.msra.mxu0 %v1279
        %1425 = vmatmul.bf16.gmra.mxu0 %v1145
        %v1426 = vpop.f32.mrf.mxu0
        %v1427 = vadd.f32 %v1408, %v1426
        %v1428 = vpop.f32.mrf.mxu0
        %v1429 = vadd.f32 %v1410, %v1428
        %1430 = vmatmul.bf16.gmra.mxu0 %v1148
        %v1431 = vpop.f32.mrf.mxu0
        %v1432 = vadd.f32 %v1413, %v1431
        %v1433 = vpop.f32.mrf.mxu0
        %v1434 = vadd.f32 %v1415, %v1433
        %1435 = vdwg.mxu0
        %1436 = vmatpush.bf16.msra.mxu0 0
        %1437 = vmatpush.bf16.msra.mxu0 0
        %1438 = vmatpush.bf16.msra.mxu0 0
        %1439 = vmatpush.bf16.msra.mxu0 0
        %1440 = vmatpush.bf16.msra.mxu0 0
        %1441 = vmatpush.bf16.msra.mxu0 0
        %1442 = vmatpush.bf16.msra.mxu0 %v1297
        %1443 = vmatpush.bf16.msra.mxu0 %v1295
        %1444 = vmatmul.bf16.gmra.mxu0 %v1336
        %v1445 = vpop.f32.mrf.mxu0
        %v1446 = vadd.f32 %v1427, %v1445
        %v1447 = vpop.f32.mrf.mxu0
        %v1448 = vadd.f32 %v1429, %v1447
        %1449 = vmatmul.bf16.gmra.mxu0 %v1339
        %v1450 = vpop.f32.mrf.mxu0
        %v1451 = vadd.f32 %v1432, %v1450
        %v1452 = vpop.f32.mrf.mxu0
        %v1453 = vadd.f32 %v1434, %v1452
        %1454 = vdwg.mxu0
        %vm1455 = vcmp.ge.f32.partialorder %v1389, 0.0
        %vm1456 = vcmp.ge.f32.partialorder %v1446, 0.0
        %vm1457 = vcmp.ge.f32.partialorder %v1391, 0.0
        %vm1458 = vcmp.ge.f32.partialorder %v1448, 0.0
        %vm1459 = vcmp.ge.f32.partialorder %v1394, 0.0
        %vm1460 = vcmp.ge.f32.partialorder %v1451, 0.0
        %vm1461 = vcmp.ge.f32.partialorder %v1396, 0.0
        %vm1462 = vcmp.ge.f32.partialorder %v1453, 0.0
        %v1463 = vmul.f32 %v1389, 0.1
        %v1464 = vmul.f32 %v1446, 0.1
        %v1465 = vmul.f32 %v1391, 0.1
        %v1466 = vmul.f32 %v1448, 0.1
        %v1467 = vmul.f32 %v1394, 0.1
        %v1468 = vmul.f32 %v1451, 0.1
        %v1469 = vmul.f32 %v1396, 0.1
        %v1470 = vmul.f32 %v1453, 0.1
        %v1471 = vsel %vm1455, %v1389, %v1463
        %v1472 = vsel %vm1456, %v1446, %v1464
        %v1473 = vsel %vm1457, %v1391, %v1465
        %v1474 = vsel %vm1458, %v1448, %v1466
        %v1475 = vsel %vm1459, %v1394, %v1467
        %v1476 = vsel %vm1460, %v1451, %v1468
        %v1477 = vsel %vm1461, %v1396, %v1469
        %v1478 = vsel %vm1462, %v1453, %v1470
        %1479 = vst [vmem:[%s290] sm:$0xff] %v1471
        %1480 = vst [vmem:[%s290 + $0x8] sm:$0xff] %v1472
        %1481 = vst [vmem:[%s290 + $0x10] sm:$0xff] %v1473
        %1482 = vst [vmem:[%s290 + $0x18] sm:$0xff] %v1474
        %1483 = vst [vmem:[%s290 + $0x20] sm:$0xff] %v1475
        %1484 = vst [vmem:[%s290 + $0x28] sm:$0xff] %v1476
        %1485 = vst [vmem:[%s290 + $0x30] sm:$0xff] %v1477
        %1486 = vst [vmem:[%s290 + $0x38] sm:$0xff] %v1478
      $region52: #{conv_residual_blocks_forward.1} parent=47 // pred_fallthru
        _
      %p1487 = scmp.gt.s32.totalorder %s23, 0
      // Predicated region
      $region53: #{conv_residual_blocks_forward.1} parent=47 // pred_check
        %p1488 = pneg %p1487
      $region54: #{conv_residual_blocks_forward.1} parent=47 // pred_check_branch
        %1490 = sbr.rel (%p1488) target = $region56
      $region55: #{conv_residual_blocks_forward.1} parent=47 // pred_region
        %s1491 = ssub.s32 %s23, 1
        %v1492 = vld [vmem:[%s290] sm:$0xff]
        %v1493 = vld [vmem:[%s290 + $0x8] sm:$0xff]
        %v1494 = vld [vmem:[%s290 + $0x10] sm:$0xff]
        %v1495 = vld [vmem:[%s290 + $0x18] sm:$0xff]
        %v1496 = vld [vmem:[%s290 + $0x20] sm:$0xff]
        %v1497 = vld [vmem:[%s290 + $0x28] sm:$0xff]
        %v1498 = vld [vmem:[%s290 + $0x30] sm:$0xff]
        %v1499 = vld [vmem:[%s290 + $0x38] sm:$0xff]
        %v1500 = vpack.c.bf16 %v1493, %v1492
        %v1501 = vpack.c.bf16 %v1495, %v1494
        %v1502 = vpack.c.bf16 %v1497, %v1496
        %v1503 = vpack.c.bf16 %v1499, %v1498
        %1504 = vst [vmem:[#allocation2 + $0x4] sm:$0xff] %v1500
        %1505 = vst [vmem:[#allocation2 + $0x14] sm:$0xff] %v1501
        %1506 = vst [vmem:[#allocation2 + $0x24] sm:$0xff] %v1502
        %1507 = vst [vmem:[#allocation2 + $0x34] sm:$0xff] %v1503
        %v1508 = vld [vmem:[#allocation2] sm:$0xff]
        %v1509 = vld [vmem:[#allocation2 + $0x8] sm:$0xf]
        %v1510 = vld [vmem:[#allocation2 + $0x10] sm:$0xff]
        %v1511 = vld [vmem:[#allocation2 + $0x18] sm:$0xf]
        %v1512 = vld [vmem:[#allocation2 + $0x20] sm:$0xff]
        %v1513 = vld [vmem:[#allocation2 + $0x28] sm:$0xf]
        %v1514 = vld [vmem:[#allocation2 + $0x30] sm:$0xff]
        %v1515 = vld [vmem:[#allocation2 + $0x38] sm:$0xf]
        %vm1516 = vmand %vm299, %vm303
        %vm1517 = vmand %vm300, %vm304
        %v1518 = vsel %vm1516, 1, 0
        %v1519 = vsel %vm1517, 1, 0
        %vm1520 = vcmp.eq.s32.totalorder %v1518, 1
        %vm1521 = vcmp.eq.s32.totalorder %v1519, 1
        %vm1522 = vmpackc.low %vm1521, %vm1520
        %v1523 = vsel %vm1522, 65537, 0
        %1524 = vrot.lane.b32.xlu0 %v1523, 111
        %v1525 = vpop.permute.xlu0 %1524
        %v1526 = vrot.slane %v1525, 4
        %vm1527 = vcmask 908288
        %v1528 = vsel %vm1527, %v1526, %v1525
        %v1529 = vunpack.c.l.b16 %v1528
        %v1530 = vunpack.c.h.b16 %v1528
        %v1531 = vunpack.c.l.b16 0
        %v1532 = vunpack.c.h.b16 0
        %vm1533 = vcmp.ne.s32.totalorder %v1529, %v1531
        %vm1534 = vcmp.ne.s32.totalorder %v1530, %v1532
        %vm1535 = vmpackc.low %vm1534, %vm1533
        %v1536 = vunpack.c.l.b16 %v1526
        %v1537 = vunpack.c.h.b16 %v1526
        %v1538 = vunpack.c.l.b16 0
        %v1539 = vunpack.c.h.b16 0
        %vm1540 = vcmp.ne.s32.totalorder %v1536, %v1538
        %vm1541 = vcmp.ne.s32.totalorder %v1537, %v1539
        %vm1542 = vmpackc.low %vm1541, %vm1540
        %v1543 = vsel %vm1535, %v1508, 0
        %v1544 = vsel %vm1542, %v1509, 0
        %v1545 = vsel %vm1535, %v1510, 0
        %v1546 = vsel %vm1542, %v1511, 0
        %v1547 = vsel %vm1535, %v1512, 0
        %v1548 = vsel %vm1542, %v1513, 0
        %v1549 = vsel %vm1535, %v1514, 0
        %v1550 = vsel %vm1542, %v1515, 0
        %1559 = vrot.lane.b32.xlu0 %v1543, 17
        %v1560 = vpop.permute.xlu0 %1559
        %1561 = vrot.lane.b32.xlu0 %v1544, 17
        %v1562 = vpop.permute.xlu0 %1561
        %1563 = vrot.lane.b32.xlu0 %v1545, 17
        %v1564 = vpop.permute.xlu0 %1563
        %1565 = vrot.lane.b32.xlu0 %v1546, 17
        %v1566 = vpop.permute.xlu0 %1565
        %1567 = vrot.lane.b32.xlu0 %v1547, 17
        %v1568 = vpop.permute.xlu0 %1567
        %1569 = vrot.lane.b32.xlu0 %v1548, 17
        %v1570 = vpop.permute.xlu0 %1569
        %1571 = vrot.lane.b32.xlu0 %v1549, 17
        %v1572 = vpop.permute.xlu0 %1571
        %1573 = vrot.lane.b32.xlu0 %v1550, 17
        %v1574 = vpop.permute.xlu0 %1573
        %v1575 = vrot.slane %v1560, 4
        %v1576 = vrot.slane %v1562, 4
        %v1577 = vrot.slane %v1564, 4
        %v1578 = vrot.slane %v1566, 4
        %v1579 = vrot.slane %v1568, 4
        %v1580 = vrot.slane %v1570, 4
        %v1581 = vrot.slane %v1572, 4
        %v1582 = vrot.slane %v1574, 4
        %vm1583 = vcmask 1043456
        %v1584 = vsel %vm1583, %v1575, %v1576
        %vm1585 = vcmask 138240
        %v1586 = vsel %vm1585, %v1560, %v1584
        %v1587 = vsel %vm1583, %v1577, %v1578
        %v1588 = vsel %vm1585, %v1564, %v1587
        %v1589 = vsel %vm1583, %v1579, %v1580
        %v1590 = vsel %vm1585, %v1568, %v1589
        %v1591 = vsel %vm1583, %v1581, %v1582
        %v1592 = vsel %vm1585, %v1572, %v1591
        %1597 = vst [vmem:[#allocation3] sm:$0xff] %v1586
        %1598 = vst [vmem:[#allocation3 + $0x8] sm:$0xff] %v1588
        %1599 = vst [vmem:[#allocation3 + $0x10] sm:$0xff] %v1590
        %1600 = vst [vmem:[#allocation3 + $0x18] sm:$0xff] %v1592
        %v1601 = vld [vmem:[#allocation2] sm:$0xff]
        %v1602 = vld [vmem:[#allocation2 + $0x8] sm:$0xf]
        %v1603 = vld [vmem:[#allocation2 + $0x10] sm:$0xff]
        %v1604 = vld [vmem:[#allocation2 + $0x18] sm:$0xf]
        %v1605 = vld [vmem:[#allocation2 + $0x20] sm:$0xff]
        %v1606 = vld [vmem:[#allocation2 + $0x28] sm:$0xf]
        %v1607 = vld [vmem:[#allocation2 + $0x30] sm:$0xff]
        %v1608 = vld [vmem:[#allocation2 + $0x38] sm:$0xf]
        %v1609 = vsel %vm299, 1, 0
        %v1610 = vsel %vm300, 1, 0
        %vm1611 = vcmp.eq.s32.totalorder %v1609, 1
        %vm1612 = vcmp.eq.s32.totalorder %v1610, 1
        %vm1613 = vmpackc.low %vm1612, %vm1611
        %v1614 = vsel %vm1613, 65537, 0
        %1615 = vrot.lane.b32.xlu0 %v1614, 112
        %v1616 = vpop.permute.xlu0 %1615
        %v1617 = vrot.slane %v1616, 4
        %vm1618 = vcmask 916480
        %v1619 = vsel %vm1618, %v1617, %v1616
        %v1620 = vunpack.c.l.b16 %v1619
        %v1621 = vunpack.c.h.b16 %v1619
        %v1622 = vunpack.c.l.b16 0
        %v1623 = vunpack.c.h.b16 0
        %vm1624 = vcmp.ne.s32.totalorder %v1620, %v1622
        %vm1625 = vcmp.ne.s32.totalorder %v1621, %v1623
        %vm1626 = vmpackc.low %vm1625, %vm1624
        %v1627 = vunpack.c.l.b16 %v1617
        %v1628 = vunpack.c.h.b16 %v1617
        %v1629 = vunpack.c.l.b16 0
        %v1630 = vunpack.c.h.b16 0
        %vm1631 = vcmp.ne.s32.totalorder %v1627, %v1629
        %vm1632 = vcmp.ne.s32.totalorder %v1628, %v1630
        %vm1633 = vmpackc.low %vm1632, %vm1631
        %v1634 = vsel %vm1626, %v1601, 0
        %v1635 = vsel %vm1633, %v1602, 0
        %v1636 = vsel %vm1626, %v1603, 0
        %v1637 = vsel %vm1633, %v1604, 0
        %v1638 = vsel %vm1626, %v1605, 0
        %v1639 = vsel %vm1633, %v1606, 0
        %v1640 = vsel %vm1626, %v1607, 0
        %v1641 = vsel %vm1633, %v1608, 0
        %1650 = vrot.lane.b32.xlu0 %v1634, 16
        %v1651 = vpop.permute.xlu0 %1650
        %1652 = vrot.lane.b32.xlu0 %v1635, 16
        %v1653 = vpop.permute.xlu0 %1652
        %1654 = vrot.lane.b32.xlu0 %v1636, 16
        %v1655 = vpop.permute.xlu0 %1654
        %1656 = vrot.lane.b32.xlu0 %v1637, 16
        %v1657 = vpop.permute.xlu0 %1656
        %1658 = vrot.lane.b32.xlu0 %v1638, 16
        %v1659 = vpop.permute.xlu0 %1658
        %1660 = vrot.lane.b32.xlu0 %v1639, 16
        %v1661 = vpop.permute.xlu0 %1660
        %1662 = vrot.lane.b32.xlu0 %v1640, 16
        %v1663 = vpop.permute.xlu0 %1662
        %1664 = vrot.lane.b32.xlu0 %v1641, 16
        %v1665 = vpop.permute.xlu0 %1664
        %v1666 = vrot.slane %v1651, 4
        %v1667 = vrot.slane %v1653, 4
        %v1668 = vrot.slane %v1655, 4
        %v1669 = vrot.slane %v1657, 4
        %v1670 = vrot.slane %v1659, 4
        %v1671 = vrot.slane %v1661, 4
        %v1672 = vrot.slane %v1663, 4
        %v1673 = vrot.slane %v1665, 4
        %v1674 = vsel %vm1583, %v1666, %v1667
        %vm1675 = vcmask 130048
        %v1676 = vsel %vm1675, %v1651, %v1674
        %v1677 = vsel %vm1583, %v1668, %v1669
        %v1678 = vsel %vm1675, %v1655, %v1677
        %v1679 = vsel %vm1583, %v1670, %v1671
        %v1680 = vsel %vm1675, %v1659, %v1679
        %v1681 = vsel %vm1583, %v1672, %v1673
        %v1682 = vsel %vm1675, %v1663, %v1681
        %1687 = vst [vmem:[#allocation3 + $0x20] sm:$0xff] %v1676
        %1688 = vst [vmem:[#allocation3 + $0x28] sm:$0xff] %v1678
        %1689 = vst [vmem:[#allocation3 + $0x30] sm:$0xff] %v1680
        %1690 = vst [vmem:[#allocation3 + $0x38] sm:$0xff] %v1682
        %v1691 = vld [vmem:[#allocation2] sm:$0xff]
        %v1692 = vld [vmem:[#allocation2 + $0x8] sm:$0xf]
        %v1693 = vld [vmem:[#allocation2 + $0x10] sm:$0xff]
        %v1694 = vld [vmem:[#allocation2 + $0x18] sm:$0xf]
        %v1695 = vld [vmem:[#allocation2 + $0x20] sm:$0xff]
        %v1696 = vld [vmem:[#allocation2 + $0x28] sm:$0xf]
        %v1697 = vld [vmem:[#allocation2 + $0x30] sm:$0xff]
        %v1698 = vld [vmem:[#allocation2 + $0x38] sm:$0xf]
        %vm1699 = vmand %vm299, %vm305
        %vm1700 = vmand %vm300, %vm306
        %v1701 = vsel %vm1699, 1, 0
        %v1702 = vsel %vm1700, 1, 0
        %vm1703 = vcmp.eq.s32.totalorder %v1701, 1
        %vm1704 = vcmp.eq.s32.totalorder %v1702, 1
        %vm1705 = vmpackc.low %vm1704, %vm1703
        %v1706 = vsel %vm1705, 65537, 0
        %1707 = vrot.lane.b32.xlu0 %v1706, 113
        %v1708 = vpop.permute.xlu0 %1707
        %v1709 = vrot.slane %v1708, 4
        %vm1710 = vcmask 924672
        %v1711 = vsel %vm1710, %v1709, %v1708
        %v1712 = vunpack.c.l.b16 %v1711
        %v1713 = vunpack.c.h.b16 %v1711
        %v1714 = vunpack.c.l.b16 0
        %v1715 = vunpack.c.h.b16 0
        %vm1716 = vcmp.ne.s32.totalorder %v1712, %v1714
        %vm1717 = vcmp.ne.s32.totalorder %v1713, %v1715
        %vm1718 = vmpackc.low %vm1717, %vm1716
        %v1719 = vunpack.c.l.b16 %v1709
        %v1720 = vunpack.c.h.b16 %v1709
        %v1721 = vunpack.c.l.b16 0
        %v1722 = vunpack.c.h.b16 0
        %vm1723 = vcmp.ne.s32.totalorder %v1719, %v1721
        %vm1724 = vcmp.ne.s32.totalorder %v1720, %v1722
        %vm1725 = vmpackc.low %vm1724, %vm1723
        %v1726 = vsel %vm1718, %v1691, 0
        %v1727 = vsel %vm1725, %v1692, 0
        %v1728 = vsel %vm1718, %v1693, 0
        %v1729 = vsel %vm1725, %v1694, 0
        %v1730 = vsel %vm1718, %v1695, 0
        %v1731 = vsel %vm1725, %v1696, 0
        %v1732 = vsel %vm1718, %v1697, 0
        %v1733 = vsel %vm1725, %v1698, 0
        %1742 = vrot.lane.b32.xlu0 %v1726, 15
        %v1743 = vpop.permute.xlu0 %1742
        %1744 = vrot.lane.b32.xlu0 %v1727, 15
        %v1745 = vpop.permute.xlu0 %1744
        %1746 = vrot.lane.b32.xlu0 %v1728, 15
        %v1747 = vpop.permute.xlu0 %1746
        %1748 = vrot.lane.b32.xlu0 %v1729, 15
        %v1749 = vpop.permute.xlu0 %1748
        %1750 = vrot.lane.b32.xlu0 %v1730, 15
        %v1751 = vpop.permute.xlu0 %1750
        %1752 = vrot.lane.b32.xlu0 %v1731, 15
        %v1753 = vpop.permute.xlu0 %1752
        %1754 = vrot.lane.b32.xlu0 %v1732, 15
        %v1755 = vpop.permute.xlu0 %1754
        %1756 = vrot.lane.b32.xlu0 %v1733, 15
        %v1757 = vpop.permute.xlu0 %1756
        %v1758 = vrot.slane %v1743, 4
        %v1759 = vrot.slane %v1745, 4
        %v1760 = vrot.slane %v1747, 4
        %v1761 = vrot.slane %v1749, 4
        %v1762 = vrot.slane %v1751, 4
        %v1763 = vrot.slane %v1753, 4
        %v1764 = vrot.slane %v1755, 4
        %v1765 = vrot.slane %v1757, 4
        %v1766 = vsel %vm1583, %v1758, %v1759
        %vm1767 = vcmask 121856
        %v1768 = vsel %vm1767, %v1743, %v1766
        %v1769 = vsel %vm1583, %v1760, %v1761
        %v1770 = vsel %vm1767, %v1747, %v1769
        %v1771 = vsel %vm1583, %v1762, %v1763
        %v1772 = vsel %vm1767, %v1751, %v1771
        %v1773 = vsel %vm1583, %v1764, %v1765
        %v1774 = vsel %vm1767, %v1755, %v1773
        %1779 = vst [vmem:[#allocation3 + $0x40] sm:$0xff] %v1768
        %1780 = vst [vmem:[#allocation3 + $0x48] sm:$0xff] %v1770
        %1781 = vst [vmem:[#allocation3 + $0x50] sm:$0xff] %v1772
        %1782 = vst [vmem:[#allocation3 + $0x58] sm:$0xff] %v1774
        %v1783 = vld [vmem:[#allocation2] sm:$0xff]
        %v1784 = vld [vmem:[#allocation2 + $0x8] sm:$0xf]
        %v1785 = vld [vmem:[#allocation2 + $0x10] sm:$0xff]
        %v1786 = vld [vmem:[#allocation2 + $0x18] sm:$0xf]
        %v1787 = vld [vmem:[#allocation2 + $0x20] sm:$0xff]
        %v1788 = vld [vmem:[#allocation2 + $0x28] sm:$0xf]
        %v1789 = vld [vmem:[#allocation2 + $0x30] sm:$0xff]
        %v1790 = vld [vmem:[#allocation2 + $0x38] sm:$0xf]
        %v1791 = vsel %vm303, 1, 0
        %v1792 = vsel %vm304, 1, 0
        %vm1793 = vcmp.eq.s32.totalorder %v1791, 1
        %vm1794 = vcmp.eq.s32.totalorder %v1792, 1
        %vm1795 = vmpackc.low %vm1794, %vm1793
        %v1796 = vsel %vm1795, 65537, 0
        %1797 = vrot.lane.b32.xlu0 %v1796, 127
        %v1798 = vpop.permute.xlu0 %1797
        %v1799 = vrot.slane %v1798, 4
        %vm1800 = vcmask 1039360
        %v1801 = vsel %vm1800, %v1799, %v1798
        %v1802 = vunpack.c.l.b16 %v1801
        %v1803 = vunpack.c.h.b16 %v1801
        %v1804 = vunpack.c.l.b16 0
        %v1805 = vunpack.c.h.b16 0
        %vm1806 = vcmp.ne.s32.totalorder %v1802, %v1804
        %vm1807 = vcmp.ne.s32.totalorder %v1803, %v1805
        %vm1808 = vmpackc.low %vm1807, %vm1806
        %v1809 = vunpack.c.l.b16 %v1799
        %v1810 = vunpack.c.h.b16 %v1799
        %v1811 = vunpack.c.l.b16 0
        %v1812 = vunpack.c.h.b16 0
        %vm1813 = vcmp.ne.s32.totalorder %v1809, %v1811
        %vm1814 = vcmp.ne.s32.totalorder %v1810, %v1812
        %vm1815 = vmpackc.low %vm1814, %vm1813
        %v1816 = vsel %vm1808, %v1783, 0
        %v1817 = vsel %vm1815, %v1784, 0
        %v1818 = vsel %vm1808, %v1785, 0
        %v1819 = vsel %vm1815, %v1786, 0
        %v1820 = vsel %vm1808, %v1787, 0
        %v1821 = vsel %vm1815, %v1788, 0
        %v1822 = vsel %vm1808, %v1789, 0
        %v1823 = vsel %vm1815, %v1790, 0
        %1832 = vrot.lane.b32.xlu0 %v1816, 1
        %v1833 = vpop.permute.xlu0 %1832
        %1834 = vrot.lane.b32.xlu0 %v1817, 1
        %v1835 = vpop.permute.xlu0 %1834
        %1836 = vrot.lane.b32.xlu0 %v1818, 1
        %v1837 = vpop.permute.xlu0 %1836
        %1838 = vrot.lane.b32.xlu0 %v1819, 1
        %v1839 = vpop.permute.xlu0 %1838
        %1840 = vrot.lane.b32.xlu0 %v1820, 1
        %v1841 = vpop.permute.xlu0 %1840
        %1842 = vrot.lane.b32.xlu0 %v1821, 1
        %v1843 = vpop.permute.xlu0 %1842
        %1844 = vrot.lane.b32.xlu0 %v1822, 1
        %v1845 = vpop.permute.xlu0 %1844
        %1846 = vrot.lane.b32.xlu0 %v1823, 1
        %v1847 = vpop.permute.xlu0 %1846
        %v1848 = vrot.slane %v1833, 4
        %v1849 = vrot.slane %v1835, 4
        %v1850 = vrot.slane %v1837, 4
        %v1851 = vrot.slane %v1839, 4
        %v1852 = vrot.slane %v1841, 4
        %v1853 = vrot.slane %v1843, 4
        %v1854 = vrot.slane %v1845, 4
        %v1855 = vrot.slane %v1847, 4
        %v1856 = vsel %vm1583, %v1848, %v1849
        %vm1857 = vcmask 7168
        %v1858 = vsel %vm1857, %v1833, %v1856
        %v1859 = vsel %vm1583, %v1850, %v1851
        %v1860 = vsel %vm1857, %v1837, %v1859
        %v1861 = vsel %vm1583, %v1852, %v1853
        %v1862 = vsel %vm1857, %v1841, %v1861
        %v1863 = vsel %vm1583, %v1854, %v1855
        %v1864 = vsel %vm1857, %v1845, %v1863
        %1869 = vst [vmem:[#allocation3 + $0x60] sm:$0xff] %v1858
        %1870 = vst [vmem:[#allocation3 + $0x68] sm:$0xff] %v1860
        %1871 = vst [vmem:[#allocation3 + $0x70] sm:$0xff] %v1862
        %1872 = vst [vmem:[#allocation3 + $0x78] sm:$0xff] %v1864
        %v1873 = vld [vmem:[#allocation2 + $0x4] sm:$0xff]
        %v1874 = vld [vmem:[#allocation2 + $0x14] sm:$0xff]
        %v1875 = vld [vmem:[#allocation2 + $0x24] sm:$0xff]
        %v1876 = vld [vmem:[#allocation2 + $0x34] sm:$0xff]
        %1877 = vst [vmem:[#allocation3 + $0x80] sm:$0xff] %v1873
        %1878 = vst [vmem:[#allocation3 + $0x88] sm:$0xff] %v1874
        %1879 = vst [vmem:[#allocation3 + $0x90] sm:$0xff] %v1875
        %1880 = vst [vmem:[#allocation3 + $0x98] sm:$0xff] %v1876
        %v1881 = vld [vmem:[#allocation2 + $0x4] sm:$0xff]
        %v1882 = vld [vmem:[#allocation2 + $0xc] sm:$0xf]
        %v1883 = vld [vmem:[#allocation2 + $0x14] sm:$0xff]
        %v1884 = vld [vmem:[#allocation2 + $0x1c] sm:$0xf]
        %v1885 = vld [vmem:[#allocation2 + $0x24] sm:$0xff]
        %v1886 = vld [vmem:[#allocation2 + $0x2c] sm:$0xf]
        %v1887 = vld [vmem:[#allocation2 + $0x34] sm:$0xff]
        %v1888 = vld [vmem:[#allocation2 + $0x3c] sm:$0xf]
        %v1889 = vsel %vm305, 1, 0
        %v1890 = vsel %vm306, 1, 0
        %vm1891 = vcmp.eq.s32.totalorder %v1889, 1
        %vm1892 = vcmp.eq.s32.totalorder %v1890, 1
        %vm1893 = vmpackc.low %vm1892, %vm1891
        %v1894 = vsel %vm1893, 65537, 0
        %1895 = vrot.lane.b32.xlu0 %v1894, 1
        %v1896 = vpop.permute.xlu0 %1895
        %v1897 = vrot.slane %v1896, 4
        %v1898 = vsel %vm1857, %v1897, %v1896
        %v1899 = vunpack.c.l.b16 %v1898
        %v1900 = vunpack.c.h.b16 %v1898
        %v1901 = vunpack.c.l.b16 0
        %v1902 = vunpack.c.h.b16 0
        %vm1903 = vcmp.ne.s32.totalorder %v1899, %v1901
        %vm1904 = vcmp.ne.s32.totalorder %v1900, %v1902
        %vm1905 = vmpackc.low %vm1904, %vm1903
        %v1906 = vunpack.c.l.b16 %v1897
        %v1907 = vunpack.c.h.b16 %v1897
        %v1908 = vunpack.c.l.b16 0
        %v1909 = vunpack.c.h.b16 0
        %vm1910 = vcmp.ne.s32.totalorder %v1906, %v1908
        %vm1911 = vcmp.ne.s32.totalorder %v1907, %v1909
        %vm1912 = vmpackc.low %vm1911, %vm1910
        %v1913 = vsel %vm1905, %v1881, 0
        %v1914 = vsel %vm1912, %v1882, 0
        %v1915 = vsel %vm1905, %v1883, 0
        %v1916 = vsel %vm1912, %v1884, 0
        %v1917 = vsel %vm1905, %v1885, 0
        %v1918 = vsel %vm1912, %v1886, 0
        %v1919 = vsel %vm1905, %v1887, 0
        %v1920 = vsel %vm1912, %v1888, 0
        %1929 = vrot.lane.b32.xlu0 %v1913, 127
        %v1930 = vpop.permute.xlu0 %1929
        %1931 = vrot.lane.b32.xlu0 %v1914, 127
        %v1932 = vpop.permute.xlu0 %1931
        %1933 = vrot.lane.b32.xlu0 %v1915, 127
        %v1934 = vpop.permute.xlu0 %1933
        %1935 = vrot.lane.b32.xlu0 %v1916, 127
        %v1936 = vpop.permute.xlu0 %1935
        %1937 = vrot.lane.b32.xlu0 %v1917, 127
        %v1938 = vpop.permute.xlu0 %1937
        %1939 = vrot.lane.b32.xlu0 %v1918, 127
        %v1940 = vpop.permute.xlu0 %1939
        %1941 = vrot.lane.b32.xlu0 %v1919, 127
        %v1942 = vpop.permute.xlu0 %1941
        %1943 = vrot.lane.b32.xlu0 %v1920, 127
        %v1944 = vpop.permute.xlu0 %1943
        %v1945 = vrot.slane %v1930, 4
        %v1946 = vrot.slane %v1932, 4
        %v1947 = vrot.slane %v1934, 4
        %v1948 = vrot.slane %v1936, 4
        %v1949 = vrot.slane %v1938, 4
        %v1950 = vrot.slane %v1940, 4
        %v1951 = vrot.slane %v1942, 4
        %v1952 = vrot.slane %v1944, 4
        %v1953 = vsel %vm1583, %v1945, %v1946
        %v1954 = vsel %vm1800, %v1930, %v1953
        %v1955 = vsel %vm1583, %v1947, %v1948
        %v1956 = vsel %vm1800, %v1934, %v1955
        %v1957 = vsel %vm1583, %v1949, %v1950
        %v1958 = vsel %vm1800, %v1938, %v1957
        %v1959 = vsel %vm1583, %v1951, %v1952
        %v1960 = vsel %vm1800, %v1942, %v1959
        %1965 = vst [vmem:[#allocation3 + $0xa0] sm:$0xff] %v1954
        %1966 = vst [vmem:[#allocation3 + $0xa8] sm:$0xff] %v1956
        %1967 = vst [vmem:[#allocation3 + $0xb0] sm:$0xff] %v1958
        %1968 = vst [vmem:[#allocation3 + $0xb8] sm:$0xff] %v1960
        %v1969 = vld [vmem:[#allocation2 + $0x4] sm:$0xff]
        %v1970 = vld [vmem:[#allocation2 + $0xc] sm:$0xf]
        %v1971 = vld [vmem:[#allocation2 + $0x14] sm:$0xff]
        %v1972 = vld [vmem:[#allocation2 + $0x1c] sm:$0xf]
        %v1973 = vld [vmem:[#allocation2 + $0x24] sm:$0xff]
        %v1974 = vld [vmem:[#allocation2 + $0x2c] sm:$0xf]
        %v1975 = vld [vmem:[#allocation2 + $0x34] sm:$0xff]
        %v1976 = vld [vmem:[#allocation2 + $0x3c] sm:$0xf]
        %vm1977 = vmand %vm301, %vm303
        %vm1978 = vmand %vm302, %vm304
        %v1979 = vsel %vm1977, 1, 0
        %v1980 = vsel %vm1978, 1, 0
        %vm1981 = vcmp.eq.s32.totalorder %v1979, 1
        %vm1982 = vcmp.eq.s32.totalorder %v1980, 1
        %vm1983 = vmpackc.low %vm1982, %vm1981
        %v1984 = vsel %vm1983, 65537, 0
        %1985 = vrot.lane.b32.xlu0 %v1984, 15
        %v1986 = vpop.permute.xlu0 %1985
        %v1987 = vrot.slane %v1986, 4
        %v1988 = vsel %vm1767, %v1987, %v1986
        %v1989 = vunpack.c.l.b16 %v1988
        %v1990 = vunpack.c.h.b16 %v1988
        %v1991 = vunpack.c.l.b16 0
        %v1992 = vunpack.c.h.b16 0
        %vm1993 = vcmp.ne.s32.totalorder %v1989, %v1991
        %vm1994 = vcmp.ne.s32.totalorder %v1990, %v1992
        %vm1995 = vmpackc.low %vm1994, %vm1993
        %v1996 = vunpack.c.l.b16 %v1987
        %v1997 = vunpack.c.h.b16 %v1987
        %v1998 = vunpack.c.l.b16 0
        %v1999 = vunpack.c.h.b16 0
        %vm2000 = vcmp.ne.s32.totalorder %v1996, %v1998
        %vm2001 = vcmp.ne.s32.totalorder %v1997, %v1999
        %vm2002 = vmpackc.low %vm2001, %vm2000
        %v2003 = vsel %vm1995, %v1969, 0
        %v2004 = vsel %vm2002, %v1970, 0
        %v2005 = vsel %vm1995, %v1971, 0
        %v2006 = vsel %vm2002, %v1972, 0
        %v2007 = vsel %vm1995, %v1973, 0
        %v2008 = vsel %vm2002, %v1974, 0
        %v2009 = vsel %vm1995, %v1975, 0
        %v2010 = vsel %vm2002, %v1976, 0
        %2019 = vrot.lane.b32.xlu0 %v2003, 113
        %v2020 = vpop.permute.xlu0 %2019
        %2021 = vrot.lane.b32.xlu0 %v2004, 113
        %v2022 = vpop.permute.xlu0 %2021
        %2023 = vrot.lane.b32.xlu0 %v2005, 113
        %v2024 = vpop.permute.xlu0 %2023
        %2025 = vrot.lane.b32.xlu0 %v2006, 113
        %v2026 = vpop.permute.xlu0 %2025
        %2027 = vrot.lane.b32.xlu0 %v2007, 113
        %v2028 = vpop.permute.xlu0 %2027
        %2029 = vrot.lane.b32.xlu0 %v2008, 113
        %v2030 = vpop.permute.xlu0 %2029
        %2031 = vrot.lane.b32.xlu0 %v2009, 113
        %v2032 = vpop.permute.xlu0 %2031
        %2033 = vrot.lane.b32.xlu0 %v2010, 113
        %v2034 = vpop.permute.xlu0 %2033
        %v2035 = vrot.slane %v2020, 4
        %v2036 = vrot.slane %v2022, 4
        %v2037 = vrot.slane %v2024, 4
        %v2038 = vrot.slane %v2026, 4
        %v2039 = vrot.slane %v2028, 4
        %v2040 = vrot.slane %v2030, 4
        %v2041 = vrot.slane %v2032, 4
        %v2042 = vrot.slane %v2034, 4
        %v2043 = vsel %vm1583, %v2035, %v2036
        %v2044 = vsel %vm1710, %v2020, %v2043
        %v2045 = vsel %vm1583, %v2037, %v2038
        %v2046 = vsel %vm1710, %v2024, %v2045
        %v2047 = vsel %vm1583, %v2039, %v2040
        %v2048 = vsel %vm1710, %v2028, %v2047
        %v2049 = vsel %vm1583, %v2041, %v2042
        %v2050 = vsel %vm1710, %v2032, %v2049
        %2055 = vst [vmem:[#allocation3 + $0xc0] sm:$0xff] %v2044
        %2056 = vst [vmem:[#allocation3 + $0xc8] sm:$0xff] %v2046
        %2057 = vst [vmem:[#allocation3 + $0xd0] sm:$0xff] %v2048
        %2058 = vst [vmem:[#allocation3 + $0xd8] sm:$0xff] %v2050
        %v2059 = vld [vmem:[#allocation2 + $0x4] sm:$0xff]
        %v2060 = vld [vmem:[#allocation2 + $0xc] sm:$0xf]
        %v2061 = vld [vmem:[#allocation2 + $0x14] sm:$0xff]
        %v2062 = vld [vmem:[#allocation2 + $0x1c] sm:$0xf]
        %v2063 = vld [vmem:[#allocation2 + $0x24] sm:$0xff]
        %v2064 = vld [vmem:[#allocation2 + $0x2c] sm:$0xf]
        %v2065 = vld [vmem:[#allocation2 + $0x34] sm:$0xff]
        %v2066 = vld [vmem:[#allocation2 + $0x3c] sm:$0xf]
        %v2067 = vsel %vm301, 1, 0
        %v2068 = vsel %vm302, 1, 0
        %vm2069 = vcmp.eq.s32.totalorder %v2067, 1
        %vm2070 = vcmp.eq.s32.totalorder %v2068, 1
        %vm2071 = vmpackc.low %vm2070, %vm2069
        %v2072 = vsel %vm2071, 65537, 0
        %2073 = vrot.lane.b32.xlu0 %v2072, 16
        %v2074 = vpop.permute.xlu0 %2073
        %v2075 = vrot.slane %v2074, 4
        %v2076 = vsel %vm1675, %v2075, %v2074
        %v2077 = vunpack.c.l.b16 %v2076
        %v2078 = vunpack.c.h.b16 %v2076
        %v2079 = vunpack.c.l.b16 0
        %v2080 = vunpack.c.h.b16 0
        %vm2081 = vcmp.ne.s32.totalorder %v2077, %v2079
        %vm2082 = vcmp.ne.s32.totalorder %v2078, %v2080
        %vm2083 = vmpackc.low %vm2082, %vm2081
        %v2084 = vunpack.c.l.b16 %v2075
        %v2085 = vunpack.c.h.b16 %v2075
        %v2086 = vunpack.c.l.b16 0
        %v2087 = vunpack.c.h.b16 0
        %vm2088 = vcmp.ne.s32.totalorder %v2084, %v2086
        %vm2089 = vcmp.ne.s32.totalorder %v2085, %v2087
        %vm2090 = vmpackc.low %vm2089, %vm2088
        %v2091 = vsel %vm2083, %v2059, 0
        %v2092 = vsel %vm2090, %v2060, 0
        %v2093 = vsel %vm2083, %v2061, 0
        %v2094 = vsel %vm2090, %v2062, 0
        %v2095 = vsel %vm2083, %v2063, 0
        %v2096 = vsel %vm2090, %v2064, 0
        %v2097 = vsel %vm2083, %v2065, 0
        %v2098 = vsel %vm2090, %v2066, 0
        %2107 = vrot.lane.b32.xlu0 %v2091, 112
        %v2108 = vpop.permute.xlu0 %2107
        %2109 = vrot.lane.b32.xlu0 %v2092, 112
        %v2110 = vpop.permute.xlu0 %2109
        %2111 = vrot.lane.b32.xlu0 %v2093, 112
        %v2112 = vpop.permute.xlu0 %2111
        %2113 = vrot.lane.b32.xlu0 %v2094, 112
        %v2114 = vpop.permute.xlu0 %2113
        %2115 = vrot.lane.b32.xlu0 %v2095, 112
        %v2116 = vpop.permute.xlu0 %2115
        %2117 = vrot.lane.b32.xlu0 %v2096, 112
        %v2118 = vpop.permute.xlu0 %2117
        %2119 = vrot.lane.b32.xlu0 %v2097, 112
        %v2120 = vpop.permute.xlu0 %2119
        %2121 = vrot.lane.b32.xlu0 %v2098, 112
        %v2122 = vpop.permute.xlu0 %2121
        %v2123 = vrot.slane %v2108, 4
        %v2124 = vrot.slane %v2110, 4
        %v2125 = vrot.slane %v2112, 4
        %v2126 = vrot.slane %v2114, 4
        %v2127 = vrot.slane %v2116, 4
        %v2128 = vrot.slane %v2118, 4
        %v2129 = vrot.slane %v2120, 4
        %v2130 = vrot.slane %v2122, 4
        %v2131 = vsel %vm1583, %v2123, %v2124
        %v2132 = vsel %vm1618, %v2108, %v2131
        %v2133 = vsel %vm1583, %v2125, %v2126
        %v2134 = vsel %vm1618, %v2112, %v2133
        %v2135 = vsel %vm1583, %v2127, %v2128
        %v2136 = vsel %vm1618, %v2116, %v2135
        %v2137 = vsel %vm1583, %v2129, %v2130
        %v2138 = vsel %vm1618, %v2120, %v2137
        %2143 = vst [vmem:[#allocation3 + $0xe0] sm:$0xff] %v2132
        %2144 = vst [vmem:[#allocation3 + $0xe8] sm:$0xff] %v2134
        %2145 = vst [vmem:[#allocation3 + $0xf0] sm:$0xff] %v2136
        %2146 = vst [vmem:[#allocation3 + $0xf8] sm:$0xff] %v2138
        %v2147 = vld [vmem:[#allocation2 + $0x4] sm:$0xff]
        %v2148 = vld [vmem:[#allocation2 + $0xc] sm:$0xf]
        %v2149 = vld [vmem:[#allocation2 + $0x14] sm:$0xff]
        %v2150 = vld [vmem:[#allocation2 + $0x1c] sm:$0xf]
        %v2151 = vld [vmem:[#allocation2 + $0x24] sm:$0xff]
        %v2152 = vld [vmem:[#allocation2 + $0x2c] sm:$0xf]
        %v2153 = vld [vmem:[#allocation2 + $0x34] sm:$0xff]
        %v2154 = vld [vmem:[#allocation2 + $0x3c] sm:$0xf]
        %vm2155 = vmand %vm301, %vm305
        %vm2156 = vmand %vm302, %vm306
        %v2157 = vsel %vm2155, 1, 0
        %v2158 = vsel %vm2156, 1, 0
        %vm2159 = vcmp.eq.s32.totalorder %v2157, 1
        %vm2160 = vcmp.eq.s32.totalorder %v2158, 1
        %vm2161 = vmpackc.low %vm2160, %vm2159
        %v2162 = vsel %vm2161, 65537, 0
        %2163 = vrot.lane.b32.xlu0 %v2162, 17
        %v2164 = vpop.permute.xlu0 %2163
        %v2165 = vrot.slane %v2164, 4
        %v2166 = vsel %vm1585, %v2165, %v2164
        %v2167 = vunpack.c.l.b16 %v2166
        %v2168 = vunpack.c.h.b16 %v2166
        %v2169 = vunpack.c.l.b16 0
        %v2170 = vunpack.c.h.b16 0
        %vm2171 = vcmp.ne.s32.totalorder %v2167, %v2169
        %vm2172 = vcmp.ne.s32.totalorder %v2168, %v2170
        %vm2173 = vmpackc.low %vm2172, %vm2171
        %v2174 = vunpack.c.l.b16 %v2165
        %v2175 = vunpack.c.h.b16 %v2165
        %v2176 = vunpack.c.l.b16 0
        %v2177 = vunpack.c.h.b16 0
        %vm2178 = vcmp.ne.s32.totalorder %v2174, %v2176
        %vm2179 = vcmp.ne.s32.totalorder %v2175, %v2177
        %vm2180 = vmpackc.low %vm2179, %vm2178
        %v2181 = vsel %vm2173, %v2147, 0
        %v2182 = vsel %vm2180, %v2148, 0
        %v2183 = vsel %vm2173, %v2149, 0
        %v2184 = vsel %vm2180, %v2150, 0
        %v2185 = vsel %vm2173, %v2151, 0
        %v2186 = vsel %vm2180, %v2152, 0
        %v2187 = vsel %vm2173, %v2153, 0
        %v2188 = vsel %vm2180, %v2154, 0
        %2197 = vrot.lane.b32.xlu0 %v2181, 111
        %v2198 = vpop.permute.xlu0 %2197
        %2199 = vrot.lane.b32.xlu0 %v2182, 111
        %v2200 = vpop.permute.xlu0 %2199
        %2201 = vrot.lane.b32.xlu0 %v2183, 111
        %v2202 = vpop.permute.xlu0 %2201
        %2203 = vrot.lane.b32.xlu0 %v2184, 111
        %v2204 = vpop.permute.xlu0 %2203
        %2205 = vrot.lane.b32.xlu0 %v2185, 111
        %v2206 = vpop.permute.xlu0 %2205
        %2207 = vrot.lane.b32.xlu0 %v2186, 111
        %v2208 = vpop.permute.xlu0 %2207
        %2209 = vrot.lane.b32.xlu0 %v2187, 111
        %v2210 = vpop.permute.xlu0 %2209
        %2211 = vrot.lane.b32.xlu0 %v2188, 111
        %v2212 = vpop.permute.xlu0 %2211
        %v2213 = vrot.slane %v2198, 4
        %v2214 = vrot.slane %v2200, 4
        %v2215 = vrot.slane %v2202, 4
        %v2216 = vrot.slane %v2204, 4
        %v2217 = vrot.slane %v2206, 4
        %v2218 = vrot.slane %v2208, 4
        %v2219 = vrot.slane %v2210, 4
        %v2220 = vrot.slane %v2212, 4
        %v2221 = vsel %vm1583, %v2213, %v2214
        %v2222 = vsel %vm1527, %v2198, %v2221
        %v2223 = vsel %vm1583, %v2215, %v2216
        %v2224 = vsel %vm1527, %v2202, %v2223
        %v2225 = vsel %vm1583, %v2217, %v2218
        %v2226 = vsel %vm1527, %v2206, %v2225
        %v2227 = vsel %vm1583, %v2219, %v2220
        %v2228 = vsel %vm1527, %v2210, %v2227
        %2233 = vst [vmem:[#allocation3 + $0x100] sm:$0xff] %v2222
        %2234 = vst [vmem:[#allocation3 + $0x108] sm:$0xff] %v2224
        %2235 = vst [vmem:[#allocation3 + $0x110] sm:$0xff] %v2226
        %2236 = vst [vmem:[#allocation3 + $0x118] sm:$0xff] %v2228
        %s2237 = smul.u32 %s1491, 12
        %s2238 = smul.addr %s2237, 4
        %s2239 = scalar_lea.vmem %s3, %s2238
        %v2240 = vld [vmem:[%s2239] sm:$0xff]
        %v2241 = vld [vmem:[%s2239 + $0x8] sm:$0xf]
        %v2242 = vld [vmem:[%s2239 + $0xc] sm:$0xff]
        %v2243 = vld [vmem:[%s2239 + $0x14] sm:$0xf]
        %v2244 = vld [vmem:[%s2239 + $0x18] sm:$0xff]
        %v2245 = vld [vmem:[%s2239 + $0x20] sm:$0xf]
        %v2246 = vld [vmem:[%s2239 + $0x24] sm:$0xff]
        %v2247 = vld [vmem:[%s2239 + $0x2c] sm:$0xf]
        %s2248 = smul.u32 %s1491, 32
        %s2249 = scalar_lea.vmem %s4, %s2248
        %v2250 = vld [vmem:[%s2249] sm:$0xff]
        %v2251 = vld [vmem:[%s2249 + $0x8] sm:$0xff]
        %v2252 = vld [vmem:[%s2249 + $0x10] sm:$0xff]
        %v2253 = vld [vmem:[%s2249 + $0x18] sm:$0xff]
        %v2254 = vld [vmem:[#allocation3] sm:$0xff]
        %v2255 = vld [vmem:[#allocation3 + $0x8] sm:$0xff]
        %v2256 = vld [vmem:[#allocation3 + $0x10] sm:$0xff]
        %v2257 = vld [vmem:[#allocation3 + $0x18] sm:$0xff]
        %v2258 = vld [vmem:[#allocation3 + $0x20] sm:$0xff]
        %v2259 = vld [vmem:[#allocation3 + $0x28] sm:$0xff]
        %v2260 = vld [vmem:[#allocation3 + $0x30] sm:$0xff]
        %v2261 = vld [vmem:[#allocation3 + $0x38] sm:$0xff]
        %v2262 = vld [vmem:[#allocation3 + $0x40] sm:$0xff]
        %v2263 = vld [vmem:[#allocation3 + $0x48] sm:$0xff]
        %v2264 = vld [vmem:[#allocation3 + $0x50] sm:$0xff]
        %v2265 = vld [vmem:[#allocation3 + $0x58] sm:$0xff]
        %v2266 = vld [vmem:[#allocation3 + $0x60] sm:$0xff]
        %v2267 = vld [vmem:[#allocation3 + $0x68] sm:$0xff]
        %v2268 = vld [vmem:[#allocation3 + $0x70] sm:$0xff]
        %v2269 = vld [vmem:[#allocation3 + $0x78] sm:$0xff]
        %v2270 = vld [vmem:[#allocation3 + $0x80] sm:$0xff]
        %v2271 = vld [vmem:[#allocation3 + $0x88] sm:$0xff]
        %v2272 = vld [vmem:[#allocation3 + $0x90] sm:$0xff]
        %v2273 = vld [vmem:[#allocation3 + $0x98] sm:$0xff]
        %v2274 = vld [vmem:[#allocation3 + $0xa0] sm:$0xff]
        %v2275 = vld [vmem:[#allocation3 + $0xa8] sm:$0xff]
        %v2276 = vld [vmem:[#allocation3 + $0xb0] sm:$0xff]
        %v2277 = vld [vmem:[#allocation3 + $0xb8] sm:$0xff]
        %v2278 = vld [vmem:[#allocation3 + $0xc0] sm:$0xff]
        %v2279 = vld [vmem:[#allocation3 + $0xc8] sm:$0xff]
        %v2280 = vld [vmem:[#allocation3 + $0xd0] sm:$0xff]
        %v2281 = vld [vmem:[#allocation3 + $0xd8] sm:$0xff]
        %v2282 = vld [vmem:[#allocation3 + $0xe0] sm:$0xff]
        %v2283 = vld [vmem:[#allocation3 + $0xe8] sm:$0xff]
        %v2284 = vld [vmem:[#allocation3 + $0xf0] sm:$0xff]
        %v2285 = vld [vmem:[#allocation3 + $0xf8] sm:$0xff]
        %v2286 = vld [vmem:[#allocation3 + $0x100] sm:$0xff]
        %v2287 = vld [vmem:[#allocation3 + $0x108] sm:$0xff]
        %v2288 = vld [vmem:[#allocation3 + $0x110] sm:$0xff]
        %v2289 = vld [vmem:[#allocation3 + $0x118] sm:$0xff]
        %2291 = vset.pattern.permute.xlu0 0
        %2292 = vperm.xlu0 %2291, %v2250
        %v2293 = vpop.permute.xlu0 %2292
        %2296 = vset.pattern.permute.xlu0 0
        %2297 = vperm.xlu0 %2296, %v2251
        %v2298 = vpop.permute.xlu0 %2297
        %2301 = vset.pattern.permute.xlu0 0
        %2302 = vperm.xlu0 %2301, %v2252
        %v2303 = vpop.permute.xlu0 %2302
        %2306 = vset.pattern.permute.xlu0 0
        %2307 = vperm.xlu0 %2306, %v2253
        %v2308 = vpop.permute.xlu0 %2307
        %v2318 = vunpack.c.l.b16 %v2240
        %v2319 = vunpack.c.h.b16 %v2240
        %v2320 = vunpack.c.l.b16 %v2241
        %v2321 = vunpack.c.l.b16 %v2242
        %v2322 = vunpack.c.h.b16 %v2242
        %v2323 = vunpack.c.l.b16 %v2243
        %v2324 = vunpack.c.l.b16 %v2244
        %v2325 = vunpack.c.h.b16 %v2244
        %v2326 = vunpack.c.l.b16 %v2245
        %v2327 = vunpack.c.l.b16 %v2246
        %v2328 = vunpack.c.h.b16 %v2246
        %v2329 = vunpack.c.l.b16 %v2247
        %v2330 = vpack.c.b16 %v2321, %v2318
        %v2331 = vpack.c.b16 %v2322, %v2319
        %v2332 = vpack.c.b16 %v2323, %v2320
        %v2333 = vpack.c.b16 %v2327, %v2324
        %v2334 = vpack.c.b16 %v2328, %v2325
        %v2335 = vpack.c.b16 %v2329, %v2326
        %v2376 = vunpack.c.l.b16 %v2254
        %v2377 = vunpack.c.h.b16 %v2254
        %v2378 = vunpack.c.l.b16 %v2255
        %v2379 = vunpack.c.h.b16 %v2255
        %v2380 = vunpack.c.l.b16 %v2256
        %v2381 = vunpack.c.h.b16 %v2256
        %v2382 = vunpack.c.l.b16 %v2257
        %v2383 = vunpack.c.h.b16 %v2257
        %v2384 = vunpack.c.l.b16 %v2258
        %v2385 = vunpack.c.h.b16 %v2258
        %v2386 = vunpack.c.l.b16 %v2259
        %v2387 = vunpack.c.h.b16 %v2259
        %v2388 = vunpack.c.l.b16 %v2260
        %v2389 = vunpack.c.h.b16 %v2260
        %v2390 = vunpack.c.l.b16 %v2261
        %v2391 = vunpack.c.h.b16 %v2261
        %v2392 = vunpack.c.l.b16 %v2262
        %v2393 = vunpack.c.h.b16 %v2262
        %v2394 = vunpack.c.l.b16 %v2263
        %v2395 = vunpack.c.h.b16 %v2263
        %v2396 = vunpack.c.l.b16 %v2264
        %v2397 = vunpack.c.h.b16 %v2264
        %v2398 = vunpack.c.l.b16 %v2265
        %v2399 = vunpack.c.h.b16 %v2265
        %v2400 = vunpack.c.l.b16 %v2266
        %v2401 = vunpack.c.h.b16 %v2266
        %v2402 = vunpack.c.l.b16 %v2267
        %v2403 = vunpack.c.h.b16 %v2267
        %v2404 = vunpack.c.l.b16 %v2268
        %v2405 = vunpack.c.h.b16 %v2268
        %v2406 = vunpack.c.l.b16 %v2269
        %v2407 = vunpack.c.h.b16 %v2269
        %v2408 = vunpack.c.l.b16 %v2270
        %v2409 = vunpack.c.h.b16 %v2270
        %v2410 = vunpack.c.l.b16 %v2271
        %v2411 = vunpack.c.h.b16 %v2271
        %v2412 = vunpack.c.l.b16 %v2272
        %v2413 = vunpack.c.h.b16 %v2272
        %v2414 = vunpack.c.l.b16 %v2273
        %v2415 = vunpack.c.h.b16 %v2273
        %v2416 = vunpack.c.l.b16 %v2274
        %v2417 = vunpack.c.h.b16 %v2274
        %v2418 = vunpack.c.l.b16 %v2275
        %v2419 = vunpack.c.h.b16 %v2275
        %v2420 = vunpack.c.l.b16 %v2276
        %v2421 = vunpack.c.h.b16 %v2276
        %v2422 = vunpack.c.l.b16 %v2277
        %v2423 = vunpack.c.h.b16 %v2277
        %v2424 = vunpack.c.l.b16 %v2278
        %v2425 = vunpack.c.h.b16 %v2278
        %v2426 = vunpack.c.l.b16 %v2279
        %v2427 = vunpack.c.h.b16 %v2279
        %v2428 = vunpack.c.l.b16 %v2280
        %v2429 = vunpack.c.h.b16 %v2280
        %v2430 = vunpack.c.l.b16 %v2281
        %v2431 = vunpack.c.h.b16 %v2281
        %v2432 = vunpack.c.l.b16 %v2282
        %v2433 = vunpack.c.h.b16 %v2282
        %v2434 = vunpack.c.l.b16 %v2283
        %v2435 = vunpack.c.h.b16 %v2283
        %v2436 = vunpack.c.l.b16 %v2284
        %v2437 = vunpack.c.h.b16 %v2284
        %v2438 = vunpack.c.l.b16 %v2285
        %v2439 = vunpack.c.h.b16 %v2285
        %v2440 = vunpack.c.l.b16 %v2286
        %v2441 = vunpack.c.h.b16 %v2286
        %v2442 = vunpack.c.l.b16 %v2287
        %v2443 = vunpack.c.h.b16 %v2287
        %v2444 = vunpack.c.l.b16 %v2288
        %v2445 = vunpack.c.h.b16 %v2288
        %v2446 = vunpack.c.l.b16 %v2289
        %v2447 = vunpack.c.h.b16 %v2289
        %v2448 = vpack.c.b16 %v2378, %v2376
        %v2449 = vpack.c.b16 %v2379, %v2377
        %v2450 = vpack.c.b16 %v2382, %v2380
        %v2451 = vpack.c.b16 %v2383, %v2381
        %v2452 = vpack.c.b16 %v2386, %v2384
        %v2453 = vpack.c.b16 %v2387, %v2385
        %v2454 = vpack.c.b16 %v2390, %v2388
        %v2455 = vpack.c.b16 %v2391, %v2389
        %v2456 = vpack.c.b16 %v2394, %v2392
        %v2457 = vpack.c.b16 %v2395, %v2393
        %v2458 = vpack.c.b16 %v2398, %v2396
        %v2459 = vpack.c.b16 %v2399, %v2397
        %v2460 = vpack.c.b16 %v2402, %v2400
        %v2461 = vpack.c.b16 %v2403, %v2401
        %v2462 = vpack.c.b16 %v2406, %v2404
        %v2463 = vpack.c.b16 %v2407, %v2405
        %v2464 = vpack.c.b16 %v2410, %v2408
        %v2465 = vpack.c.b16 %v2411, %v2409
        %v2466 = vpack.c.b16 %v2414, %v2412
        %v2467 = vpack.c.b16 %v2415, %v2413
        %v2468 = vpack.c.b16 %v2418, %v2416
        %v2469 = vpack.c.b16 %v2419, %v2417
        %v2470 = vpack.c.b16 %v2422, %v2420
        %v2471 = vpack.c.b16 %v2423, %v2421
        %v2472 = vpack.c.b16 %v2426, %v2424
        %v2473 = vpack.c.b16 %v2427, %v2425
        %v2474 = vpack.c.b16 %v2430, %v2428
        %v2475 = vpack.c.b16 %v2431, %v2429
        %v2476 = vpack.c.b16 %v2434, %v2432
        %v2477 = vpack.c.b16 %v2435, %v2433
        %v2478 = vpack.c.b16 %v2438, %v2436
        %v2479 = vpack.c.b16 %v2439, %v2437
        %v2480 = vpack.c.b16 %v2442, %v2440
        %v2481 = vpack.c.b16 %v2443, %v2441
        %v2482 = vpack.c.b16 %v2446, %v2444
        %v2483 = vpack.c.b16 %v2447, %v2445
        %vm2520 = vcmask 261120
        %v2522 = vsel %vm2520, %v2332, 0
        %v2525 = vsel %vm2520, %v2335, 0
        %2527 = vmatpush.bf16.msra.mxu0 %v2462
        %2528 = vmatpush.bf16.msra.mxu0 %v2460
        %2529 = vmatpush.bf16.msra.mxu0 %v2458
        %2530 = vmatpush.bf16.msra.mxu0 %v2456
        %2531 = vmatpush.bf16.msra.mxu0 %v2454
        %2532 = vmatpush.bf16.msra.mxu0 %v2452
        %2533 = vmatpush.bf16.msra.mxu0 %v2450
        %2534 = vmatpush.bf16.msra.mxu0 %v2448
        %2535 = vmatmul.bf16.gmra.mxu0 %v2330
        %v2536 = vpop.f32.mrf.mxu0
        %v2537 = vadd.f32 %v2293, %v2536
        %v2538 = vpop.f32.mrf.mxu0
        %v2539 = vadd.f32 %v2298, %v2538
        %2540 = vmatmul.bf16.gmra.mxu0 %v2333
        %v2541 = vpop.f32.mrf.mxu0
        %v2542 = vadd.f32 %v2303, %v2541
        %v2543 = vpop.f32.mrf.mxu0
        %v2544 = vadd.f32 %v2308, %v2543
        %2545 = vdwg.mxu0
        %2546 = vmatpush.bf16.msra.mxu0 %v2478
        %2547 = vmatpush.bf16.msra.mxu0 %v2476
        %2548 = vmatpush.bf16.msra.mxu0 %v2474
        %2549 = vmatpush.bf16.msra.mxu0 %v2472
        %2550 = vmatpush.bf16.msra.mxu0 %v2470
        %2551 = vmatpush.bf16.msra.mxu0 %v2468
        %2552 = vmatpush.bf16.msra.mxu0 %v2466
        %2553 = vmatpush.bf16.msra.mxu0 %v2464
        %2554 = vmatmul.bf16.gmra.mxu0 %v2331
        %v2555 = vpop.f32.mrf.mxu0
        %v2556 = vadd.f32 %v2537, %v2555
        %v2557 = vpop.f32.mrf.mxu0
        %v2558 = vadd.f32 %v2539, %v2557
        %2559 = vmatmul.bf16.gmra.mxu0 %v2334
        %v2560 = vpop.f32.mrf.mxu0
        %v2561 = vadd.f32 %v2542, %v2560
        %v2562 = vpop.f32.mrf.mxu0
        %v2563 = vadd.f32 %v2544, %v2562
        %2564 = vdwg.mxu0
        %2565 = vmatpush.bf16.msra.mxu0 0
        %2566 = vmatpush.bf16.msra.mxu0 0
        %2567 = vmatpush.bf16.msra.mxu0 0
        %2568 = vmatpush.bf16.msra.mxu0 0
        %2569 = vmatpush.bf16.msra.mxu0 0
        %2570 = vmatpush.bf16.msra.mxu0 0
        %2571 = vmatpush.bf16.msra.mxu0 %v2482
        %2572 = vmatpush.bf16.msra.mxu0 %v2480
        %2573 = vmatmul.bf16.gmra.mxu0 %v2522
        %v2574 = vpop.f32.mrf.mxu0
        %v2575 = vadd.f32 %v2556, %v2574
        %v2576 = vpop.f32.mrf.mxu0
        %v2577 = vadd.f32 %v2558, %v2576
        %2578 = vmatmul.bf16.gmra.mxu0 %v2525
        %v2579 = vpop.f32.mrf.mxu0
        %v2580 = vadd.f32 %v2561, %v2579
        %v2581 = vpop.f32.mrf.mxu0
        %v2582 = vadd.f32 %v2563, %v2581
        %2583 = vdwg.mxu0
        %2584 = vmatpush.bf16.msra.mxu0 %v2463
        %2585 = vmatpush.bf16.msra.mxu0 %v2461
        %2586 = vmatpush.bf16.msra.mxu0 %v2459
        %2587 = vmatpush.bf16.msra.mxu0 %v2457
        %2588 = vmatpush.bf16.msra.mxu0 %v2455
        %2589 = vmatpush.bf16.msra.mxu0 %v2453
        %2590 = vmatpush.bf16.msra.mxu0 %v2451
        %2591 = vmatpush.bf16.msra.mxu0 %v2449
        %2592 = vmatmul.bf16.gmra.mxu0 %v2330
        %v2593 = vpop.f32.mrf.mxu0
        %v2594 = vadd.f32 %v2293, %v2593
        %v2595 = vpop.f32.mrf.mxu0
        %v2596 = vadd.f32 %v2298, %v2595
        %2597 = vmatmul.bf16.gmra.mxu0 %v2333
        %v2598 = vpop.f32.mrf.mxu0
        %v2599 = vadd.f32 %v2303, %v2598
        %v2600 = vpop.f32.mrf.mxu0
        %v2601 = vadd.f32 %v2308, %v2600
        %2602 = vdwg.mxu0
        %2603 = vmatpush.bf16.msra.mxu0 %v2479
        %2604 = vmatpush.bf16.msra.mxu0 %v2477
        %2605 = vmatpush.bf16.msra.mxu0 %v2475
        %2606 = vmatpush.bf16.msra.mxu0 %v2473
        %2607 = vmatpush.bf16.msra.mxu0 %v2471
        %2608 = vmatpush.bf16.msra.mxu0 %v2469
        %2609 = vmatpush.bf16.msra.mxu0 %v2467
        %2610 = vmatpush.bf16.msra.mxu0 %v2465
        %2611 = vmatmul.bf16.gmra.mxu0 %v2331
        %v2612 = vpop.f32.mrf.mxu0
        %v2613 = vadd.f32 %v2594, %v2612
        %v2614 = vpop.f32.mrf.mxu0
        %v2615 = vadd.f32 %v2596, %v2614
        %2616 = vmatmul.bf16.gmra.mxu0 %v2334
        %v2617 = vpop.f32.mrf.mxu0
        %v2618 = vadd.f32 %v2599, %v2617
        %v2619 = vpop.f32.mrf.mxu0
        %v2620 = vadd.f32 %v2601, %v2619
        %2621 = vdwg.mxu0
        %2622 = vmatpush.bf16.msra.mxu0 0
        %2623 = vmatpush.bf16.msra.mxu0 0
        %2624 = vmatpush.bf16.msra.mxu0 0
        %2625 = vmatpush.bf16.msra.mxu0 0
        %2626 = vmatpush.bf16.msra.mxu0 0
        %2627 = vmatpush.bf16.msra.mxu0 0
        %2628 = vmatpush.bf16.msra.mxu0 %v2483
        %2629 = vmatpush.bf16.msra.mxu0 %v2481
        %2630 = vmatmul.bf16.gmra.mxu0 %v2522
        %v2631 = vpop.f32.mrf.mxu0
        %v2632 = vadd.f32 %v2613, %v2631
        %v2633 = vpop.f32.mrf.mxu0
        %v2634 = vadd.f32 %v2615, %v2633
        %2635 = vmatmul.bf16.gmra.mxu0 %v2525
        %v2636 = vpop.f32.mrf.mxu0
        %v2637 = vadd.f32 %v2618, %v2636
        %v2638 = vpop.f32.mrf.mxu0
        %v2639 = vadd.f32 %v2620, %v2638
        %2640 = vdwg.mxu0
        %v2641 = vmax.f32 %v2575, 0.0
        %v2642 = vmax.f32 %v2632, 0.0
        %v2643 = vmax.f32 %v2577, 0.0
        %v2644 = vmax.f32 %v2634, 0.0
        %v2645 = vmax.f32 %v2580, 0.0
        %v2646 = vmax.f32 %v2637, 0.0
        %v2647 = vmax.f32 %v2582, 0.0
        %v2648 = vmax.f32 %v2639, 0.0
        %v2649 = vpack.c.bf16 %v2642, %v2641
        %v2650 = vpack.c.bf16 %v2644, %v2643
        %v2651 = vpack.c.bf16 %v2646, %v2645
        %v2652 = vpack.c.bf16 %v2648, %v2647
        %2653 = vst [vmem:[#allocation2 + $0x4] sm:$0xff] %v2649
        %2654 = vst [vmem:[#allocation2 + $0x14] sm:$0xff] %v2650
        %2655 = vst [vmem:[#allocation2 + $0x24] sm:$0xff] %v2651
        %2656 = vst [vmem:[#allocation2 + $0x34] sm:$0xff] %v2652
        %v2657 = vld [vmem:[#allocation2] sm:$0xff]
        %v2658 = vld [vmem:[#allocation2 + $0x8] sm:$0xf]
        %v2659 = vld [vmem:[#allocation2 + $0x10] sm:$0xff]
        %v2660 = vld [vmem:[#allocation2 + $0x18] sm:$0xf]
        %v2661 = vld [vmem:[#allocation2 + $0x20] sm:$0xff]
        %v2662 = vld [vmem:[#allocation2 + $0x28] sm:$0xf]
        %v2663 = vld [vmem:[#allocation2 + $0x30] sm:$0xff]
        %v2664 = vld [vmem:[#allocation2 + $0x38] sm:$0xf]
        %v2665 = vsel %vm1535, %v2657, 0
        %v2666 = vsel %vm1542, %v2658, 0
        %v2667 = vsel %vm1535, %v2659, 0
        %v2668 = vsel %vm1542, %v2660, 0
        %v2669 = vsel %vm1535, %v2661, 0
        %v2670 = vsel %vm1542, %v2662, 0
        %v2671 = vsel %vm1535, %v2663, 0
        %v2672 = vsel %vm1542, %v2664, 0
        %2681 = vrot.lane.b32.xlu0 %v2665, 17
        %v2682 = vpop.permute.xlu0 %2681
        %2683 = vrot.lane.b32.xlu0 %v2666, 17
        %v2684 = vpop.permute.xlu0 %2683
        %2685 = vrot.lane.b32.xlu0 %v2667, 17
        %v2686 = vpop.permute.xlu0 %2685
        %2687 = vrot.lane.b32.xlu0 %v2668, 17
        %v2688 = vpop.permute.xlu0 %2687
        %2689 = vrot.lane.b32.xlu0 %v2669, 17
        %v2690 = vpop.permute.xlu0 %2689
        %2691 = vrot.lane.b32.xlu0 %v2670, 17
        %v2692 = vpop.permute.xlu0 %2691
        %2693 = vrot.lane.b32.xlu0 %v2671, 17
        %v2694 = vpop.permute.xlu0 %2693
        %2695 = vrot.lane.b32.xlu0 %v2672, 17
        %v2696 = vpop.permute.xlu0 %2695
        %v2697 = vrot.slane %v2682, 4
        %v2698 = vrot.slane %v2684, 4
        %v2699 = vrot.slane %v2686, 4
        %v2700 = vrot.slane %v2688, 4
        %v2701 = vrot.slane %v2690, 4
        %v2702 = vrot.slane %v2692, 4
        %v2703 = vrot.slane %v2694, 4
        %v2704 = vrot.slane %v2696, 4
        %v2705 = vsel %vm1583, %v2697, %v2698
        %v2706 = vsel %vm1585, %v2682, %v2705
        %v2707 = vsel %vm1583, %v2699, %v2700
        %v2708 = vsel %vm1585, %v2686, %v2707
        %v2709 = vsel %vm1583, %v2701, %v2702
        %v2710 = vsel %vm1585, %v2690, %v2709
        %v2711 = vsel %vm1583, %v2703, %v2704
        %v2712 = vsel %vm1585, %v2694, %v2711
        %2717 = vst [vmem:[#allocation3] sm:$0xff] %v2706
        %2718 = vst [vmem:[#allocation3 + $0x8] sm:$0xff] %v2708
        %2719 = vst [vmem:[#allocation3 + $0x10] sm:$0xff] %v2710
        %2720 = vst [vmem:[#allocation3 + $0x18] sm:$0xff] %v2712
        %v2721 = vld [vmem:[#allocation2] sm:$0xff]
        %v2722 = vld [vmem:[#allocation2 + $0x8] sm:$0xf]
        %v2723 = vld [vmem:[#allocation2 + $0x10] sm:$0xff]
        %v2724 = vld [vmem:[#allocation2 + $0x18] sm:$0xf]
        %v2725 = vld [vmem:[#allocation2 + $0x20] sm:$0xff]
        %v2726 = vld [vmem:[#allocation2 + $0x28] sm:$0xf]
        %v2727 = vld [vmem:[#allocation2 + $0x30] sm:$0xff]
        %v2728 = vld [vmem:[#allocation2 + $0x38] sm:$0xf]
        %v2729 = vsel %vm1626, %v2721, 0
        %v2730 = vsel %vm1633, %v2722, 0
        %v2731 = vsel %vm1626, %v2723, 0
        %v2732 = vsel %vm1633, %v2724, 0
        %v2733 = vsel %vm1626, %v2725, 0
        %v2734 = vsel %vm1633, %v2726, 0
        %v2735 = vsel %vm1626, %v2727, 0
        %v2736 = vsel %vm1633, %v2728, 0
        %2745 = vrot.lane.b32.xlu0 %v2729, 16
        %v2746 = vpop.permute.xlu0 %2745
        %2747 = vrot.lane.b32.xlu0 %v2730, 16
        %v2748 = vpop.permute.xlu0 %2747
        %2749 = vrot.lane.b32.xlu0 %v2731, 16
        %v2750 = vpop.permute.xlu0 %2749
        %2751 = vrot.lane.b32.xlu0 %v2732, 16
        %v2752 = vpop.permute.xlu0 %2751
        %2753 = vrot.lane.b32.xlu0 %v2733, 16
        %v2754 = vpop.permute.xlu0 %2753
        %2755 = vrot.lane.b32.xlu0 %v2734, 16
        %v2756 = vpop.permute.xlu0 %2755
        %2757 = vrot.lane.b32.xlu0 %v2735, 16
        %v2758 = vpop.permute.xlu0 %2757
        %2759 = vrot.lane.b32.xlu0 %v2736, 16
        %v2760 = vpop.permute.xlu0 %2759
        %v2761 = vrot.slane %v2746, 4
        %v2762 = vrot.slane %v2748, 4
        %v2763 = vrot.slane %v2750, 4
        %v2764 = vrot.slane %v2752, 4
        %v2765 = vrot.slane %v2754, 4
        %v2766 = vrot.slane %v2756, 4
        %v2767 = vrot.slane %v2758, 4
        %v2768 = vrot.slane %v2760, 4
        %v2769 = vsel %vm1583, %v2761, %v2762
        %v2770 = vsel %vm1675, %v2746, %v2769
        %v2771 = vsel %vm1583, %v2763, %v2764
        %v2772 = vsel %vm1675, %v2750, %v2771
        %v2773 = vsel %vm1583, %v2765, %v2766
        %v2774 = vsel %vm1675, %v2754, %v2773
        %v2775 = vsel %vm1583, %v2767, %v2768
        %v2776 = vsel %vm1675, %v2758, %v2775
        %2781 = vst [vmem:[#allocation3 + $0x20] sm:$0xff] %v2770
        %2782 = vst [vmem:[#allocation3 + $0x28] sm:$0xff] %v2772
        %2783 = vst [vmem:[#allocation3 + $0x30] sm:$0xff] %v2774
        %2784 = vst [vmem:[#allocation3 + $0x38] sm:$0xff] %v2776
        %v2785 = vld [vmem:[#allocation2] sm:$0xff]
        %v2786 = vld [vmem:[#allocation2 + $0x8] sm:$0xf]
        %v2787 = vld [vmem:[#allocation2 + $0x10] sm:$0xff]
        %v2788 = vld [vmem:[#allocation2 + $0x18] sm:$0xf]
        %v2789 = vld [vmem:[#allocation2 + $0x20] sm:$0xff]
        %v2790 = vld [vmem:[#allocation2 + $0x28] sm:$0xf]
        %v2791 = vld [vmem:[#allocation2 + $0x30] sm:$0xff]
        %v2792 = vld [vmem:[#allocation2 + $0x38] sm:$0xf]
        %v2793 = vsel %vm1718, %v2785, 0
        %v2794 = vsel %vm1725, %v2786, 0
        %v2795 = vsel %vm1718, %v2787, 0
        %v2796 = vsel %vm1725, %v2788, 0
        %v2797 = vsel %vm1718, %v2789, 0
        %v2798 = vsel %vm1725, %v2790, 0
        %v2799 = vsel %vm1718, %v2791, 0
        %v2800 = vsel %vm1725, %v2792, 0
        %2809 = vrot.lane.b32.xlu0 %v2793, 15
        %v2810 = vpop.permute.xlu0 %2809
        %2811 = vrot.lane.b32.xlu0 %v2794, 15
        %v2812 = vpop.permute.xlu0 %2811
        %2813 = vrot.lane.b32.xlu0 %v2795, 15
        %v2814 = vpop.permute.xlu0 %2813
        %2815 = vrot.lane.b32.xlu0 %v2796, 15
        %v2816 = vpop.permute.xlu0 %2815
        %2817 = vrot.lane.b32.xlu0 %v2797, 15
        %v2818 = vpop.permute.xlu0 %2817
        %2819 = vrot.lane.b32.xlu0 %v2798, 15
        %v2820 = vpop.permute.xlu0 %2819
        %2821 = vrot.lane.b32.xlu0 %v2799, 15
        %v2822 = vpop.permute.xlu0 %2821
        %2823 = vrot.lane.b32.xlu0 %v2800, 15
        %v2824 = vpop.permute.xlu0 %2823
        %v2825 = vrot.slane %v2810, 4
        %v2826 = vrot.slane %v2812, 4
        %v2827 = vrot.slane %v2814, 4
        %v2828 = vrot.slane %v2816, 4
        %v2829 = vrot.slane %v2818, 4
        %v2830 = vrot.slane %v2820, 4
        %v2831 = vrot.slane %v2822, 4
        %v2832 = vrot.slane %v2824, 4
        %v2833 = vsel %vm1583, %v2825, %v2826
        %v2834 = vsel %vm1767, %v2810, %v2833
        %v2835 = vsel %vm1583, %v2827, %v2828
        %v2836 = vsel %vm1767, %v2814, %v2835
        %v2837 = vsel %vm1583, %v2829, %v2830
        %v2838 = vsel %vm1767, %v2818, %v2837
        %v2839 = vsel %vm1583, %v2831, %v2832
        %v2840 = vsel %vm1767, %v2822, %v2839
        %2845 = vst [vmem:[#allocation3 + $0x40] sm:$0xff] %v2834
        %2846 = vst [vmem:[#allocation3 + $0x48] sm:$0xff] %v2836
        %2847 = vst [vmem:[#allocation3 + $0x50] sm:$0xff] %v2838
        %2848 = vst [vmem:[#allocation3 + $0x58] sm:$0xff] %v2840
        %v2849 = vld [vmem:[#allocation2] sm:$0xff]
        %v2850 = vld [vmem:[#allocation2 + $0x8] sm:$0xf]
        %v2851 = vld [vmem:[#allocation2 + $0x10] sm:$0xff]
        %v2852 = vld [vmem:[#allocation2 + $0x18] sm:$0xf]
        %v2853 = vld [vmem:[#allocation2 + $0x20] sm:$0xff]
        %v2854 = vld [vmem:[#allocation2 + $0x28] sm:$0xf]
        %v2855 = vld [vmem:[#allocation2 + $0x30] sm:$0xff]
        %v2856 = vld [vmem:[#allocation2 + $0x38] sm:$0xf]
        %v2857 = vsel %vm1808, %v2849, 0
        %v2858 = vsel %vm1815, %v2850, 0
        %v2859 = vsel %vm1808, %v2851, 0
        %v2860 = vsel %vm1815, %v2852, 0
        %v2861 = vsel %vm1808, %v2853, 0
        %v2862 = vsel %vm1815, %v2854, 0
        %v2863 = vsel %vm1808, %v2855, 0
        %v2864 = vsel %vm1815, %v2856, 0
        %2873 = vrot.lane.b32.xlu0 %v2857, 1
        %v2874 = vpop.permute.xlu0 %2873
        %2875 = vrot.lane.b32.xlu0 %v2858, 1
        %v2876 = vpop.permute.xlu0 %2875
        %2877 = vrot.lane.b32.xlu0 %v2859, 1
        %v2878 = vpop.permute.xlu0 %2877
        %2879 = vrot.lane.b32.xlu0 %v2860, 1
        %v2880 = vpop.permute.xlu0 %2879
        %2881 = vrot.lane.b32.xlu0 %v2861, 1
        %v2882 = vpop.permute.xlu0 %2881
        %2883 = vrot.lane.b32.xlu0 %v2862, 1
        %v2884 = vpop.permute.xlu0 %2883
        %2885 = vrot.lane.b32.xlu0 %v2863, 1
        %v2886 = vpop.permute.xlu0 %2885
        %2887 = vrot.lane.b32.xlu0 %v2864, 1
        %v2888 = vpop.permute.xlu0 %2887
        %v2889 = vrot.slane %v2874, 4
        %v2890 = vrot.slane %v2876, 4
        %v2891 = vrot.slane %v2878, 4
        %v2892 = vrot.slane %v2880, 4
        %v2893 = vrot.slane %v2882, 4
        %v2894 = vrot.slane %v2884, 4
        %v2895 = vrot.slane %v2886, 4
        %v2896 = vrot.slane %v2888, 4
        %v2897 = vsel %vm1583, %v2889, %v2890
        %v2898 = vsel %vm1857, %v2874, %v2897
        %v2899 = vsel %vm1583, %v2891, %v2892
        %v2900 = vsel %vm1857, %v2878, %v2899
        %v2901 = vsel %vm1583, %v2893, %v2894
        %v2902 = vsel %vm1857, %v2882, %v2901
        %v2903 = vsel %vm1583, %v2895, %v2896
        %v2904 = vsel %vm1857, %v2886, %v2903
        %2909 = vst [vmem:[#allocation3 + $0x60] sm:$0xff] %v2898
        %2910 = vst [vmem:[#allocation3 + $0x68] sm:$0xff] %v2900
        %2911 = vst [vmem:[#allocation3 + $0x70] sm:$0xff] %v2902
        %2912 = vst [vmem:[#allocation3 + $0x78] sm:$0xff] %v2904
        %v2913 = vld [vmem:[#allocation2 + $0x4] sm:$0xff]
        %v2914 = vld [vmem:[#allocation2 + $0x14] sm:$0xff]
        %v2915 = vld [vmem:[#allocation2 + $0x24] sm:$0xff]
        %v2916 = vld [vmem:[#allocation2 + $0x34] sm:$0xff]
        %2917 = vst [vmem:[#allocation3 + $0x80] sm:$0xff] %v2913
        %2918 = vst [vmem:[#allocation3 + $0x88] sm:$0xff] %v2914
        %2919 = vst [vmem:[#allocation3 + $0x90] sm:$0xff] %v2915
        %2920 = vst [vmem:[#allocation3 + $0x98] sm:$0xff] %v2916
        %v2921 = vld [vmem:[#allocation2 + $0x4] sm:$0xff]
        %v2922 = vld [vmem:[#allocation2 + $0xc] sm:$0xf]
        %v2923 = vld [vmem:[#allocation2 + $0x14] sm:$0xff]
        %v2924 = vld [vmem:[#allocation2 + $0x1c] sm:$0xf]
        %v2925 = vld [vmem:[#allocation2 + $0x24] sm:$0xff]
        %v2926 = vld [vmem:[#allocation2 + $0x2c] sm:$0xf]
        %v2927 = vld [vmem:[#allocation2 + $0x34] sm:$0xff]
        %v2928 = vld [vmem:[#allocation2 + $0x3c] sm:$0xf]
        %v2929 = vsel %vm1905, %v2921, 0
        %v2930 = vsel %vm1912, %v2922, 0
        %v2931 = vsel %vm1905, %v2923, 0
        %v2932 = vsel %vm1912, %v2924, 0
        %v2933 = vsel %vm1905, %v2925, 0
        %v2934 = vsel %vm1912, %v2926, 0
        %v2935 = vsel %vm1905, %v2927, 0
        %v2936 = vsel %vm1912, %v2928, 0
        %2945 = vrot.lane.b32.xlu0 %v2929, 127
        %v2946 = vpop.permute.xlu0 %2945
        %2947 = vrot.lane.b32.xlu0 %v2930, 127
        %v2948 = vpop.permute.xlu0 %2947
        %2949 = vrot.lane.b32.xlu0 %v2931, 127
        %v2950 = vpop.permute.xlu0 %2949
        %2951 = vrot.lane.b32.xlu0 %v2932, 127
        %v2952 = vpop.permute.xlu0 %2951
        %2953 = vrot.lane.b32.xlu0 %v2933, 127
        %v2954 = vpop.permute.xlu0 %2953
        %2955 = vrot.lane.b32.xlu0 %v2934, 127
        %v2956 = vpop.permute.xlu0 %2955
        %2957 = vrot.lane.b32.xlu0 %v2935, 127
        %v2958 = vpop.permute.xlu0 %2957
        %2959 = vrot.lane.b32.xlu0 %v2936, 127
        %v2960 = vpop.permute.xlu0 %2959
        %v2961 = vrot.slane %v2946, 4
        %v2962 = vrot.slane %v2948, 4
        %v2963 = vrot.slane %v2950, 4
        %v2964 = vrot.slane %v2952, 4
        %v2965 = vrot.slane %v2954, 4
        %v2966 = vrot.slane %v2956, 4
        %v2967 = vrot.slane %v2958, 4
        %v2968 = vrot.slane %v2960, 4
        %v2969 = vsel %vm1583, %v2961, %v2962
        %v2970 = vsel %vm1800, %v2946, %v2969
        %v2971 = vsel %vm1583, %v2963, %v2964
        %v2972 = vsel %vm1800, %v2950, %v2971
        %v2973 = vsel %vm1583, %v2965, %v2966
        %v2974 = vsel %vm1800, %v2954, %v2973
        %v2975 = vsel %vm1583, %v2967, %v2968
        %v2976 = vsel %vm1800, %v2958, %v2975
        %2981 = vst [vmem:[#allocation3 + $0xa0] sm:$0xff] %v2970
        %2982 = vst [vmem:[#allocation3 + $0xa8] sm:$0xff] %v2972
        %2983 = vst [vmem:[#allocation3 + $0xb0] sm:$0xff] %v2974
        %2984 = vst [vmem:[#allocation3 + $0xb8] sm:$0xff] %v2976
        %v2985 = vld [vmem:[#allocation2 + $0x4] sm:$0xff]
        %v2986 = vld [vmem:[#allocation2 + $0xc] sm:$0xf]
        %v2987 = vld [vmem:[#allocation2 + $0x14] sm:$0xff]
        %v2988 = vld [vmem:[#allocation2 + $0x1c] sm:$0xf]
        %v2989 = vld [vmem:[#allocation2 + $0x24] sm:$0xff]
        %v2990 = vld [vmem:[#allocation2 + $0x2c] sm:$0xf]
        %v2991 = vld [vmem:[#allocation2 + $0x34] sm:$0xff]
        %v2992 = vld [vmem:[#allocation2 + $0x3c] sm:$0xf]
        %v2993 = vsel %vm1995, %v2985, 0
        %v2994 = vsel %vm2002, %v2986, 0
        %v2995 = vsel %vm1995, %v2987, 0
        %v2996 = vsel %vm2002, %v2988, 0
        %v2997 = vsel %vm1995, %v2989, 0
        %v2998 = vsel %vm2002, %v2990, 0
        %v2999 = vsel %vm1995, %v2991, 0
        %v3000 = vsel %vm2002, %v2992, 0
        %3009 = vrot.lane.b32.xlu0 %v2993, 113
        %v3010 = vpop.permute.xlu0 %3009
        %3011 = vrot.lane.b32.xlu0 %v2994, 113
        %v3012 = vpop.permute.xlu0 %3011
        %3013 = vrot.lane.b32.xlu0 %v2995, 113
        %v3014 = vpop.permute.xlu0 %3013
        %3015 = vrot.lane.b32.xlu0 %v2996, 113
        %v3016 = vpop.permute.xlu0 %3015
        %3017 = vrot.lane.b32.xlu0 %v2997, 113
        %v3018 = vpop.permute.xlu0 %3017
        %3019 = vrot.lane.b32.xlu0 %v2998, 113
        %v3020 = vpop.permute.xlu0 %3019
        %3021 = vrot.lane.b32.xlu0 %v2999, 113
        %v3022 = vpop.permute.xlu0 %3021
        %3023 = vrot.lane.b32.xlu0 %v3000, 113
        %v3024 = vpop.permute.xlu0 %3023
        %v3025 = vrot.slane %v3010, 4
        %v3026 = vrot.slane %v3012, 4
        %v3027 = vrot.slane %v3014, 4
        %v3028 = vrot.slane %v3016, 4
        %v3029 = vrot.slane %v3018, 4
        %v3030 = vrot.slane %v3020, 4
        %v3031 = vrot.slane %v3022, 4
        %v3032 = vrot.slane %v3024, 4
        %v3033 = vsel %vm1583, %v3025, %v3026
        %v3034 = vsel %vm1710, %v3010, %v3033
        %v3035 = vsel %vm1583, %v3027, %v3028
        %v3036 = vsel %vm1710, %v3014, %v3035
        %v3037 = vsel %vm1583, %v3029, %v3030
        %v3038 = vsel %vm1710, %v3018, %v3037
        %v3039 = vsel %vm1583, %v3031, %v3032
        %v3040 = vsel %vm1710, %v3022, %v3039
        %3045 = vst [vmem:[#allocation3 + $0xc0] sm:$0xff] %v3034
        %3046 = vst [vmem:[#allocation3 + $0xc8] sm:$0xff] %v3036
        %3047 = vst [vmem:[#allocation3 + $0xd0] sm:$0xff] %v3038
        %3048 = vst [vmem:[#allocation3 + $0xd8] sm:$0xff] %v3040
        %v3049 = vld [vmem:[#allocation2 + $0x4] sm:$0xff]
        %v3050 = vld [vmem:[#allocation2 + $0xc] sm:$0xf]
        %v3051 = vld [vmem:[#allocation2 + $0x14] sm:$0xff]
        %v3052 = vld [vmem:[#allocation2 + $0x1c] sm:$0xf]
        %v3053 = vld [vmem:[#allocation2 + $0x24] sm:$0xff]
        %v3054 = vld [vmem:[#allocation2 + $0x2c] sm:$0xf]
        %v3055 = vld [vmem:[#allocation2 + $0x34] sm:$0xff]
        %v3056 = vld [vmem:[#allocation2 + $0x3c] sm:$0xf]
        %v3057 = vsel %vm2083, %v3049, 0
        %v3058 = vsel %vm2090, %v3050, 0
        %v3059 = vsel %vm2083, %v3051, 0
        %v3060 = vsel %vm2090, %v3052, 0
        %v3061 = vsel %vm2083, %v3053, 0
        %v3062 = vsel %vm2090, %v3054, 0
        %v3063 = vsel %vm2083, %v3055, 0
        %v3064 = vsel %vm2090, %v3056, 0
        %3073 = vrot.lane.b32.xlu0 %v3057, 112
        %v3074 = vpop.permute.xlu0 %3073
        %3075 = vrot.lane.b32.xlu0 %v3058, 112
        %v3076 = vpop.permute.xlu0 %3075
        %3077 = vrot.lane.b32.xlu0 %v3059, 112
        %v3078 = vpop.permute.xlu0 %3077
        %3079 = vrot.lane.b32.xlu0 %v3060, 112
        %v3080 = vpop.permute.xlu0 %3079
        %3081 = vrot.lane.b32.xlu0 %v3061, 112
        %v3082 = vpop.permute.xlu0 %3081
        %3083 = vrot.lane.b32.xlu0 %v3062, 112
        %v3084 = vpop.permute.xlu0 %3083
        %3085 = vrot.lane.b32.xlu0 %v3063, 112
        %v3086 = vpop.permute.xlu0 %3085
        %3087 = vrot.lane.b32.xlu0 %v3064, 112
        %v3088 = vpop.permute.xlu0 %3087
        %v3089 = vrot.slane %v3074, 4
        %v3090 = vrot.slane %v3076, 4
        %v3091 = vrot.slane %v3078, 4
        %v3092 = vrot.slane %v3080, 4
        %v3093 = vrot.slane %v3082, 4
        %v3094 = vrot.slane %v3084, 4
        %v3095 = vrot.slane %v3086, 4
        %v3096 = vrot.slane %v3088, 4
        %v3097 = vsel %vm1583, %v3089, %v3090
        %v3098 = vsel %vm1618, %v3074, %v3097
        %v3099 = vsel %vm1583, %v3091, %v3092
        %v3100 = vsel %vm1618, %v3078, %v3099
        %v3101 = vsel %vm1583, %v3093, %v3094
        %v3102 = vsel %vm1618, %v3082, %v3101
        %v3103 = vsel %vm1583, %v3095, %v3096
        %v3104 = vsel %vm1618, %v3086, %v3103
        %3109 = vst [vmem:[#allocation3 + $0xe0] sm:$0xff] %v3098
        %3110 = vst [vmem:[#allocation3 + $0xe8] sm:$0xff] %v3100
        %3111 = vst [vmem:[#allocation3 + $0xf0] sm:$0xff] %v3102
        %3112 = vst [vmem:[#allocation3 + $0xf8] sm:$0xff] %v3104
        %v3113 = vld [vmem:[#allocation2 + $0x4] sm:$0xff]
        %v3114 = vld [vmem:[#allocation2 + $0xc] sm:$0xf]
        %v3115 = vld [vmem:[#allocation2 + $0x14] sm:$0xff]
        %v3116 = vld [vmem:[#allocation2 + $0x1c] sm:$0xf]
        %v3117 = vld [vmem:[#allocation2 + $0x24] sm:$0xff]
        %v3118 = vld [vmem:[#allocation2 + $0x2c] sm:$0xf]
        %v3119 = vld [vmem:[#allocation2 + $0x34] sm:$0xff]
        %v3120 = vld [vmem:[#allocation2 + $0x3c] sm:$0xf]
        %v3121 = vsel %vm2173, %v3113, 0
        %v3122 = vsel %vm2180, %v3114, 0
        %v3123 = vsel %vm2173, %v3115, 0
        %v3124 = vsel %vm2180, %v3116, 0
        %v3125 = vsel %vm2173, %v3117, 0
        %v3126 = vsel %vm2180, %v3118, 0
        %v3127 = vsel %vm2173, %v3119, 0
        %v3128 = vsel %vm2180, %v3120, 0
        %3137 = vrot.lane.b32.xlu0 %v3121, 111
        %v3138 = vpop.permute.xlu0 %3137
        %3139 = vrot.lane.b32.xlu0 %v3122, 111
        %v3140 = vpop.permute.xlu0 %3139
        %3141 = vrot.lane.b32.xlu0 %v3123, 111
        %v3142 = vpop.permute.xlu0 %3141
        %3143 = vrot.lane.b32.xlu0 %v3124, 111
        %v3144 = vpop.permute.xlu0 %3143
        %3145 = vrot.lane.b32.xlu0 %v3125, 111
        %v3146 = vpop.permute.xlu0 %3145
        %3147 = vrot.lane.b32.xlu0 %v3126, 111
        %v3148 = vpop.permute.xlu0 %3147
        %3149 = vrot.lane.b32.xlu0 %v3127, 111
        %v3150 = vpop.permute.xlu0 %3149
        %3151 = vrot.lane.b32.xlu0 %v3128, 111
        %v3152 = vpop.permute.xlu0 %3151
        %v3153 = vrot.slane %v3138, 4
        %v3154 = vrot.slane %v3140, 4
        %v3155 = vrot.slane %v3142, 4
        %v3156 = vrot.slane %v3144, 4
        %v3157 = vrot.slane %v3146, 4
        %v3158 = vrot.slane %v3148, 4
        %v3159 = vrot.slane %v3150, 4
        %v3160 = vrot.slane %v3152, 4
        %v3161 = vsel %vm1583, %v3153, %v3154
        %v3162 = vsel %vm1527, %v3138, %v3161
        %v3163 = vsel %vm1583, %v3155, %v3156
        %v3164 = vsel %vm1527, %v3142, %v3163
        %v3165 = vsel %vm1583, %v3157, %v3158
        %v3166 = vsel %vm1527, %v3146, %v3165
        %v3167 = vsel %vm1583, %v3159, %v3160
        %v3168 = vsel %vm1527, %v3150, %v3167
        %3173 = vst [vmem:[#allocation3 + $0x100] sm:$0xff] %v3162
        %3174 = vst [vmem:[#allocation3 + $0x108] sm:$0xff] %v3164
        %3175 = vst [vmem:[#allocation3 + $0x110] sm:$0xff] %v3166
        %3176 = vst [vmem:[#allocation3 + $0x118] sm:$0xff] %v3168
        %s3177 = smul.addr %s2237, 4
        %s3178 = scalar_lea.vmem %s5, %s3177
        %v3179 = vld [vmem:[%s3178] sm:$0xff]
        %v3180 = vld [vmem:[%s3178 + $0x8] sm:$0xf]
        %v3181 = vld [vmem:[%s3178 + $0xc] sm:$0xff]
        %v3182 = vld [vmem:[%s3178 + $0x14] sm:$0xf]
        %v3183 = vld [vmem:[%s3178 + $0x18] sm:$0xff]
        %v3184 = vld [vmem:[%s3178 + $0x20] sm:$0xf]
        %v3185 = vld [vmem:[%s3178 + $0x24] sm:$0xff]
        %v3186 = vld [vmem:[%s3178 + $0x2c] sm:$0xf]
        %s3187 = scalar_lea.vmem %s6, %s2248
        %v3188 = vld [vmem:[%s3187] sm:$0xff]
        %v3189 = vld [vmem:[%s3187 + $0x8] sm:$0xff]
        %v3190 = vld [vmem:[%s3187 + $0x10] sm:$0xff]
        %v3191 = vld [vmem:[%s3187 + $0x18] sm:$0xff]
        %v3192 = vld [vmem:[#allocation3] sm:$0xff]
        %v3193 = vld [vmem:[#allocation3 + $0x8] sm:$0xff]
        %v3194 = vld [vmem:[#allocation3 + $0x10] sm:$0xff]
        %v3195 = vld [vmem:[#allocation3 + $0x18] sm:$0xff]
        %v3196 = vld [vmem:[#allocation3 + $0x20] sm:$0xff]
        %v3197 = vld [vmem:[#allocation3 + $0x28] sm:$0xff]
        %v3198 = vld [vmem:[#allocation3 + $0x30] sm:$0xff]
        %v3199 = vld [vmem:[#allocation3 + $0x38] sm:$0xff]
        %v3200 = vld [vmem:[#allocation3 + $0x40] sm:$0xff]
        %v3201 = vld [vmem:[#allocation3 + $0x48] sm:$0xff]
        %v3202 = vld [vmem:[#allocation3 + $0x50] sm:$0xff]
        %v3203 = vld [vmem:[#allocation3 + $0x58] sm:$0xff]
        %v3204 = vld [vmem:[#allocation3 + $0x60] sm:$0xff]
        %v3205 = vld [vmem:[#allocation3 + $0x68] sm:$0xff]
        %v3206 = vld [vmem:[#allocation3 + $0x70] sm:$0xff]
        %v3207 = vld [vmem:[#allocation3 + $0x78] sm:$0xff]
        %v3208 = vld [vmem:[#allocation3 + $0x80] sm:$0xff]
        %v3209 = vld [vmem:[#allocation3 + $0x88] sm:$0xff]
        %v3210 = vld [vmem:[#allocation3 + $0x90] sm:$0xff]
        %v3211 = vld [vmem:[#allocation3 + $0x98] sm:$0xff]
        %v3212 = vld [vmem:[#allocation3 + $0xa0] sm:$0xff]
        %v3213 = vld [vmem:[#allocation3 + $0xa8] sm:$0xff]
        %v3214 = vld [vmem:[#allocation3 + $0xb0] sm:$0xff]
        %v3215 = vld [vmem:[#allocation3 + $0xb8] sm:$0xff]
        %v3216 = vld [vmem:[#allocation3 + $0xc0] sm:$0xff]
        %v3217 = vld [vmem:[#allocation3 + $0xc8] sm:$0xff]
        %v3218 = vld [vmem:[#allocation3 + $0xd0] sm:$0xff]
        %v3219 = vld [vmem:[#allocation3 + $0xd8] sm:$0xff]
        %v3220 = vld [vmem:[#allocation3 + $0xe0] sm:$0xff]
        %v3221 = vld [vmem:[#allocation3 + $0xe8] sm:$0xff]
        %v3222 = vld [vmem:[#allocation3 + $0xf0] sm:$0xff]
        %v3223 = vld [vmem:[#allocation3 + $0xf8] sm:$0xff]
        %v3224 = vld [vmem:[#allocation3 + $0x100] sm:$0xff]
        %v3225 = vld [vmem:[#allocation3 + $0x108] sm:$0xff]
        %v3226 = vld [vmem:[#allocation3 + $0x110] sm:$0xff]
        %v3227 = vld [vmem:[#allocation3 + $0x118] sm:$0xff]
        %3229 = vset.pattern.permute.xlu0 0
        %3230 = vperm.xlu0 %3229, %v3188
        %v3231 = vpop.permute.xlu0 %3230
        %3234 = vset.pattern.permute.xlu0 0
        %3235 = vperm.xlu0 %3234, %v3189
        %v3236 = vpop.permute.xlu0 %3235
        %3239 = vset.pattern.permute.xlu0 0
        %3240 = vperm.xlu0 %3239, %v3190
        %v3241 = vpop.permute.xlu0 %3240
        %3244 = vset.pattern.permute.xlu0 0
        %3245 = vperm.xlu0 %3244, %v3191
        %v3246 = vpop.permute.xlu0 %3245
        %v3256 = vunpack.c.l.b16 %v3179
        %v3257 = vunpack.c.h.b16 %v3179
        %v3258 = vunpack.c.l.b16 %v3180
        %v3259 = vunpack.c.l.b16 %v3181
        %v3260 = vunpack.c.h.b16 %v3181
        %v3261 = vunpack.c.l.b16 %v3182
        %v3262 = vunpack.c.l.b16 %v3183
        %v3263 = vunpack.c.h.b16 %v3183
        %v3264 = vunpack.c.l.b16 %v3184
        %v3265 = vunpack.c.l.b16 %v3185
        %v3266 = vunpack.c.h.b16 %v3185
        %v3267 = vunpack.c.l.b16 %v3186
        %v3268 = vpack.c.b16 %v3259, %v3256
        %v3269 = vpack.c.b16 %v3260, %v3257
        %v3270 = vpack.c.b16 %v3261, %v3258
        %v3271 = vpack.c.b16 %v3265, %v3262
        %v3272 = vpack.c.b16 %v3266, %v3263
        %v3273 = vpack.c.b16 %v3267, %v3264
        %v3314 = vunpack.c.l.b16 %v3192
        %v3315 = vunpack.c.h.b16 %v3192
        %v3316 = vunpack.c.l.b16 %v3193
        %v3317 = vunpack.c.h.b16 %v3193
        %v3318 = vunpack.c.l.b16 %v3194
        %v3319 = vunpack.c.h.b16 %v3194
        %v3320 = vunpack.c.l.b16 %v3195
        %v3321 = vunpack.c.h.b16 %v3195
        %v3322 = vunpack.c.l.b16 %v3196
        %v3323 = vunpack.c.h.b16 %v3196
        %v3324 = vunpack.c.l.b16 %v3197
        %v3325 = vunpack.c.h.b16 %v3197
        %v3326 = vunpack.c.l.b16 %v3198
        %v3327 = vunpack.c.h.b16 %v3198
        %v3328 = vunpack.c.l.b16 %v3199
        %v3329 = vunpack.c.h.b16 %v3199
        %v3330 = vunpack.c.l.b16 %v3200
        %v3331 = vunpack.c.h.b16 %v3200
        %v3332 = vunpack.c.l.b16 %v3201
        %v3333 = vunpack.c.h.b16 %v3201
        %v3334 = vunpack.c.l.b16 %v3202
        %v3335 = vunpack.c.h.b16 %v3202
        %v3336 = vunpack.c.l.b16 %v3203
        %v3337 = vunpack.c.h.b16 %v3203
        %v3338 = vunpack.c.l.b16 %v3204
        %v3339 = vunpack.c.h.b16 %v3204
        %v3340 = vunpack.c.l.b16 %v3205
        %v3341 = vunpack.c.h.b16 %v3205
        %v3342 = vunpack.c.l.b16 %v3206
        %v3343 = vunpack.c.h.b16 %v3206
        %v3344 = vunpack.c.l.b16 %v3207
        %v3345 = vunpack.c.h.b16 %v3207
        %v3346 = vunpack.c.l.b16 %v3208
        %v3347 = vunpack.c.h.b16 %v3208
        %v3348 = vunpack.c.l.b16 %v3209
        %v3349 = vunpack.c.h.b16 %v3209
        %v3350 = vunpack.c.l.b16 %v3210
        %v3351 = vunpack.c.h.b16 %v3210
        %v3352 = vunpack.c.l.b16 %v3211
        %v3353 = vunpack.c.h.b16 %v3211
        %v3354 = vunpack.c.l.b16 %v3212
        %v3355 = vunpack.c.h.b16 %v3212
        %v3356 = vunpack.c.l.b16 %v3213
        %v3357 = vunpack.c.h.b16 %v3213
        %v3358 = vunpack.c.l.b16 %v3214
        %v3359 = vunpack.c.h.b16 %v3214
        %v3360 = vunpack.c.l.b16 %v3215
        %v3361 = vunpack.c.h.b16 %v3215
        %v3362 = vunpack.c.l.b16 %v3216
        %v3363 = vunpack.c.h.b16 %v3216
        %v3364 = vunpack.c.l.b16 %v3217
        %v3365 = vunpack.c.h.b16 %v3217
        %v3366 = vunpack.c.l.b16 %v3218
        %v3367 = vunpack.c.h.b16 %v3218
        %v3368 = vunpack.c.l.b16 %v3219
        %v3369 = vunpack.c.h.b16 %v3219
        %v3370 = vunpack.c.l.b16 %v3220
        %v3371 = vunpack.c.h.b16 %v3220
        %v3372 = vunpack.c.l.b16 %v3221
        %v3373 = vunpack.c.h.b16 %v3221
        %v3374 = vunpack.c.l.b16 %v3222
        %v3375 = vunpack.c.h.b16 %v3222
        %v3376 = vunpack.c.l.b16 %v3223
        %v3377 = vunpack.c.h.b16 %v3223
        %v3378 = vunpack.c.l.b16 %v3224
        %v3379 = vunpack.c.h.b16 %v3224
        %v3380 = vunpack.c.l.b16 %v3225
        %v3381 = vunpack.c.h.b16 %v3225
        %v3382 = vunpack.c.l.b16 %v3226
        %v3383 = vunpack.c.h.b16 %v3226
        %v3384 = vunpack.c.l.b16 %v3227
        %v3385 = vunpack.c.h.b16 %v3227
        %v3386 = vpack.c.b16 %v3316, %v3314
        %v3387 = vpack.c.b16 %v3317, %v3315
        %v3388 = vpack.c.b16 %v3320, %v3318
        %v3389 = vpack.c.b16 %v3321, %v3319
        %v3390 = vpack.c.b16 %v3324, %v3322
        %v3391 = vpack.c.b16 %v3325, %v3323
        %v3392 = vpack.c.b16 %v3328, %v3326
        %v3393 = vpack.c.b16 %v3329, %v3327
        %v3394 = vpack.c.b16 %v3332, %v3330
        %v3395 = vpack.c.b16 %v3333, %v3331
        %v3396 = vpack.c.b16 %v3336, %v3334
        %v3397 = vpack.c.b16 %v3337, %v3335
        %v3398 = vpack.c.b16 %v3340, %v3338
        %v3399 = vpack.c.b16 %v3341, %v3339
        %v3400 = vpack.c.b16 %v3344, %v3342
        %v3401 = vpack.c.b16 %v3345, %v3343
        %v3402 = vpack.c.b16 %v3348, %v3346
        %v3403 = vpack.c.b16 %v3349, %v3347
        %v3404 = vpack.c.b16 %v3352, %v3350
        %v3405 = vpack.c.b16 %v3353, %v3351
        %v3406 = vpack.c.b16 %v3356, %v3354
        %v3407 = vpack.c.b16 %v3357, %v3355
        %v3408 = vpack.c.b16 %v3360, %v3358
        %v3409 = vpack.c.b16 %v3361, %v3359
        %v3410 = vpack.c.b16 %v3364, %v3362
        %v3411 = vpack.c.b16 %v3365, %v3363
        %v3412 = vpack.c.b16 %v3368, %v3366
        %v3413 = vpack.c.b16 %v3369, %v3367
        %v3414 = vpack.c.b16 %v3372, %v3370
        %v3415 = vpack.c.b16 %v3373, %v3371
        %v3416 = vpack.c.b16 %v3376, %v3374
        %v3417 = vpack.c.b16 %v3377, %v3375
        %v3418 = vpack.c.b16 %v3380, %v3378
        %v3419 = vpack.c.b16 %v3381, %v3379
        %v3420 = vpack.c.b16 %v3384, %v3382
        %v3421 = vpack.c.b16 %v3385, %v3383
        %v3459 = vsel %vm2520, %v3270, 0
        %v3462 = vsel %vm2520, %v3273, 0
        %3464 = vmatpush.bf16.msra.mxu0 %v3400
        %3465 = vmatpush.bf16.msra.mxu0 %v3398
        %3466 = vmatpush.bf16.msra.mxu0 %v3396
        %3467 = vmatpush.bf16.msra.mxu0 %v3394
        %3468 = vmatpush.bf16.msra.mxu0 %v3392
        %3469 = vmatpush.bf16.msra.mxu0 %v3390
        %3470 = vmatpush.bf16.msra.mxu0 %v3388
        %3471 = vmatpush.bf16.msra.mxu0 %v3386
        %3472 = vmatmul.bf16.gmra.mxu0 %v3268
        %v3473 = vpop.f32.mrf.mxu0
        %v3474 = vadd.f32 %v3231, %v3473
        %v3475 = vpop.f32.mrf.mxu0
        %v3476 = vadd.f32 %v3236, %v3475
        %3477 = vmatmul.bf16.gmra.mxu0 %v3271
        %v3478 = vpop.f32.mrf.mxu0
        %v3479 = vadd.f32 %v3241, %v3478
        %v3480 = vpop.f32.mrf.mxu0
        %v3481 = vadd.f32 %v3246, %v3480
        %3482 = vdwg.mxu0
        %3483 = vmatpush.bf16.msra.mxu0 %v3416
        %3484 = vmatpush.bf16.msra.mxu0 %v3414
        %3485 = vmatpush.bf16.msra.mxu0 %v3412
        %3486 = vmatpush.bf16.msra.mxu0 %v3410
        %3487 = vmatpush.bf16.msra.mxu0 %v3408
        %3488 = vmatpush.bf16.msra.mxu0 %v3406
        %3489 = vmatpush.bf16.msra.mxu0 %v3404
        %3490 = vmatpush.bf16.msra.mxu0 %v3402
        %3491 = vmatmul.bf16.gmra.mxu0 %v3269
        %v3492 = vpop.f32.mrf.mxu0
        %v3493 = vadd.f32 %v3474, %v3492
        %v3494 = vpop.f32.mrf.mxu0
        %v3495 = vadd.f32 %v3476, %v3494
        %3496 = vmatmul.bf16.gmra.mxu0 %v3272
        %v3497 = vpop.f32.mrf.mxu0
        %v3498 = vadd.f32 %v3479, %v3497
        %v3499 = vpop.f32.mrf.mxu0
        %v3500 = vadd.f32 %v3481, %v3499
        %3501 = vdwg.mxu0
        %3502 = vmatpush.bf16.msra.mxu0 0
        %3503 = vmatpush.bf16.msra.mxu0 0
        %3504 = vmatpush.bf16.msra.mxu0 0
        %3505 = vmatpush.bf16.msra.mxu0 0
        %3506 = vmatpush.bf16.msra.mxu0 0
        %3507 = vmatpush.bf16.msra.mxu0 0
        %3508 = vmatpush.bf16.msra.mxu0 %v3420
        %3509 = vmatpush.bf16.msra.mxu0 %v3418
        %3510 = vmatmul.bf16.gmra.mxu0 %v3459
        %v3511 = vpop.f32.mrf.mxu0
        %v3512 = vadd.f32 %v3493, %v3511
        %v3513 = vpop.f32.mrf.mxu0
        %v3514 = vadd.f32 %v3495, %v3513
        %3515 = vmatmul.bf16.gmra.mxu0 %v3462
        %v3516 = vpop.f32.mrf.mxu0
        %v3517 = vadd.f32 %v3498, %v3516
        %v3518 = vpop.f32.mrf.mxu0
        %v3519 = vadd.f32 %v3500, %v3518
        %3520 = vdwg.mxu0
        %3521 = vmatpush.bf16.msra.mxu0 %v3401
        %3522 = vmatpush.bf16.msra.mxu0 %v3399
        %3523 = vmatpush.bf16.msra.mxu0 %v3397
        %3524 = vmatpush.bf16.msra.mxu0 %v3395
        %3525 = vmatpush.bf16.msra.mxu0 %v3393
        %3526 = vmatpush.bf16.msra.mxu0 %v3391
        %3527 = vmatpush.bf16.msra.mxu0 %v3389
        %3528 = vmatpush.bf16.msra.mxu0 %v3387
        %3529 = vmatmul.bf16.gmra.mxu0 %v3268
        %v3530 = vpop.f32.mrf.mxu0
        %v3531 = vadd.f32 %v3231, %v3530
        %v3532 = vpop.f32.mrf.mxu0
        %v3533 = vadd.f32 %v3236, %v3532
        %3534 = vmatmul.bf16.gmra.mxu0 %v3271
        %v3535 = vpop.f32.mrf.mxu0
        %v3536 = vadd.f32 %v3241, %v3535
        %v3537 = vpop.f32.mrf.mxu0
        %v3538 = vadd.f32 %v3246, %v3537
        %3539 = vdwg.mxu0
        %3540 = vmatpush.bf16.msra.mxu0 %v3417
        %3541 = vmatpush.bf16.msra.mxu0 %v3415
        %3542 = vmatpush.bf16.msra.mxu0 %v3413
        %3543 = vmatpush.bf16.msra.mxu0 %v3411
        %3544 = vmatpush.bf16.msra.mxu0 %v3409
        %3545 = vmatpush.bf16.msra.mxu0 %v3407
        %3546 = vmatpush.bf16.msra.mxu0 %v3405
        %3547 = vmatpush.bf16.msra.mxu0 %v3403
        %3548 = vmatmul.bf16.gmra.mxu0 %v3269
        %v3549 = vpop.f32.mrf.mxu0
        %v3550 = vadd.f32 %v3531, %v3549
        %v3551 = vpop.f32.mrf.mxu0
        %v3552 = vadd.f32 %v3533, %v3551
        %3553 = vmatmul.bf16.gmra.mxu0 %v3272
        %v3554 = vpop.f32.mrf.mxu0
        %v3555 = vadd.f32 %v3536, %v3554
        %v3556 = vpop.f32.mrf.mxu0
        %v3557 = vadd.f32 %v3538, %v3556
        %3558 = vdwg.mxu0
        %3559 = vmatpush.bf16.msra.mxu0 0
        %3560 = vmatpush.bf16.msra.mxu0 0
        %3561 = vmatpush.bf16.msra.mxu0 0
        %3562 = vmatpush.bf16.msra.mxu0 0
        %3563 = vmatpush.bf16.msra.mxu0 0
        %3564 = vmatpush.bf16.msra.mxu0 0
        %3565 = vmatpush.bf16.msra.mxu0 %v3421
        %3566 = vmatpush.bf16.msra.mxu0 %v3419
        %3567 = vmatmul.bf16.gmra.mxu0 %v3459
        %v3568 = vpop.f32.mrf.mxu0
        %v3569 = vadd.f32 %v3550, %v3568
        %v3570 = vpop.f32.mrf.mxu0
        %v3571 = vadd.f32 %v3552, %v3570
        %3572 = vmatmul.bf16.gmra.mxu0 %v3462
        %v3573 = vpop.f32.mrf.mxu0
        %v3574 = vadd.f32 %v3555, %v3573
        %v3575 = vpop.f32.mrf.mxu0
        %v3576 = vadd.f32 %v3557, %v3575
        %3577 = vdwg.mxu0
        %v3578 = vadd.f32 %v1492, %v3512
        %v3579 = vadd.f32 %v1493, %v3569
        %v3580 = vadd.f32 %v1494, %v3514
        %v3581 = vadd.f32 %v1495, %v3571
        %v3582 = vadd.f32 %v1496, %v3517
        %v3583 = vadd.f32 %v1497, %v3574
        %v3584 = vadd.f32 %v1498, %v3519
        %v3585 = vadd.f32 %v1499, %v3576
        %3586 = vst [vmem:[%s290] sm:$0xff] %v3578
        %3587 = vst [vmem:[%s290 + $0x8] sm:$0xff] %v3579
        %3588 = vst [vmem:[%s290 + $0x10] sm:$0xff] %v3580
        %3589 = vst [vmem:[%s290 + $0x18] sm:$0xff] %v3581
        %3590 = vst [vmem:[%s290 + $0x20] sm:$0xff] %v3582
        %3591 = vst [vmem:[%s290 + $0x28] sm:$0xff] %v3583
        %3592 = vst [vmem:[%s290 + $0x30] sm:$0xff] %v3584
        %3593 = vst [vmem:[%s290 + $0x38] sm:$0xff] %v3585
      $region56: #{conv_residual_blocks_forward.1} parent=47 // pred_fallthru
        _
      %p3594 = scmp.lt.s32.totalorder %s22, 1
      %s3595 = scalar_select %p3594, %s22, 1
      %s3596 = smul.addr %s3595, 8
      %s3597 = smul.addr %s3596, 8
      %s3598 = scalar_lea.vmem %s7, %s3597
      // Predicated region
      $region57: #{conv_residual_blocks_forward.1} parent=47 // pred_check
        %p3599 = pneg %p200
      $region58: #{conv_residual_blocks_forward.1} parent=47 // pred_check_branch
        %3601 = sbr.rel (%p3599) target = $region60
      $region59: #{conv_residual_blocks_forward.1} parent=47 // pred_region
        _
      $region60: #{conv_residual_blocks_forward.1} parent=47 // pred_fallthru
        _
    $region48: #{conv_residual_blocks_forward.1} parent=5 // pred_fallthru
      _
    %p3602 = scmp.le.s32.totalorder 2, %s13
    // Predicated region
    $region61: #{conv_residual_blocks_forward.1} parent=5 // pred_check
      %p3603 = pneg %p3602
    $region62: #{conv_residual_blocks_forward.1} parent=5 // pred_check_branch
      %3605 = sbr.rel (%p3603) target = $region64
    $region63: #{conv_residual_blocks_forward.1} parent=5 // pred_region
      %s3606 = ssub.s32 %s13, 2
      // Predicated region
      $region65: #{conv_residual_blocks_forward.1} parent=63 // pred_check
        %p3607 = pneg %p206
      $region66: #{conv_residual_blocks_forward.1} parent=63 // pred_check_branch
        %3609 = sbr.rel (%p3607) target = $region68
      $region67: #{conv_residual_blocks_forward.1} parent=63 // pred_region
        %p3610 = scmp.lt.s32.totalorder %s24, 1
        %s3611 = scalar_select %p3610, %s24, 1
        %s3612 = smul.addr %s3611, 8
        %s3613 = smul.addr %s3612, 8
        %s3614 = scalar_lea.vmem %s7, %s3613
      $region68: #{conv_residual_blocks_forward.1} parent=63 // pred_fallthru
        _
    $region64: #{conv_residual_blocks_forward.1} parent=5 // pred_fallthru
      _
  $region6: #{conv_residual_blocks_forward.1} parent=0 // loop_footer
    %s17 = sadd.s32 1, %s13
  $region7: #{conv_residual_blocks_forward.1} parent=0 // loop_footer_branch
    %12 = sbr.rel target = $region3
  $region8: #{conv_residual_blocks_forward.1} parent=0 // loop_exit
    _

</llo_original>
